<compile_context>
chip_gen: v7x
topology: tpu7x:2x2x1
jax: 0.10.0
libtpu: 0.0.40
codegen_flags: <defaults>
</compile_context>

<pallas_src>
import jax
import jax.numpy as jnp
from jax.experimental import pallas as pl
from jax.experimental.pallas import tpu as pltpu

STATE_DIM = 32
ANNOT_DIM = 13
ANNOT_PAD = 16          # annotation padded to a sublane-aligned width (13 -> 16)
N_NODE = 8
N_EDGE = 4
N_STEPS = 3
BATCH = 2

D = STATE_DIM
E2 = 2 * N_EDGE         # (in | out) x edge types
GN = BATCH * N_NODE     # batch folded into the row axis (single grid step)


def ggnn_kernel(h_ref, ann_ref, a_ref, gb_ref, v_ref, wt_ref, woh_ref, woa_ref,
                out_ref):
    """Full N_STEPS GGNN recurrence + output head for one folded batch block."""
    h = h_ref[...]                      # [GN, D]
    A = a_ref[...]                      # [E2*GN, GN]  block-diag gather operator
    gb = gb_ref[...]                    # [GN, 3D]     constant gate bias (hoisted)
    V = v_ref[...]                      # [(E2+1)*D, 3D]  folded message/gate weights
    wt = wt_ref[...]                    # [D, D]       W_t block acting on r*h

    def mm(x, w):
        return jnp.dot(x, w, preferred_element_type=jnp.float32)

    # Constant weight slices hoisted out of the unrolled step loop (all slices are
    # sublane-aligned: multiples of D=32 rows).
    v_blocks = [V[k * D:(k + 1) * D, :] for k in range(E2)]
    v_h_rz = V[E2 * D:, :]              # [D, 3D]; its t-columns are zero

    for _ in range(N_STEPS):            # static unroll
        # One gather matmul for all 2E (direction, edge-type) adjacency blocks.
        t = mm(A, h)                    # [E2*GN, D]
        # Pre-activations for r | z | t.  Gate weights were pre-folded into the
        # per-edge message weights, so a_in / a_out never materialize.
        pre = gb + mm(h, v_h_rz)
        for k in range(E2):             # 2E accumulating [GN,D]x[D,3D] matmuls
            pre = pre + mm(t[k * GN:(k + 1) * GN, :], v_blocks[k])
        rz = jax.nn.sigmoid(pre[:, :2 * D])
        r = rz[:, :D]
        z = rz[:, D:]
        h_hat = jnp.tanh(pre[:, 2 * D:] + mm(r * h, wt))
        h = (1.0 - z) * h + z * h_hat

    # Output head: annotation is pre-padded to 16 lanes with a constant 1.0 column
    # that routes b_o through woa, so there is no separate bias add.
    out = jnp.tanh(mm(h, woh_ref[...]) + mm(ann_ref[...], woa_ref[...]))
    out_ref[...] = out.astype(out_ref.dtype)


def prepare_params(params):
    """One-time weight packing / folding (hoisted out of the per-call wrapper)."""
    hp = jax.lax.Precision.HIGHEST      # exact-f32 pre-folding

    w_r, w_z, w_t = params["w_r"], params["w_z"], params["w_t"]   # [D, 3D] torch layout
    # Gate weights acting on a_in (concat rows 0:D) / a_out (rows D:2D); cols r|z|t.
    w_gate_in = jnp.concatenate([w_r[:, :D].T, w_z[:, :D].T, w_t[:, :D].T], axis=1)
    w_gate_out = jnp.concatenate(
        [w_r[:, D:2 * D].T, w_z[:, D:2 * D].T, w_t[:, D:2 * D].T], axis=1)

    # Fold each per-edge message weight through the matching gate-weight block:
    #   V_k = W_msg_k^T @ W_gate_dir(k)
    v_in = jnp.einsum('eoi,oc->eic', params["w_in"], w_gate_in, precision=hp)
    v_out = jnp.einsum('eoi,oc->eic', params["w_out"], w_gate_out, precision=hp)
    # h-contribution to r and z (the t block consumes r*h instead -> separate weight).
    v_h_rz = jnp.concatenate(
        [w_r[:, 2 * D:].T, w_z[:, 2 * D:].T, jnp.zeros((D, D), jnp.float32)], axis=1)
    v_pack = jnp.concatenate(
        [v_in.reshape(N_EDGE * D, 3 * D), v_out.reshape(N_EDGE * D, 3 * D), v_h_rz],
        axis=0)                                                   # [(2E+1)*D, 3D]

    w_t_h = w_t[:, 2 * D:].T                                      # [D, D]

    # Message biases routed through the gate weights (scaled by adjacency row sums in
    # the wrapper), plus the raw gate biases.
    c_in = jnp.einsum('eo,oc->ec', params["b_in"], w_gate_in, precision=hp)
    c_out = jnp.einsum('eo,oc->ec', params["b_out"], w_gate_out, precision=hp)
    c_msg = jnp.concatenate([c_in, c_out], axis=0)                # [2E, 3D]
    b_rzt = jnp.concatenate([params["b_r"], params["b_z"], params["b_t"]])   # [3D]

    # Output head: h block and annotation block; b_o sits in the row selected by the
    # constant 1.0 annotation-padding column.
    w_o = params["w_o"]                                           # [D, D+13]
    w_o_h = w_o[:, :D].T                                          # [D, D]
    w_o_a = jnp.concatenate(
        [w_o[:, D:].T, params["b_o"][None, :],
         jnp.zeros((ANNOT_PAD - ANNOT_DIM - 1, D), jnp.float32)], axis=0)    # [16, D]
    return (v_pack, w_t_h, w_o_h, w_o_a, c_msg, b_rzt)


@jax.jit
def ggnn_pallas(prop_state, annotation, A, prepped):
    v_pack, w_t_h, w_o_h, w_o_a, c_msg, b_rzt = prepped
    B, N = BATCH, N_NODE

    h0 = prop_state.reshape(GN, D)
    ann = annotation.reshape(GN, ANNOT_DIM)
    # Pad annotation 13 -> 16 lanes; column ANNOT_DIM holds the constant 1.0 that
    # routes b_o through w_o_a (no in-kernel bias add).
    ann_pad = jnp.concatenate(
        [ann, jnp.ones((GN, 1), ann.dtype),
         jnp.zeros((GN, ANNOT_PAD - ANNOT_DIM - 1), ann.dtype)], axis=1)

    # Fold the batch into the row axis: block-diagonal gather operator with rows
    # ordered (dir/edge block k, batch b, node i) and columns (batch b, node j).
    # Built once per call; O((B*N)^2) and cheap at this size.
    a_blk = jnp.transpose(A.reshape(B, N, E2, N), (2, 0, 1, 3))   # [2E, B, N, N]
    eye_b = jnp.eye(B, dtype=A.dtype)
    a_stk = (a_blk[:, :, :, None, :] * eye_b[None, :, None, :, None]
             ).reshape(E2 * GN, GN)                               # [2E*gN, gN]

    # Constant-across-steps gate bias: adjacency row sums x (message biases folded
    # through the gate weights) + gate biases.  Hoists all bias work out of the loop.
    row_sums = A.reshape(B, N, E2, N).sum(axis=3).reshape(GN, E2)  # [gN, 2E]
    gate_bias = (jnp.dot(row_sums, c_msg, precision=jax.lax.Precision.HIGHEST)
                 + b_rzt[None, :])                                 # [gN, 3D]

    full = lambda x: pl.BlockSpec(x.shape, lambda i: (0,) * x.ndim)
    out = pl.pallas_call(
        ggnn_kernel,
        out_shape=jax.ShapeDtypeStruct((GN, D), prop_state.dtype),
        grid=(1,),
        in_specs=[full(h0), full(ann_pad), full(a_stk), full(gate_bias),
                  full(v_pack), full(w_t_h), full(w_o_h), full(w_o_a)],
        out_specs=pl.BlockSpec((GN, D), lambda i: (0, 0)),
        compiler_params=pltpu.CompilerParams(dimension_semantics=("arbitrary",)),
    )(h0, ann_pad, a_stk, gate_bias, v_pack, w_t_h, w_o_h, w_o_a)
    return out.reshape(B, N, D)


def ggnn_ref(prop_state, annotation, A, params):
    """Plain-JAX mirror of the PyTorch forward for verification."""
    h = prop_state
    NE = N_NODE * N_EDGE
    for _ in range(N_STEPS):
        in_states, out_states = [], []
        for e in range(N_EDGE):
            in_states.append(h @ params["w_in"][e].T + params["b_in"][e])
            out_states.append(h @ params["w_out"][e].T + params["b_out"][e])
        in_states = jnp.stack(in_states, axis=1).reshape(BATCH, NE, STATE_DIM)
        out_states = jnp.stack(out_states, axis=1).reshape(BATCH, NE, STATE_DIM)
        A_in, A_out = A[:, :, :NE], A[:, :, NE:]
        a_in = jnp.matmul(A_in, in_states)
        a_out = jnp.matmul(A_out, out_states)
        a = jnp.concatenate([a_in, a_out, h], axis=2)
        r = jax.nn.sigmoid(a @ params["w_r"].T + params["b_r"])
        z = jax.nn.sigmoid(a @ params["w_z"].T + params["b_z"])
        joined = jnp.concatenate([a_in, a_out, r * h], axis=2)
        h_hat = jnp.tanh(joined @ params["w_t"].T + params["b_t"])
        h = (1.0 - z) * h + z * h_hat
    join_state = jnp.concatenate([h, annotation], axis=2)
    return jnp.tanh(join_state @ params["w_o"].T + params["b_o"])


def init_params(key):
    """PyTorch _initialization(): weights ~ N(0, 0.02), biases = 0."""
    ks = jax.random.split(key, 8)
    return {
        "w_in": 0.02 * jax.random.normal(ks[0], (N_EDGE, D, D), jnp.float32),
        "b_in": jnp.zeros((N_EDGE, D), jnp.float32),
        "w_out": 0.02 * jax.random.normal(ks[1], (N_EDGE, D, D), jnp.float32),
        "b_out": jnp.zeros((N_EDGE, D), jnp.float32),
        "w_r": 0.02 * jax.random.normal(ks[2], (D, 3 * D), jnp.float32),
        "b_r": jnp.zeros((D,), jnp.float32),
        "w_z": 0.02 * jax.random.normal(ks[3], (D, 3 * D), jnp.float32),
        "b_z": jnp.zeros((D,), jnp.float32),
        "w_t": 0.02 * jax.random.normal(ks[4], (D, 3 * D), jnp.float32),
        "b_t": jnp.zeros((D,), jnp.float32),
        "w_o": 0.02 * jax.random.normal(ks[5], (D, D + ANNOT_DIM), jnp.float32),
        "b_o": jnp.zeros((D,), jnp.float32),
    }


if __name__ == "__main__":
    key = jax.random.PRNGKey(0)
    kp, ka, kA = jax.random.split(key, 3)

    params = init_params(kp)
    prepped = prepare_params(params)   # one-time weight packing / folding

    # annotation, prop_state (annotation zero-padded to state_dim), random sparse A
    annotation = jax.random.uniform(ka, (BATCH, N_NODE, ANNOT_DIM), jnp.float32)
    prop_state = jnp.concatenate(
        [annotation,
         jnp.zeros((BATCH, N_NODE, STATE_DIM - ANNOT_DIM), jnp.float32)], axis=2)
    A = (jax.random.uniform(kA, (BATCH, N_NODE, 2 * N_EDGE * N_NODE)) < 0.3
         ).astype(jnp.float32)

    out = ggnn_pallas(prop_state, annotation, A, prepped)
    out = jax.block_until_ready(out)

    ref = ggnn_ref(prop_state, annotation, A, params)
    assert out.shape == (BATCH, N_NODE, STATE_DIM)
    assert jnp.allclose(out, ref, atol=1e-5, rtol=1e-4), "Pallas output mismatch vs reference"

    print("KERNEL_OK")
</pallas_src>

<mosaic_0001>
module attributes {stable_mosaic.version = 11 : i64} {
  func.func @ggnn_kernel(%arg0: i32, %arg1: memref<16x32xf32, #tpu.memory_space<vmem>>, %arg2: memref<16x16xf32, #tpu.memory_space<vmem>>, %arg3: memref<128x16xf32, #tpu.memory_space<vmem>>, %arg4: memref<16x96xf32, #tpu.memory_space<vmem>>, %arg5: memref<288x96xf32, #tpu.memory_space<vmem>>, %arg6: memref<32x32xf32, #tpu.memory_space<vmem>>, %arg7: memref<32x32xf32, #tpu.memory_space<vmem>>, %arg8: memref<16x32xf32, #tpu.memory_space<vmem>>, %arg9: memref<16x32xf32, #tpu.memory_space<vmem>>) attributes {dimension_semantics = [#tpu.dimension_semantics<arbitrary>], iteration_bounds = array<i64: 1>, scalar_prefetch = 0 : i64, scratch_operands = 0 : i64, tpu.core_type = #tpu.core_type<tc>, window_params = [{pipeline_mode = #tpu.pipeline_mode<synchronous>, transform_indices = @transform_0, window_bounds = array<i64: 16, 32>}, {pipeline_mode = #tpu.pipeline_mode<synchronous>, transform_indices = @transform_1, window_bounds = array<i64: 16, 16>}, {pipeline_mode = #tpu.pipeline_mode<synchronous>, transform_indices = @transform_2, window_bounds = array<i64: 128, 16>}, {pipeline_mode = #tpu.pipeline_mode<synchronous>, transform_indices = @transform_3, window_bounds = array<i64: 16, 96>}, {pipeline_mode = #tpu.pipeline_mode<synchronous>, transform_indices = @transform_4, window_bounds = array<i64: 288, 96>}, {pipeline_mode = #tpu.pipeline_mode<synchronous>, transform_indices = @transform_5, window_bounds = array<i64: 32, 32>}, {pipeline_mode = #tpu.pipeline_mode<synchronous>, transform_indices = @transform_6, window_bounds = array<i64: 32, 32>}, {pipeline_mode = #tpu.pipeline_mode<synchronous>, transform_indices = @transform_7, window_bounds = array<i64: 16, 32>}, {pipeline_mode = #tpu.pipeline_mode<synchronous>, transform_indices = @transform_8, window_bounds = array<i64: 16, 32>}]} {
    %c0 = arith.constant 0 : index
    %c0_0 = arith.constant 0 : index
    %0 = vector.load %arg1[%c0, %c0_0] : memref<16x32xf32, #tpu.memory_space<vmem>>, vector<16x32xf32>
    %c0_1 = arith.constant 0 : index
    %c0_2 = arith.constant 0 : index
    %1 = vector.load %arg3[%c0_1, %c0_2] : memref<128x16xf32, #tpu.memory_space<vmem>>, vector<128x16xf32>
    %c0_3 = arith.constant 0 : index
    %c0_4 = arith.constant 0 : index
    %2 = vector.load %arg4[%c0_3, %c0_4] : memref<16x96xf32, #tpu.memory_space<vmem>>, vector<16x96xf32>
    %c0_5 = arith.constant 0 : index
    %c0_6 = arith.constant 0 : index
    %3 = vector.load %arg5[%c0_5, %c0_6] : memref<288x96xf32, #tpu.memory_space<vmem>>, vector<288x96xf32>
    %c0_7 = arith.constant 0 : index
    %c0_8 = arith.constant 0 : index
    %4 = vector.load %arg6[%c0_7, %c0_8] : memref<32x32xf32, #tpu.memory_space<vmem>>, vector<32x32xf32>
    %5 = vector.extract_strided_slice %3 {offsets = [0, 0], sizes = [32, 96], strides = [1, 1]} : vector<288x96xf32> to vector<32x96xf32>
    %6 = vector.extract_strided_slice %3 {offsets = [32, 0], sizes = [32, 96], strides = [1, 1]} : vector<288x96xf32> to vector<32x96xf32>
    %7 = vector.extract_strided_slice %3 {offsets = [64, 0], sizes = [32, 96], strides = [1, 1]} : vector<288x96xf32> to vector<32x96xf32>
    %8 = vector.extract_strided_slice %3 {offsets = [96, 0], sizes = [32, 96], strides = [1, 1]} : vector<288x96xf32> to vector<32x96xf32>
    %9 = vector.extract_strided_slice %3 {offsets = [128, 0], sizes = [32, 96], strides = [1, 1]} : vector<288x96xf32> to vector<32x96xf32>
    %10 = vector.extract_strided_slice %3 {offsets = [160, 0], sizes = [32, 96], strides = [1, 1]} : vector<288x96xf32> to vector<32x96xf32>
    %11 = vector.extract_strided_slice %3 {offsets = [192, 0], sizes = [32, 96], strides = [1, 1]} : vector<288x96xf32> to vector<32x96xf32>
    %12 = vector.extract_strided_slice %3 {offsets = [224, 0], sizes = [32, 96], strides = [1, 1]} : vector<288x96xf32> to vector<32x96xf32>
    %13 = vector.extract_strided_slice %3 {offsets = [256, 0], sizes = [32, 96], strides = [1, 1]} : vector<288x96xf32> to vector<32x96xf32>
    %cst = arith.constant dense<0.000000e+00> : vector<128x32xf32>
    %14 = tpu.matmul %1, %0, %cst {dimension_numbers = #tpu.dot_dimension_numbers<[1], [0], [0], [1], [0, 0, 1, 1], [], []>} : vector<128x16xf32>, vector<16x32xf32>, vector<128x32xf32> -> vector<128x32xf32>
    %cst_9 = arith.constant dense<0.000000e+00> : vector<16x96xf32>
    %15 = tpu.matmul %0, %13, %cst_9 {dimension_numbers = #tpu.dot_dimension_numbers<[1], [0], [0], [1], [0, 0, 1, 1], [], []>} : vector<16x32xf32>, vector<32x96xf32>, vector<16x96xf32> -> vector<16x96xf32>
    %16 = arith.addf %2, %15 : vector<16x96xf32>
    %17 = vector.extract_strided_slice %14 {offsets = [0, 0], sizes = [16, 32], strides = [1, 1]} : vector<128x32xf32> to vector<16x32xf32>
    %cst_10 = arith.constant dense<0.000000e+00> : vector<16x96xf32>
    %18 = tpu.matmul %17, %5, %cst_10 {dimension_numbers = #tpu.dot_dimension_numbers<[1], [0], [0], [1], [0, 0, 1, 1], [], []>} : vector<16x32xf32>, vector<32x96xf32>, vector<16x96xf32> -> vector<16x96xf32>
    %19 = arith.addf %16, %18 : vector<16x96xf32>
    %20 = vector.extract_strided_slice %14 {offsets = [16, 0], sizes = [16, 32], strides = [1, 1]} : vector<128x32xf32> to vector<16x32xf32>
    %cst_11 = arith.constant dense<0.000000e+00> : vector<16x96xf32>
    %21 = tpu.matmul %20, %6, %cst_11 {dimension_numbers = #tpu.dot_dimension_numbers<[1], [0], [0], [1], [0, 0, 1, 1], [], []>} : vector<16x32xf32>, vector<32x96xf32>, vector<16x96xf32> -> vector<16x96xf32>
    %22 = arith.addf %19, %21 : vector<16x96xf32>
    %23 = vector.extract_strided_slice %14 {offsets = [32, 0], sizes = [16, 32], strides = [1, 1]} : vector<128x32xf32> to vector<16x32xf32>
    %cst_12 = arith.constant dense<0.000000e+00> : vector<16x96xf32>
    %24 = tpu.matmul %23, %7, %cst_12 {dimension_numbers = #tpu.dot_dimension_numbers<[1], [0], [0], [1], [0, 0, 1, 1], [], []>} : vector<16x32xf32>, vector<32x96xf32>, vector<16x96xf32> -> vector<16x96xf32>
    %25 = arith.addf %22, %24 : vector<16x96xf32>
    %26 = vector.extract_strided_slice %14 {offsets = [48, 0], sizes = [16, 32], strides = [1, 1]} : vector<128x32xf32> to vector<16x32xf32>
    %cst_13 = arith.constant dense<0.000000e+00> : vector<16x96xf32>
    %27 = tpu.matmul %26, %8, %cst_13 {dimension_numbers = #tpu.dot_dimension_numbers<[1], [0], [0], [1], [0, 0, 1, 1], [], []>} : vector<16x32xf32>, vector<32x96xf32>, vector<16x96xf32> -> vector<16x96xf32>
    %28 = arith.addf %25, %27 : vector<16x96xf32>
    %29 = vector.extract_strided_slice %14 {offsets = [64, 0], sizes = [16, 32], strides = [1, 1]} : vector<128x32xf32> to vector<16x32xf32>
    %cst_14 = arith.constant dense<0.000000e+00> : vector<16x96xf32>
    %30 = tpu.matmul %29, %9, %cst_14 {dimension_numbers = #tpu.dot_dimension_numbers<[1], [0], [0], [1], [0, 0, 1, 1], [], []>} : vector<16x32xf32>, vector<32x96xf32>, vector<16x96xf32> -> vector<16x96xf32>
    %31 = arith.addf %28, %30 : vector<16x96xf32>
    %32 = vector.extract_strided_slice %14 {offsets = [80, 0], sizes = [16, 32], strides = [1, 1]} : vector<128x32xf32> to vector<16x32xf32>
    %cst_15 = arith.constant dense<0.000000e+00> : vector<16x96xf32>
    %33 = tpu.matmul %32, %10, %cst_15 {dimension_numbers = #tpu.dot_dimension_numbers<[1], [0], [0], [1], [0, 0, 1, 1], [], []>} : vector<16x32xf32>, vector<32x96xf32>, vector<16x96xf32> -> vector<16x96xf32>
    %34 = arith.addf %31, %33 : vector<16x96xf32>
    %35 = vector.extract_strided_slice %14 {offsets = [96, 0], sizes = [16, 32], strides = [1, 1]} : vector<128x32xf32> to vector<16x32xf32>
    %cst_16 = arith.constant dense<0.000000e+00> : vector<16x96xf32>
    %36 = tpu.matmul %35, %11, %cst_16 {dimension_numbers = #tpu.dot_dimension_numbers<[1], [0], [0], [1], [0, 0, 1, 1], [], []>} : vector<16x32xf32>, vector<32x96xf32>, vector<16x96xf32> -> vector<16x96xf32>
    %37 = arith.addf %34, %36 : vector<16x96xf32>
    %38 = vector.extract_strided_slice %14 {offsets = [112, 0], sizes = [16, 32], strides = [1, 1]} : vector<128x32xf32> to vector<16x32xf32>
    %cst_17 = arith.constant dense<0.000000e+00> : vector<16x96xf32>
    %39 = tpu.matmul %38, %12, %cst_17 {dimension_numbers = #tpu.dot_dimension_numbers<[1], [0], [0], [1], [0, 0, 1, 1], [], []>} : vector<16x32xf32>, vector<32x96xf32>, vector<16x96xf32> -> vector<16x96xf32>
    %40 = arith.addf %37, %39 : vector<16x96xf32>
    %41 = vector.extract_strided_slice %40 {offsets = [0, 0], sizes = [16, 64], strides = [1, 1]} : vector<16x96xf32> to vector<16x64xf32>
    %42 = arith.negf %41 : vector<16x64xf32>
    %43 = math.exp %42 : vector<16x64xf32>
    %cst_18 = arith.constant 1.000000e+00 : f32
    %44 = vector.broadcast %cst_18 : f32 to vector<16x64xf32>
    %45 = arith.addf %44, %43 : vector<16x64xf32>
    %46 = arith.divf %44, %45 : vector<16x64xf32>
    %47 = vector.extract_strided_slice %46 {offsets = [0, 0], sizes = [16, 32], strides = [1, 1]} : vector<16x64xf32> to vector<16x32xf32>
    %48 = vector.extract_strided_slice %46 {offsets = [0, 32], sizes = [16, 32], strides = [1, 1]} : vector<16x64xf32> to vector<16x32xf32>
    %49 = vector.extract_strided_slice %40 {offsets = [0, 64], sizes = [16, 32], strides = [1, 1]} : vector<16x96xf32> to vector<16x32xf32>
    %50 = arith.mulf %47, %0 : vector<16x32xf32>
    %cst_19 = arith.constant dense<0.000000e+00> : vector<16x32xf32>
    %51 = tpu.matmul %50, %4, %cst_19 {dimension_numbers = #tpu.dot_dimension_numbers<[1], [0], [0], [1], [0, 0, 1, 1], [], []>} : vector<16x32xf32>, vector<32x32xf32>, vector<16x32xf32> -> vector<16x32xf32>
    %52 = arith.addf %49, %51 : vector<16x32xf32>
    %53 = math.tanh %52 : vector<16x32xf32>
    %cst_20 = arith.constant 1.000000e+00 : f32
    %54 = vector.broadcast %cst_20 : f32 to vector<16x32xf32>
    %55 = arith.subf %54, %48 : vector<16x32xf32>
    %56 = arith.mulf %55, %0 : vector<16x32xf32>
    %57 = arith.mulf %48, %53 : vector<16x32xf32>
    %58 = arith.addf %56, %57 : vector<16x32xf32>
    %cst_21 = arith.constant dense<0.000000e+00> : vector<128x32xf32>
    %59 = tpu.matmul %1, %58, %cst_21 {dimension_numbers = #tpu.dot_dimension_numbers<[1], [0], [0], [1], [0, 0, 1, 1], [], []>} : vector<128x16xf32>, vector<16x32xf32>, vector<128x32xf32> -> vector<128x32xf32>
    %cst_22 = arith.constant dense<0.000000e+00> : vector<16x96xf32>
    %60 = tpu.matmul %58, %13, %cst_22 {dimension_numbers = #tpu.dot_dimension_numbers<[1], [0], [0], [1], [0, 0, 1, 1], [], []>} : vector<16x32xf32>, vector<32x96xf32>, vector<16x96xf32> -> vector<16x96xf32>
    %61 = arith.addf %2, %60 : vector<16x96xf32>
    %62 = vector.extract_strided_slice %59 {offsets = [0, 0], sizes = [16, 32], strides = [1, 1]} : vector<128x32xf32> to vector<16x32xf32>
    %cst_23 = arith.constant dense<0.000000e+00> : vector<16x96xf32>
    %63 = tpu.matmul %62, %5, %cst_23 {dimension_numbers = #tpu.dot_dimension_numbers<[1], [0], [0], [1], [0, 0, 1, 1], [], []>} : vector<16x32xf32>, vector<32x96xf32>, vector<16x96xf32> -> vector<16x96xf32>
    %64 = arith.addf %61, %63 : vector<16x96xf32>
    %65 = vector.extract_strided_slice %59 {offsets = [16, 0], sizes = [16, 32], strides = [1, 1]} : vector<128x32xf32> to vector<16x32xf32>
    %cst_24 = arith.constant dense<0.000000e+00> : vector<16x96xf32>
    %66 = tpu.matmul %65, %6, %cst_24 {dimension_numbers = #tpu.dot_dimension_numbers<[1], [0], [0], [1], [0, 0, 1, 1], [], []>} : vector<16x32xf32>, vector<32x96xf32>, vector<16x96xf32> -> vector<16x96xf32>
    %67 = arith.addf %64, %66 : vector<16x96xf32>
    %68 = vector.extract_strided_slice %59 {offsets = [32, 0], sizes = [16, 32], strides = [1, 1]} : vector<128x32xf32> to vector<16x32xf32>
    %cst_25 = arith.constant dense<0.000000e+00> : vector<16x96xf32>
    %69 = tpu.matmul %68, %7, %cst_25 {dimension_numbers = #tpu.dot_dimension_numbers<[1], [0], [0], [1], [0, 0, 1, 1], [], []>} : vector<16x32xf32>, vector<32x96xf32>, vector<16x96xf32> -> vector<16x96xf32>
    %70 = arith.addf %67, %69 : vector<16x96xf32>
    %71 = vector.extract_strided_slice %59 {offsets = [48, 0], sizes = [16, 32], strides = [1, 1]} : vector<128x32xf32> to vector<16x32xf32>
    %cst_26 = arith.constant dense<0.000000e+00> : vector<16x96xf32>
    %72 = tpu.matmul %71, %8, %cst_26 {dimension_numbers = #tpu.dot_dimension_numbers<[1], [0], [0], [1], [0, 0, 1, 1], [], []>} : vector<16x32xf32>, vector<32x96xf32>, vector<16x96xf32> -> vector<16x96xf32>
    %73 = arith.addf %70, %72 : vector<16x96xf32>
    %74 = vector.extract_strided_slice %59 {offsets = [64, 0], sizes = [16, 32], strides = [1, 1]} : vector<128x32xf32> to vector<16x32xf32>
    %cst_27 = arith.constant dense<0.000000e+00> : vector<16x96xf32>
    %75 = tpu.matmul %74, %9, %cst_27 {dimension_numbers = #tpu.dot_dimension_numbers<[1], [0], [0], [1], [0, 0, 1, 1], [], []>} : vector<16x32xf32>, vector<32x96xf32>, vector<16x96xf32> -> vector<16x96xf32>
    %76 = arith.addf %73, %75 : vector<16x96xf32>
    %77 = vector.extract_strided_slice %59 {offsets = [80, 0], sizes = [16, 32], strides = [1, 1]} : vector<128x32xf32> to vector<16x32xf32>
    %cst_28 = arith.constant dense<0.000000e+00> : vector<16x96xf32>
    %78 = tpu.matmul %77, %10, %cst_28 {dimension_numbers = #tpu.dot_dimension_numbers<[1], [0], [0], [1], [0, 0, 1, 1], [], []>} : vector<16x32xf32>, vector<32x96xf32>, vector<16x96xf32> -> vector<16x96xf32>
    %79 = arith.addf %76, %78 : vector<16x96xf32>
    %80 = vector.extract_strided_slice %59 {offsets = [96, 0], sizes = [16, 32], strides = [1, 1]} : vector<128x32xf32> to vector<16x32xf32>
    %cst_29 = arith.constant dense<0.000000e+00> : vector<16x96xf32>
    %81 = tpu.matmul %80, %11, %cst_29 {dimension_numbers = #tpu.dot_dimension_numbers<[1], [0], [0], [1], [0, 0, 1, 1], [], []>} : vector<16x32xf32>, vector<32x96xf32>, vector<16x96xf32> -> vector<16x96xf32>
    %82 = arith.addf %79, %81 : vector<16x96xf32>
    %83 = vector.extract_strided_slice %59 {offsets = [112, 0], sizes = [16, 32], strides = [1, 1]} : vector<128x32xf32> to vector<16x32xf32>
    %cst_30 = arith.constant dense<0.000000e+00> : vector<16x96xf32>
    %84 = tpu.matmul %83, %12, %cst_30 {dimension_numbers = #tpu.dot_dimension_numbers<[1], [0], [0], [1], [0, 0, 1, 1], [], []>} : vector<16x32xf32>, vector<32x96xf32>, vector<16x96xf32> -> vector<16x96xf32>
    %85 = arith.addf %82, %84 : vector<16x96xf32>
    %86 = vector.extract_strided_slice %85 {offsets = [0, 0], sizes = [16, 64], strides = [1, 1]} : vector<16x96xf32> to vector<16x64xf32>
    %87 = arith.negf %86 : vector<16x64xf32>
    %88 = math.exp %87 : vector<16x64xf32>
    %cst_31 = arith.constant 1.000000e+00 : f32
    %89 = vector.broadcast %cst_31 : f32 to vector<16x64xf32>
    %90 = arith.addf %89, %88 : vector<16x64xf32>
    %91 = arith.divf %89, %90 : vector<16x64xf32>
    %92 = vector.extract_strided_slice %91 {offsets = [0, 0], sizes = [16, 32], strides = [1, 1]} : vector<16x64xf32> to vector<16x32xf32>
    %93 = vector.extract_strided_slice %91 {offsets = [0, 32], sizes = [16, 32], strides = [1, 1]} : vector<16x64xf32> to vector<16x32xf32>
    %94 = vector.extract_strided_slice %85 {offsets = [0, 64], sizes = [16, 32], strides = [1, 1]} : vector<16x96xf32> to vector<16x32xf32>
    %95 = arith.mulf %92, %58 : vector<16x32xf32>
    %cst_32 = arith.constant dense<0.000000e+00> : vector<16x32xf32>
    %96 = tpu.matmul %95, %4, %cst_32 {dimension_numbers = #tpu.dot_dimension_numbers<[1], [0], [0], [1], [0, 0, 1, 1], [], []>} : vector<16x32xf32>, vector<32x32xf32>, vector<16x32xf32> -> vector<16x32xf32>
    %97 = arith.addf %94, %96 : vector<16x32xf32>
    %98 = math.tanh %97 : vector<16x32xf32>
    %cst_33 = arith.constant 1.000000e+00 : f32
    %99 = vector.broadcast %cst_33 : f32 to vector<16x32xf32>
    %100 = arith.subf %99, %93 : vector<16x32xf32>
    %101 = arith.mulf %100, %58 : vector<16x32xf32>
    %102 = arith.mulf %93, %98 : vector<16x32xf32>
    %103 = arith.addf %101, %102 : vector<16x32xf32>
    %cst_34 = arith.constant dense<0.000000e+00> : vector<128x32xf32>
    %104 = tpu.matmul %1, %103, %cst_34 {dimension_numbers = #tpu.dot_dimension_numbers<[1], [0], [0], [1], [0, 0, 1, 1], [], []>} : vector<128x16xf32>, vector<16x32xf32>, vector<128x32xf32> -> vector<128x32xf32>
    %cst_35 = arith.constant dense<0.000000e+00> : vector<16x96xf32>
    %105 = tpu.matmul %103, %13, %cst_35 {dimension_numbers = #tpu.dot_dimension_numbers<[1], [0], [0], [1], [0, 0, 1, 1], [], []>} : vector<16x32xf32>, vector<32x96xf32>, vector<16x96xf32> -> vector<16x96xf32>
    %106 = arith.addf %2, %105 : vector<16x96xf32>
    %107 = vector.extract_strided_slice %104 {offsets = [0, 0], sizes = [16, 32], strides = [1, 1]} : vector<128x32xf32> to vector<16x32xf32>
    %cst_36 = arith.constant dense<0.000000e+00> : vector<16x96xf32>
    %108 = tpu.matmul %107, %5, %cst_36 {dimension_numbers = #tpu.dot_dimension_numbers<[1], [0], [0], [1], [0, 0, 1, 1], [], []>} : vector<16x32xf32>, vector<32x96xf32>, vector<16x96xf32> -> vector<16x96xf32>
    %109 = arith.addf %106, %108 : vector<16x96xf32>
    %110 = vector.extract_strided_slice %104 {offsets = [16, 0], sizes = [16, 32], strides = [1, 1]} : vector<128x32xf32> to vector<16x32xf32>
    %cst_37 = arith.constant dense<0.000000e+00> : vector<16x96xf32>
    %111 = tpu.matmul %110, %6, %cst_37 {dimension_numbers = #tpu.dot_dimension_numbers<[1], [0], [0], [1], [0, 0, 1, 1], [], []>} : vector<16x32xf32>, vector<32x96xf32>, vector<16x96xf32> -> vector<16x96xf32>
    %112 = arith.addf %109, %111 : vector<16x96xf32>
    %113 = vector.extract_strided_slice %104 {offsets = [32, 0], sizes = [16, 32], strides = [1, 1]} : vector<128x32xf32> to vector<16x32xf32>
    %cst_38 = arith.constant dense<0.000000e+00> : vector<16x96xf32>
    %114 = tpu.matmul %113, %7, %cst_38 {dimension_numbers = #tpu.dot_dimension_numbers<[1], [0], [0], [1], [0, 0, 1, 1], [], []>} : vector<16x32xf32>, vector<32x96xf32>, vector<16x96xf32> -> vector<16x96xf32>
    %115 = arith.addf %112, %114 : vector<16x96xf32>
    %116 = vector.extract_strided_slice %104 {offsets = [48, 0], sizes = [16, 32], strides = [1, 1]} : vector<128x32xf32> to vector<16x32xf32>
    %cst_39 = arith.constant dense<0.000000e+00> : vector<16x96xf32>
    %117 = tpu.matmul %116, %8, %cst_39 {dimension_numbers = #tpu.dot_dimension_numbers<[1], [0], [0], [1], [0, 0, 1, 1], [], []>} : vector<16x32xf32>, vector<32x96xf32>, vector<16x96xf32> -> vector<16x96xf32>
    %118 = arith.addf %115, %117 : vector<16x96xf32>
    %119 = vector.extract_strided_slice %104 {offsets = [64, 0], sizes = [16, 32], strides = [1, 1]} : vector<128x32xf32> to vector<16x32xf32>
    %cst_40 = arith.constant dense<0.000000e+00> : vector<16x96xf32>
    %120 = tpu.matmul %119, %9, %cst_40 {dimension_numbers = #tpu.dot_dimension_numbers<[1], [0], [0], [1], [0, 0, 1, 1], [], []>} : vector<16x32xf32>, vector<32x96xf32>, vector<16x96xf32> -> vector<16x96xf32>
    %121 = arith.addf %118, %120 : vector<16x96xf32>
    %122 = vector.extract_strided_slice %104 {offsets = [80, 0], sizes = [16, 32], strides = [1, 1]} : vector<128x32xf32> to vector<16x32xf32>
    %cst_41 = arith.constant dense<0.000000e+00> : vector<16x96xf32>
    %123 = tpu.matmul %122, %10, %cst_41 {dimension_numbers = #tpu.dot_dimension_numbers<[1], [0], [0], [1], [0, 0, 1, 1], [], []>} : vector<16x32xf32>, vector<32x96xf32>, vector<16x96xf32> -> vector<16x96xf32>
    %124 = arith.addf %121, %123 : vector<16x96xf32>
    %125 = vector.extract_strided_slice %104 {offsets = [96, 0], sizes = [16, 32], strides = [1, 1]} : vector<128x32xf32> to vector<16x32xf32>
    %cst_42 = arith.constant dense<0.000000e+00> : vector<16x96xf32>
    %126 = tpu.matmul %125, %11, %cst_42 {dimension_numbers = #tpu.dot_dimension_numbers<[1], [0], [0], [1], [0, 0, 1, 1], [], []>} : vector<16x32xf32>, vector<32x96xf32>, vector<16x96xf32> -> vector<16x96xf32>
    %127 = arith.addf %124, %126 : vector<16x96xf32>
    %128 = vector.extract_strided_slice %104 {offsets = [112, 0], sizes = [16, 32], strides = [1, 1]} : vector<128x32xf32> to vector<16x32xf32>
    %cst_43 = arith.constant dense<0.000000e+00> : vector<16x96xf32>
    %129 = tpu.matmul %128, %12, %cst_43 {dimension_numbers = #tpu.dot_dimension_numbers<[1], [0], [0], [1], [0, 0, 1, 1], [], []>} : vector<16x32xf32>, vector<32x96xf32>, vector<16x96xf32> -> vector<16x96xf32>
    %130 = arith.addf %127, %129 : vector<16x96xf32>
    %131 = vector.extract_strided_slice %130 {offsets = [0, 0], sizes = [16, 64], strides = [1, 1]} : vector<16x96xf32> to vector<16x64xf32>
    %132 = arith.negf %131 : vector<16x64xf32>
    %133 = math.exp %132 : vector<16x64xf32>
    %cst_44 = arith.constant 1.000000e+00 : f32
    %134 = vector.broadcast %cst_44 : f32 to vector<16x64xf32>
    %135 = arith.addf %134, %133 : vector<16x64xf32>
    %136 = arith.divf %134, %135 : vector<16x64xf32>
    %137 = vector.extract_strided_slice %136 {offsets = [0, 0], sizes = [16, 32], strides = [1, 1]} : vector<16x64xf32> to vector<16x32xf32>
    %138 = vector.extract_strided_slice %136 {offsets = [0, 32], sizes = [16, 32], strides = [1, 1]} : vector<16x64xf32> to vector<16x32xf32>
    %139 = vector.extract_strided_slice %130 {offsets = [0, 64], sizes = [16, 32], strides = [1, 1]} : vector<16x96xf32> to vector<16x32xf32>
    %140 = arith.mulf %137, %103 : vector<16x32xf32>
    %cst_45 = arith.constant dense<0.000000e+00> : vector<16x32xf32>
    %141 = tpu.matmul %140, %4, %cst_45 {dimension_numbers = #tpu.dot_dimension_numbers<[1], [0], [0], [1], [0, 0, 1, 1], [], []>} : vector<16x32xf32>, vector<32x32xf32>, vector<16x32xf32> -> vector<16x32xf32>
    %142 = arith.addf %139, %141 : vector<16x32xf32>
    %143 = math.tanh %142 : vector<16x32xf32>
    %cst_46 = arith.constant 1.000000e+00 : f32
    %144 = vector.broadcast %cst_46 : f32 to vector<16x32xf32>
    %145 = arith.subf %144, %138 : vector<16x32xf32>
    %146 = arith.mulf %145, %103 : vector<16x32xf32>
    %147 = arith.mulf %138, %143 : vector<16x32xf32>
    %148 = arith.addf %146, %147 : vector<16x32xf32>
    %c0_47 = arith.constant 0 : index
    %c0_48 = arith.constant 0 : index
    %149 = vector.load %arg7[%c0_47, %c0_48] : memref<32x32xf32, #tpu.memory_space<vmem>>, vector<32x32xf32>
    %cst_49 = arith.constant dense<0.000000e+00> : vector<16x32xf32>
    %150 = tpu.matmul %148, %149, %cst_49 {dimension_numbers = #tpu.dot_dimension_numbers<[1], [0], [0], [1], [0, 0, 1, 1], [], []>} : vector<16x32xf32>, vector<32x32xf32>, vector<16x32xf32> -> vector<16x32xf32>
    %c0_50 = arith.constant 0 : index
    %c0_51 = arith.constant 0 : index
    %151 = vector.load %arg2[%c0_50, %c0_51] : memref<16x16xf32, #tpu.memory_space<vmem>>, vector<16x16xf32>
    %c0_52 = arith.constant 0 : index
    %c0_53 = arith.constant 0 : index
    %152 = vector.load %arg8[%c0_52, %c0_53] : memref<16x32xf32, #tpu.memory_space<vmem>>, vector<16x32xf32>
    %cst_54 = arith.constant dense<0.000000e+00> : vector<16x32xf32>
    %153 = tpu.matmul %151, %152, %cst_54 {dimension_numbers = #tpu.dot_dimension_numbers<[1], [0], [0], [1], [0, 0, 1, 1], [], []>} : vector<16x16xf32>, vector<16x32xf32>, vector<16x32xf32> -> vector<16x32xf32>
    %154 = arith.addf %150, %153 : vector<16x32xf32>
    %155 = math.tanh %154 : vector<16x32xf32>
    %c0_55 = arith.constant 0 : index
    %c0_56 = arith.constant 0 : index
    %156 = vector.load %arg9[%c0_55, %c0_56] : memref<16x32xf32, #tpu.memory_space<vmem>>, vector<16x32xf32>
    tpu.vector_store %arg9[%c0_55, %c0_56], %155 {strides = array<i32>} : memref<16x32xf32, #tpu.memory_space<vmem>>, vector<16x32xf32>,
    return
  }
  func.func @transform_0(%arg0: i32) -> (i32, i32) {
    %c0_i32 = arith.constant 0 : i32
    %c0_i32_0 = arith.constant 0 : i32
    %c0_i32_1 = arith.constant 0 : i32
    return %c0_i32, %c0_i32_0 : i32, i32
  }
  func.func @transform_1(%arg0: i32) -> (i32, i32) {
    %c0_i32 = arith.constant 0 : i32
    %c0_i32_0 = arith.constant 0 : i32
    %c0_i32_1 = arith.constant 0 : i32
    return %c0_i32, %c0_i32_0 : i32, i32
  }
  func.func @transform_2(%arg0: i32) -> (i32, i32) {
    %c0_i32 = arith.constant 0 : i32
    %c0_i32_0 = arith.constant 0 : i32
    %c0_i32_1 = arith.constant 0 : i32
    return %c0_i32, %c0_i32_0 : i32, i32
  }
  func.func @transform_3(%arg0: i32) -> (i32, i32) {
    %c0_i32 = arith.constant 0 : i32
    %c0_i32_0 = arith.constant 0 : i32
    %c0_i32_1 = arith.constant 0 : i32
    return %c0_i32, %c0_i32_0 : i32, i32
  }
  func.func @transform_4(%arg0: i32) -> (i32, i32) {
    %c0_i32 = arith.constant 0 : i32
    %c0_i32_0 = arith.constant 0 : i32
    %c0_i32_1 = arith.constant 0 : i32
    return %c0_i32, %c0_i32_0 : i32, i32
  }
  func.func @transform_5(%arg0: i32) -> (i32, i32) {
    %c0_i32 = arith.constant 0 : i32
    %c0_i32_0 = arith.constant 0 : i32
    %c0_i32_1 = arith.constant 0 : i32
    return %c0_i32, %c0_i32_0 : i32, i32
  }
  func.func @transform_6(%arg0: i32) -> (i32, i32) {
    %c0_i32 = arith.constant 0 : i32
    %c0_i32_0 = arith.constant 0 : i32
    %c0_i32_1 = arith.constant 0 : i32
    return %c0_i32, %c0_i32_0 : i32, i32
  }
  func.func @transform_7(%arg0: i32) -> (i32, i32) {
    %c0_i32 = arith.constant 0 : i32
    %c0_i32_0 = arith.constant 0 : i32
    %c0_i32_1 = arith.constant 0 : i32
    return %c0_i32, %c0_i32_0 : i32, i32
  }
  func.func @transform_8(%arg0: i32) -> (i32, i32) {
    %c0_i32 = arith.constant 0 : i32
    %c0_i32_0 = arith.constant 0 : i32
    %c0_i32_1 = arith.constant 0 : i32
    return %c0_i32, %c0_i32_0 : i32, i32
  }
}

</mosaic_0001>

<llo_original>
// kernel: ggnn_pallas.1
$region0: #{ggnn_pallas.1}
  #allocation0 [shape = 'u32[]', space=smem, size = 0x4, offset = 0x4, fixed_abs, tag = 'smem constant byte address 0x4 - core index']
  #allocation1 [shape = 'u32[144,128]{1,0:T(1,128)}', space=vmem, size = 0x12000, scoped, tag = 'internal scratch']
  %s0 = inlined_call_operand.vmem [shape: f32[16,32], index: 0, kind: input, shape index: {}]
  %s1 = inlined_call_operand.vmem [shape: f32[16,16], index: 1, kind: input, shape index: {}]
  %s2 = inlined_call_operand.vmem [shape: f32[128,16], index: 2, kind: input, shape index: {}]
  %s3 = inlined_call_operand.vmem [shape: f32[16,96], index: 3, kind: input, shape index: {}]
  %s4 = inlined_call_operand.vmem [shape: f32[288,96], index: 4, kind: input, shape index: {}]
  %s5 = inlined_call_operand.vmem [shape: f32[32,32], index: 5, kind: input, shape index: {}]
  %s6 = inlined_call_operand.vmem [shape: f32[32,32], index: 6, kind: input, shape index: {}]
  %s7 = inlined_call_operand.vmem [shape: f32[16,32], index: 7, kind: input, shape index: {}]
  %s8 = inlined_call_operand.hbm [shape: f32[16,32], index: 8, kind: output, shape index: {}]
  %s9 = sld [smem:[#allocation0]]
  $region42: #{ggnn_pallas.1} parent=0
    _
  %s11 = ssub.s32 1, %s9
  %s12 = scalar_select 0, %s11, %s9
  $region1: #{ggnn_pallas.1} parent=0
    #allocation2 [shape = 'u8[8192]{0}', space=vmem, size = 0x2000, scoped, tag = 'output window, operand 0, single buffered']
    #allocation3 [shape = 's32[1]{0}', space=sflag, size = 0x4, scoped, tag = 'scoped memory for ggnn_pallas.1']
    %13 = vsyncpa [#allocation3], 0
    // Predicated region
    $region2: #{ggnn_pallas.1} parent=1 // pred_check
      _
    $region3: #{ggnn_pallas.1} parent=1 // pred_check_branch
      %15 = sbr.rel (0) target = $region5
    $region4: #{ggnn_pallas.1} parent=1 // pred_region
      _
    $region5: #{ggnn_pallas.1} parent=1 // pred_fallthru
      _
    // Predicated region
    $region6: #{ggnn_pallas.1} parent=1 // pred_check
      _
    $region7: #{ggnn_pallas.1} parent=1 // pred_check_branch
      %17 = sbr.rel (0) target = $region9
    $region8: #{ggnn_pallas.1} parent=1 // pred_region
      _
    $region9: #{ggnn_pallas.1} parent=1 // pred_fallthru
      _
    // Predicated region
    $region10: #{ggnn_pallas.1} parent=1 // pred_check
      _
    $region11: #{ggnn_pallas.1} parent=1 // pred_check_branch
      %19 = sbr.rel (0) target = $region13
    $region12: #{ggnn_pallas.1} parent=1 // pred_region
      _
    $region13: #{ggnn_pallas.1} parent=1 // pred_fallthru
      _
    // Predicated region
    $region14: #{ggnn_pallas.1} parent=1 // pred_check
      _
    $region15: #{ggnn_pallas.1} parent=1 // pred_check_branch
      %21 = sbr.rel (0) target = $region17
    $region16: #{ggnn_pallas.1} parent=1 // pred_region
      _
    $region17: #{ggnn_pallas.1} parent=1 // pred_fallthru
      _
    // Predicated region
    $region18: #{ggnn_pallas.1} parent=1 // pred_check
      _
    $region19: #{ggnn_pallas.1} parent=1 // pred_check_branch
      %23 = sbr.rel (0) target = $region21
    $region20: #{ggnn_pallas.1} parent=1 // pred_region
      _
    $region21: #{ggnn_pallas.1} parent=1 // pred_fallthru
      _
    // Predicated region
    $region22: #{ggnn_pallas.1} parent=1 // pred_check
      _
    $region23: #{ggnn_pallas.1} parent=1 // pred_check_branch
      %25 = sbr.rel (0) target = $region25
    $region24: #{ggnn_pallas.1} parent=1 // pred_region
      _
    $region25: #{ggnn_pallas.1} parent=1 // pred_fallthru
      _
    // Predicated region
    $region26: #{ggnn_pallas.1} parent=1 // pred_check
      _
    $region27: #{ggnn_pallas.1} parent=1 // pred_check_branch
      %27 = sbr.rel (0) target = $region29
    $region28: #{ggnn_pallas.1} parent=1 // pred_region
      _
    $region29: #{ggnn_pallas.1} parent=1 // pred_fallthru
      _
    // Predicated region
    $region30: #{ggnn_pallas.1} parent=1 // pred_check
      _
    $region31: #{ggnn_pallas.1} parent=1 // pred_check_branch
      %29 = sbr.rel (0) target = $region33
    $region32: #{ggnn_pallas.1} parent=1 // pred_region
      _
    $region33: #{ggnn_pallas.1} parent=1 // pred_fallthru
      _
    %v30 = vld [vmem:[%s0] sm:$0xff]
    %v31 = vld [vmem:[%s0 + $0x8] sm:$0xff]
    %v32 = vld [vmem:[%s2] sm:$0xff]
    %v33 = vld [vmem:[%s2 + $0x8] sm:$0xff]
    %v34 = vld [vmem:[%s2 + $0x10] sm:$0xff]
    %v35 = vld [vmem:[%s2 + $0x18] sm:$0xff]
    %v36 = vld [vmem:[%s2 + $0x20] sm:$0xff]
    %v37 = vld [vmem:[%s2 + $0x28] sm:$0xff]
    %v38 = vld [vmem:[%s2 + $0x30] sm:$0xff]
    %v39 = vld [vmem:[%s2 + $0x38] sm:$0xff]
    %v40 = vld [vmem:[%s2 + $0x40] sm:$0xff]
    %v41 = vld [vmem:[%s2 + $0x48] sm:$0xff]
    %v42 = vld [vmem:[%s2 + $0x50] sm:$0xff]
    %v43 = vld [vmem:[%s2 + $0x58] sm:$0xff]
    %v44 = vld [vmem:[%s2 + $0x60] sm:$0xff]
    %v45 = vld [vmem:[%s2 + $0x68] sm:$0xff]
    %v46 = vld [vmem:[%s2 + $0x70] sm:$0xff]
    %v47 = vld [vmem:[%s2 + $0x78] sm:$0xff]
    %v48 = vld [vmem:[%s3] sm:$0xff]
    %v49 = vld [vmem:[%s3 + $0x8] sm:$0xff]
    %v50 = vld [vmem:[%s4] sm:$0xff]
    %v51 = vld [vmem:[%s4 + $0x8] sm:$0xff]
    %v52 = vld [vmem:[%s4 + $0x10] sm:$0xff]
    %v53 = vld [vmem:[%s4 + $0x18] sm:$0xff]
    %v54 = vld [vmem:[%s4 + $0x20] sm:$0xff]
    %v55 = vld [vmem:[%s4 + $0x28] sm:$0xff]
    %v56 = vld [vmem:[%s4 + $0x30] sm:$0xff]
    %v57 = vld [vmem:[%s4 + $0x38] sm:$0xff]
    %v58 = vld [vmem:[%s4 + $0x40] sm:$0xff]
    %v59 = vld [vmem:[%s4 + $0x48] sm:$0xff]
    %v60 = vld [vmem:[%s4 + $0x50] sm:$0xff]
    %v61 = vld [vmem:[%s4 + $0x58] sm:$0xff]
    %v62 = vld [vmem:[%s4 + $0x60] sm:$0xff]
    %v63 = vld [vmem:[%s4 + $0x68] sm:$0xff]
    %v64 = vld [vmem:[%s4 + $0x70] sm:$0xff]
    %v65 = vld [vmem:[%s4 + $0x78] sm:$0xff]
    %v66 = vld [vmem:[%s4 + $0x80] sm:$0xff]
    %v67 = vld [vmem:[%s4 + $0x88] sm:$0xff]
    %v68 = vld [vmem:[%s4 + $0x90] sm:$0xff]
    %v69 = vld [vmem:[%s4 + $0x98] sm:$0xff]
    %v70 = vld [vmem:[%s4 + $0xa0] sm:$0xff]
    %v71 = vld [vmem:[%s4 + $0xa8] sm:$0xff]
    %v72 = vld [vmem:[%s4 + $0xb0] sm:$0xff]
    %v73 = vld [vmem:[%s4 + $0xb8] sm:$0xff]
    %v74 = vld [vmem:[%s4 + $0xc0] sm:$0xff]
    %v75 = vld [vmem:[%s4 + $0xc8] sm:$0xff]
    %v76 = vld [vmem:[%s4 + $0xd0] sm:$0xff]
    %v77 = vld [vmem:[%s4 + $0xd8] sm:$0xff]
    %v78 = vld [vmem:[%s4 + $0xe0] sm:$0xff]
    %v79 = vld [vmem:[%s4 + $0xe8] sm:$0xff]
    %v80 = vld [vmem:[%s4 + $0xf0] sm:$0xff]
    %v81 = vld [vmem:[%s4 + $0xf8] sm:$0xff]
    %v82 = vld [vmem:[%s4 + $0x100] sm:$0xff]
    %v83 = vld [vmem:[%s4 + $0x108] sm:$0xff]
    %v84 = vld [vmem:[%s4 + $0x110] sm:$0xff]
    %v85 = vld [vmem:[%s4 + $0x118] sm:$0xff]
    %v86 = vld [vmem:[%s5] sm:$0xff]
    %v87 = vld [vmem:[%s5 + $0x8] sm:$0xff]
    %v88 = vld [vmem:[%s5 + $0x10] sm:$0xff]
    %v89 = vld [vmem:[%s5 + $0x18] sm:$0xff]
    %vm90 = vcmask 130048
    %v92 = vsel %vm90, %v32, 0
    %v95 = vsel %vm90, %v33, 0
    %v98 = vsel %vm90, %v34, 0
    %v101 = vsel %vm90, %v35, 0
    %v104 = vsel %vm90, %v36, 0
    %v107 = vsel %vm90, %v37, 0
    %v110 = vsel %vm90, %v38, 0
    %v113 = vsel %vm90, %v39, 0
    %v116 = vsel %vm90, %v40, 0
    %v119 = vsel %vm90, %v41, 0
    %v122 = vsel %vm90, %v42, 0
    %v125 = vsel %vm90, %v43, 0
    %v128 = vsel %vm90, %v44, 0
    %v131 = vsel %vm90, %v45, 0
    %v134 = vsel %vm90, %v46, 0
    %v137 = vsel %vm90, %v47, 0
    %139 = vmatprep.subr.mxu0 0.0
    %140 = vmatpush1.msra.mxu0 %v30
    %141 = vmatprep.subr.mxu0 0.0
    %142 = vmatpush1.msra.mxu0 %v31
    %143 = vmatprep.subr.mxu0 0.0
    %144 = vmatpush1.msra.mxu0 0.0
    %145 = vmatprep.subr.mxu0 0.0
    %146 = vmatpush1.msra.mxu0 0.0
    %147 = vmatprep.subr.mxu0 0.0
    %148 = vmatpush1.msra.mxu0 0.0
    %149 = vmatprep.subr.mxu0 0.0
    %150 = vmatpush1.msra.mxu0 0.0
    %151 = vmatprep.subr.mxu0 0.0
    %152 = vmatpush1.msra.mxu0 0.0
    %153 = vmatprep.subr.mxu0 0.0
    %154 = vmatpush1.msra.mxu0 0.0
    %155 = vmatprep.subr.mxu0 0.0
    %156 = vmatpush1.msra.mxu0 0.0
    %157 = vmatprep.subr.mxu0 0.0
    %158 = vmatpush1.msra.mxu0 0.0
    %159 = vmatprep.subr.mxu0 0.0
    %160 = vmatpush1.msra.mxu0 0.0
    %161 = vmatprep.subr.mxu0 0.0
    %162 = vmatpush1.msra.mxu0 0.0
    %163 = vmatprep.subr.mxu0 0.0
    %164 = vmatpush1.msra.mxu0 0.0
    %165 = vmatprep.subr.mxu0 0.0
    %166 = vmatpush1.msra.mxu0 0.0
    %167 = vmatprep.subr.mxu0 0.0
    %168 = vmatpush1.msra.mxu0 0.0
    %169 = vmatprep.subr.mxu0 0.0
    %170 = vmatpush1.msra.mxu0 0.0
    %171 = vmatprep.subr.mxu0 0.0
    %172 = vmatpush1.msra.mxu0 0.0
    %173 = vmatprep.subr.mxu0 0.0
    %174 = vmatpush1.msra.mxu0 0.0
    %175 = vmatprep.subr.mxu0 0.0
    %176 = vmatpush1.msra.mxu0 0.0
    %177 = vmatprep.subr.mxu0 0.0
    %178 = vmatpush1.msra.mxu0 0.0
    %179 = vmatprep.subr.mxu0 0.0
    %180 = vmatpush1.msra.mxu0 0.0
    %181 = vmatprep.subr.mxu0 0.0
    %182 = vmatpush1.msra.mxu0 0.0
    %183 = vmatprep.subr.mxu0 0.0
    %184 = vmatpush1.msra.mxu0 0.0
    %185 = vmatprep.subr.mxu0 0.0
    %186 = vmatpush1.msra.mxu0 0.0
    %187 = vmatprep.subr.mxu0 0.0
    %188 = vmatpush1.msra.mxu0 0.0
    %189 = vmatprep.subr.mxu0 0.0
    %190 = vmatpush1.msra.mxu0 0.0
    %191 = vmatprep.subr.mxu0 0.0
    %192 = vmatpush1.msra.mxu0 0.0
    %193 = vmatprep.subr.mxu0 0.0
    %194 = vmatpush1.msra.mxu0 0.0
    %195 = vmatprep.subr.mxu0 0.0
    %196 = vmatpush1.msra.mxu0 0.0
    %197 = vmatprep.subr.mxu0 0.0
    %198 = vmatpush1.msra.mxu0 0.0
    %199 = vmatprep.subr.mxu0 0.0
    %200 = vmatpush1.msra.mxu0 0.0
    %201 = vmatprep.subr.mxu0 0.0
    %202 = vmatpush1.msra.mxu0 0.0
    %203 = vmatprep.mubr.f32.mxu0 0.0
    %204 = vmatmul.mubr.f32.gmra.mrb[0].mxu0 %v92
    %v205 = vpop.f32.mrb[0].mxu0
    %v206 = vadd.f32 0.0, %v205
    %v207 = vpop.f32.mrb[0].mxu0
    %208 = vmatprep.mubr.f32.mxu0 0.0
    %209 = vmatmul.mubr.f32.gmra.mrb[0].mxu0 %v95
    %v210 = vpop.f32.mrb[0].mxu0
    %v211 = vadd.f32 0.0, %v210
    %v212 = vpop.f32.mrb[0].mxu0
    %213 = vmatprep.mubr.f32.mxu0 0.0
    %214 = vmatmul.mubr.f32.gmra.mrb[0].mxu0 %v98
    %v215 = vpop.f32.mrb[0].mxu0
    %v216 = vadd.f32 0.0, %v215
    %v217 = vpop.f32.mrb[0].mxu0
    %218 = vmatprep.mubr.f32.mxu0 0.0
    %219 = vmatmul.mubr.f32.gmra.mrb[0].mxu0 %v101
    %v220 = vpop.f32.mrb[0].mxu0
    %v221 = vadd.f32 0.0, %v220
    %v222 = vpop.f32.mrb[0].mxu0
    %223 = vmatprep.mubr.f32.mxu0 0.0
    %224 = vmatmul.mubr.f32.gmra.mrb[0].mxu0 %v104
    %v225 = vpop.f32.mrb[0].mxu0
    %v226 = vadd.f32 0.0, %v225
    %v227 = vpop.f32.mrb[0].mxu0
    %228 = vmatprep.mubr.f32.mxu0 0.0
    %229 = vmatmul.mubr.f32.gmra.mrb[0].mxu0 %v107
    %v230 = vpop.f32.mrb[0].mxu0
    %v231 = vadd.f32 0.0, %v230
    %v232 = vpop.f32.mrb[0].mxu0
    %233 = vmatprep.mubr.f32.mxu0 0.0
    %234 = vmatmul.mubr.f32.gmra.mrb[0].mxu0 %v110
    %v235 = vpop.f32.mrb[0].mxu0
    %v236 = vadd.f32 0.0, %v235
    %v237 = vpop.f32.mrb[0].mxu0
    %238 = vmatprep.mubr.f32.mxu0 0.0
    %239 = vmatmul.mubr.f32.gmra.mrb[0].mxu0 %v113
    %v240 = vpop.f32.mrb[0].mxu0
    %v241 = vadd.f32 0.0, %v240
    %v242 = vpop.f32.mrb[0].mxu0
    %243 = vmatprep.mubr.f32.mxu0 0.0
    %244 = vmatmul.mubr.f32.gmra.mrb[0].mxu0 %v116
    %v245 = vpop.f32.mrb[0].mxu0
    %v246 = vadd.f32 0.0, %v245
    %v247 = vpop.f32.mrb[0].mxu0
    %248 = vmatprep.mubr.f32.mxu0 0.0
    %249 = vmatmul.mubr.f32.gmra.mrb[0].mxu0 %v119
    %v250 = vpop.f32.mrb[0].mxu0
    %v251 = vadd.f32 0.0, %v250
    %v252 = vpop.f32.mrb[0].mxu0
    %253 = vmatprep.mubr.f32.mxu0 0.0
    %254 = vmatmul.mubr.f32.gmra.mrb[0].mxu0 %v122
    %v255 = vpop.f32.mrb[0].mxu0
    %v256 = vadd.f32 0.0, %v255
    %v257 = vpop.f32.mrb[0].mxu0
    %258 = vmatprep.mubr.f32.mxu0 0.0
    %259 = vmatmul.mubr.f32.gmra.mrb[0].mxu0 %v125
    %v260 = vpop.f32.mrb[0].mxu0
    %v261 = vadd.f32 0.0, %v260
    %v262 = vpop.f32.mrb[0].mxu0
    %263 = vmatprep.mubr.f32.mxu0 0.0
    %264 = vmatmul.mubr.f32.gmra.mrb[0].mxu0 %v128
    %v265 = vpop.f32.mrb[0].mxu0
    %v266 = vadd.f32 0.0, %v265
    %v267 = vpop.f32.mrb[0].mxu0
    %268 = vmatprep.mubr.f32.mxu0 0.0
    %269 = vmatmul.mubr.f32.gmra.mrb[0].mxu0 %v131
    %v270 = vpop.f32.mrb[0].mxu0
    %v271 = vadd.f32 0.0, %v270
    %v272 = vpop.f32.mrb[0].mxu0
    %273 = vmatprep.mubr.f32.mxu0 0.0
    %274 = vmatmul.mubr.f32.gmra.mrb[0].mxu0 %v134
    %v275 = vpop.f32.mrb[0].mxu0
    %v276 = vadd.f32 0.0, %v275
    %v277 = vpop.f32.mrb[0].mxu0
    %278 = vmatprep.mubr.f32.mxu0 0.0
    %279 = vmatmul.mubr.f32.gmra.mrb[0].mxu0 %v137
    %v280 = vpop.f32.mrb[0].mxu0
    %v281 = vadd.f32 0.0, %v280
    %v282 = vpop.f32.mrb[0].mxu0
    %283 = vdwg.mxu0
    %vm284 = vcmask 261120
    %v286 = vsel %vm284, %v30, 0
    %v289 = vsel %vm284, %v31, 0
    %291 = vmatprep.subr.mxu0 0.0
    %292 = vmatpush1.msra.mxu0 %v82
    %293 = vmatprep.subr.mxu0 0.0
    %294 = vmatpush1.msra.mxu0 %v83
    %295 = vmatprep.subr.mxu0 0.0
    %296 = vmatpush1.msra.mxu0 %v84
    %297 = vmatprep.subr.mxu0 0.0
    %298 = vmatpush1.msra.mxu0 %v85
    %299 = vmatprep.subr.mxu0 0.0
    %300 = vmatpush1.msra.mxu0 0.0
    %301 = vmatprep.subr.mxu0 0.0
    %302 = vmatpush1.msra.mxu0 0.0
    %303 = vmatprep.subr.mxu0 0.0
    %304 = vmatpush1.msra.mxu0 0.0
    %305 = vmatprep.subr.mxu0 0.0
    %306 = vmatpush1.msra.mxu0 0.0
    %307 = vmatprep.subr.mxu0 0.0
    %308 = vmatpush1.msra.mxu0 0.0
    %309 = vmatprep.subr.mxu0 0.0
    %310 = vmatpush1.msra.mxu0 0.0
    %311 = vmatprep.subr.mxu0 0.0
    %312 = vmatpush1.msra.mxu0 0.0
    %313 = vmatprep.subr.mxu0 0.0
    %314 = vmatpush1.msra.mxu0 0.0
    %315 = vmatprep.subr.mxu0 0.0
    %316 = vmatpush1.msra.mxu0 0.0
    %317 = vmatprep.subr.mxu0 0.0
    %318 = vmatpush1.msra.mxu0 0.0
    %319 = vmatprep.subr.mxu0 0.0
    %320 = vmatpush1.msra.mxu0 0.0
    %321 = vmatprep.subr.mxu0 0.0
    %322 = vmatpush1.msra.mxu0 0.0
    %323 = vmatprep.subr.mxu0 0.0
    %324 = vmatpush1.msra.mxu0 0.0
    %325 = vmatprep.subr.mxu0 0.0
    %326 = vmatpush1.msra.mxu0 0.0
    %327 = vmatprep.subr.mxu0 0.0
    %328 = vmatpush1.msra.mxu0 0.0
    %329 = vmatprep.subr.mxu0 0.0
    %330 = vmatpush1.msra.mxu0 0.0
    %331 = vmatprep.subr.mxu0 0.0
    %332 = vmatpush1.msra.mxu0 0.0
    %333 = vmatprep.subr.mxu0 0.0
    %334 = vmatpush1.msra.mxu0 0.0
    %335 = vmatprep.subr.mxu0 0.0
    %336 = vmatpush1.msra.mxu0 0.0
    %337 = vmatprep.subr.mxu0 0.0
    %338 = vmatpush1.msra.mxu0 0.0
    %339 = vmatprep.subr.mxu0 0.0
    %340 = vmatpush1.msra.mxu0 0.0
    %341 = vmatprep.subr.mxu0 0.0
    %342 = vmatpush1.msra.mxu0 0.0
    %343 = vmatprep.subr.mxu0 0.0
    %344 = vmatpush1.msra.mxu0 0.0
    %345 = vmatprep.subr.mxu0 0.0
    %346 = vmatpush1.msra.mxu0 0.0
    %347 = vmatprep.subr.mxu0 0.0
    %348 = vmatpush1.msra.mxu0 0.0
    %349 = vmatprep.subr.mxu0 0.0
    %350 = vmatpush1.msra.mxu0 0.0
    %351 = vmatprep.subr.mxu0 0.0
    %352 = vmatpush1.msra.mxu0 0.0
    %353 = vmatprep.subr.mxu0 0.0
    %354 = vmatpush1.msra.mxu0 0.0
    %355 = vmatprep.mubr.f32.mxu0 0.0
    %356 = vmatmul.mubr.f32.gmra.mrb[0].mxu0 %v286
    %v357 = vpop.f32.mrb[0].mxu0
    %v358 = vadd.f32 0.0, %v357
    %v359 = vpop.f32.mrb[0].mxu0
    %360 = vmatprep.mubr.f32.mxu0 0.0
    %361 = vmatmul.mubr.f32.gmra.mrb[0].mxu0 %v289
    %v362 = vpop.f32.mrb[0].mxu0
    %v363 = vadd.f32 0.0, %v362
    %v364 = vpop.f32.mrb[0].mxu0
    %365 = vdwg.mxu0
    %v366 = vadd.f32 %v48, %v358
    %v367 = vadd.f32 %v49, %v363
    %v369 = vsel %vm284, %v206, 0
    %v372 = vsel %vm284, %v211, 0
    %374 = vmatprep.subr.mxu0 0.0
    %375 = vmatpush1.msra.mxu0 %v50
    %376 = vmatprep.subr.mxu0 0.0
    %377 = vmatpush1.msra.mxu0 %v51
    %378 = vmatprep.subr.mxu0 0.0
    %379 = vmatpush1.msra.mxu0 %v52
    %380 = vmatprep.subr.mxu0 0.0
    %381 = vmatpush1.msra.mxu0 %v53
    %382 = vmatprep.subr.mxu0 0.0
    %383 = vmatpush1.msra.mxu0 0.0
    %384 = vmatprep.subr.mxu0 0.0
    %385 = vmatpush1.msra.mxu0 0.0
    %386 = vmatprep.subr.mxu0 0.0
    %387 = vmatpush1.msra.mxu0 0.0
    %388 = vmatprep.subr.mxu0 0.0
    %389 = vmatpush1.msra.mxu0 0.0
    %390 = vmatprep.subr.mxu0 0.0
    %391 = vmatpush1.msra.mxu0 0.0
    %392 = vmatprep.subr.mxu0 0.0
    %393 = vmatpush1.msra.mxu0 0.0
    %394 = vmatprep.subr.mxu0 0.0
    %395 = vmatpush1.msra.mxu0 0.0
    %396 = vmatprep.subr.mxu0 0.0
    %397 = vmatpush1.msra.mxu0 0.0
    %398 = vmatprep.subr.mxu0 0.0
    %399 = vmatpush1.msra.mxu0 0.0
    %400 = vmatprep.subr.mxu0 0.0
    %401 = vmatpush1.msra.mxu0 0.0
    %402 = vmatprep.subr.mxu0 0.0
    %403 = vmatpush1.msra.mxu0 0.0
    %404 = vmatprep.subr.mxu0 0.0
    %405 = vmatpush1.msra.mxu0 0.0
    %406 = vmatprep.subr.mxu0 0.0
    %407 = vmatpush1.msra.mxu0 0.0
    %408 = vmatprep.subr.mxu0 0.0
    %409 = vmatpush1.msra.mxu0 0.0
    %410 = vmatprep.subr.mxu0 0.0
    %411 = vmatpush1.msra.mxu0 0.0
    %412 = vmatprep.subr.mxu0 0.0
    %413 = vmatpush1.msra.mxu0 0.0
    %414 = vmatprep.subr.mxu0 0.0
    %415 = vmatpush1.msra.mxu0 0.0
    %416 = vmatprep.subr.mxu0 0.0
    %417 = vmatpush1.msra.mxu0 0.0
    %418 = vmatprep.subr.mxu0 0.0
    %419 = vmatpush1.msra.mxu0 0.0
    %420 = vmatprep.subr.mxu0 0.0
    %421 = vmatpush1.msra.mxu0 0.0
    %422 = vmatprep.subr.mxu0 0.0
    %423 = vmatpush1.msra.mxu0 0.0
    %424 = vmatprep.subr.mxu0 0.0
    %425 = vmatpush1.msra.mxu0 0.0
    %426 = vmatprep.subr.mxu0 0.0
    %427 = vmatpush1.msra.mxu0 0.0
    %428 = vmatprep.subr.mxu0 0.0
    %429 = vmatpush1.msra.mxu0 0.0
    %430 = vmatprep.subr.mxu0 0.0
    %431 = vmatpush1.msra.mxu0 0.0
    %432 = vmatprep.subr.mxu0 0.0
    %433 = vmatpush1.msra.mxu0 0.0
    %434 = vmatprep.subr.mxu0 0.0
    %435 = vmatpush1.msra.mxu0 0.0
    %436 = vmatprep.subr.mxu0 0.0
    %437 = vmatpush1.msra.mxu0 0.0
    %438 = vmatprep.mubr.f32.mxu0 0.0
    %439 = vmatmul.mubr.f32.gmra.mrb[0].mxu0 %v369
    %v440 = vpop.f32.mrb[0].mxu0
    %v441 = vadd.f32 0.0, %v440
    %v442 = vpop.f32.mrb[0].mxu0
    %443 = vmatprep.mubr.f32.mxu0 0.0
    %444 = vmatmul.mubr.f32.gmra.mrb[0].mxu0 %v372
    %v445 = vpop.f32.mrb[0].mxu0
    %v446 = vadd.f32 0.0, %v445
    %v447 = vpop.f32.mrb[0].mxu0
    %448 = vdwg.mxu0
    %v449 = vadd.f32 %v366, %v441
    %v450 = vadd.f32 %v367, %v446
    %v452 = vsel %vm284, %v216, 0
    %v455 = vsel %vm284, %v221, 0
    %457 = vmatprep.subr.mxu0 0.0
    %458 = vmatpush1.msra.mxu0 %v54
    %459 = vmatprep.subr.mxu0 0.0
    %460 = vmatpush1.msra.mxu0 %v55
    %461 = vmatprep.subr.mxu0 0.0
    %462 = vmatpush1.msra.mxu0 %v56
    %463 = vmatprep.subr.mxu0 0.0
    %464 = vmatpush1.msra.mxu0 %v57
    %465 = vmatprep.subr.mxu0 0.0
    %466 = vmatpush1.msra.mxu0 0.0
    %467 = vmatprep.subr.mxu0 0.0
    %468 = vmatpush1.msra.mxu0 0.0
    %469 = vmatprep.subr.mxu0 0.0
    %470 = vmatpush1.msra.mxu0 0.0
    %471 = vmatprep.subr.mxu0 0.0
    %472 = vmatpush1.msra.mxu0 0.0
    %473 = vmatprep.subr.mxu0 0.0
    %474 = vmatpush1.msra.mxu0 0.0
    %475 = vmatprep.subr.mxu0 0.0
    %476 = vmatpush1.msra.mxu0 0.0
    %477 = vmatprep.subr.mxu0 0.0
    %478 = vmatpush1.msra.mxu0 0.0
    %479 = vmatprep.subr.mxu0 0.0
    %480 = vmatpush1.msra.mxu0 0.0
    %481 = vmatprep.subr.mxu0 0.0
    %482 = vmatpush1.msra.mxu0 0.0
    %483 = vmatprep.subr.mxu0 0.0
    %484 = vmatpush1.msra.mxu0 0.0
    %485 = vmatprep.subr.mxu0 0.0
    %486 = vmatpush1.msra.mxu0 0.0
    %487 = vmatprep.subr.mxu0 0.0
    %488 = vmatpush1.msra.mxu0 0.0
    %489 = vmatprep.subr.mxu0 0.0
    %490 = vmatpush1.msra.mxu0 0.0
    %491 = vmatprep.subr.mxu0 0.0
    %492 = vmatpush1.msra.mxu0 0.0
    %493 = vmatprep.subr.mxu0 0.0
    %494 = vmatpush1.msra.mxu0 0.0
    %495 = vmatprep.subr.mxu0 0.0
    %496 = vmatpush1.msra.mxu0 0.0
    %497 = vmatprep.subr.mxu0 0.0
    %498 = vmatpush1.msra.mxu0 0.0
    %499 = vmatprep.subr.mxu0 0.0
    %500 = vmatpush1.msra.mxu0 0.0
    %501 = vmatprep.subr.mxu0 0.0
    %502 = vmatpush1.msra.mxu0 0.0
    %503 = vmatprep.subr.mxu0 0.0
    %504 = vmatpush1.msra.mxu0 0.0
    %505 = vmatprep.subr.mxu0 0.0
    %506 = vmatpush1.msra.mxu0 0.0
    %507 = vmatprep.subr.mxu0 0.0
    %508 = vmatpush1.msra.mxu0 0.0
    %509 = vmatprep.subr.mxu0 0.0
    %510 = vmatpush1.msra.mxu0 0.0
    %511 = vmatprep.subr.mxu0 0.0
    %512 = vmatpush1.msra.mxu0 0.0
    %513 = vmatprep.subr.mxu0 0.0
    %514 = vmatpush1.msra.mxu0 0.0
    %515 = vmatprep.subr.mxu0 0.0
    %516 = vmatpush1.msra.mxu0 0.0
    %517 = vmatprep.subr.mxu0 0.0
    %518 = vmatpush1.msra.mxu0 0.0
    %519 = vmatprep.subr.mxu0 0.0
    %520 = vmatpush1.msra.mxu0 0.0
    %521 = vmatprep.mubr.f32.mxu0 0.0
    %522 = vmatmul.mubr.f32.gmra.mrb[0].mxu0 %v452
    %v523 = vpop.f32.mrb[0].mxu0
    %v524 = vadd.f32 0.0, %v523
    %v525 = vpop.f32.mrb[0].mxu0
    %526 = vmatprep.mubr.f32.mxu0 0.0
    %527 = vmatmul.mubr.f32.gmra.mrb[0].mxu0 %v455
    %v528 = vpop.f32.mrb[0].mxu0
    %v529 = vadd.f32 0.0, %v528
    %v530 = vpop.f32.mrb[0].mxu0
    %531 = vdwg.mxu0
    %v532 = vadd.f32 %v449, %v524
    %v533 = vadd.f32 %v450, %v529
    %v535 = vsel %vm284, %v226, 0
    %v538 = vsel %vm284, %v231, 0
    %540 = vmatprep.subr.mxu0 0.0
    %541 = vmatpush1.msra.mxu0 %v58
    %542 = vmatprep.subr.mxu0 0.0
    %543 = vmatpush1.msra.mxu0 %v59
    %544 = vmatprep.subr.mxu0 0.0
    %545 = vmatpush1.msra.mxu0 %v60
    %546 = vmatprep.subr.mxu0 0.0
    %547 = vmatpush1.msra.mxu0 %v61
    %548 = vmatprep.subr.mxu0 0.0
    %549 = vmatpush1.msra.mxu0 0.0
    %550 = vmatprep.subr.mxu0 0.0
    %551 = vmatpush1.msra.mxu0 0.0
    %552 = vmatprep.subr.mxu0 0.0
    %553 = vmatpush1.msra.mxu0 0.0
    %554 = vmatprep.subr.mxu0 0.0
    %555 = vmatpush1.msra.mxu0 0.0
    %556 = vmatprep.subr.mxu0 0.0
    %557 = vmatpush1.msra.mxu0 0.0
    %558 = vmatprep.subr.mxu0 0.0
    %559 = vmatpush1.msra.mxu0 0.0
    %560 = vmatprep.subr.mxu0 0.0
    %561 = vmatpush1.msra.mxu0 0.0
    %562 = vmatprep.subr.mxu0 0.0
    %563 = vmatpush1.msra.mxu0 0.0
    %564 = vmatprep.subr.mxu0 0.0
    %565 = vmatpush1.msra.mxu0 0.0
    %566 = vmatprep.subr.mxu0 0.0
    %567 = vmatpush1.msra.mxu0 0.0
    %568 = vmatprep.subr.mxu0 0.0
    %569 = vmatpush1.msra.mxu0 0.0
    %570 = vmatprep.subr.mxu0 0.0
    %571 = vmatpush1.msra.mxu0 0.0
    %572 = vmatprep.subr.mxu0 0.0
    %573 = vmatpush1.msra.mxu0 0.0
    %574 = vmatprep.subr.mxu0 0.0
    %575 = vmatpush1.msra.mxu0 0.0
    %576 = vmatprep.subr.mxu0 0.0
    %577 = vmatpush1.msra.mxu0 0.0
    %578 = vmatprep.subr.mxu0 0.0
    %579 = vmatpush1.msra.mxu0 0.0
    %580 = vmatprep.subr.mxu0 0.0
    %581 = vmatpush1.msra.mxu0 0.0
    %582 = vmatprep.subr.mxu0 0.0
    %583 = vmatpush1.msra.mxu0 0.0
    %584 = vmatprep.subr.mxu0 0.0
    %585 = vmatpush1.msra.mxu0 0.0
    %586 = vmatprep.subr.mxu0 0.0
    %587 = vmatpush1.msra.mxu0 0.0
    %588 = vmatprep.subr.mxu0 0.0
    %589 = vmatpush1.msra.mxu0 0.0
    %590 = vmatprep.subr.mxu0 0.0
    %591 = vmatpush1.msra.mxu0 0.0
    %592 = vmatprep.subr.mxu0 0.0
    %593 = vmatpush1.msra.mxu0 0.0
    %594 = vmatprep.subr.mxu0 0.0
    %595 = vmatpush1.msra.mxu0 0.0
    %596 = vmatprep.subr.mxu0 0.0
    %597 = vmatpush1.msra.mxu0 0.0
    %598 = vmatprep.subr.mxu0 0.0
    %599 = vmatpush1.msra.mxu0 0.0
    %600 = vmatprep.subr.mxu0 0.0
    %601 = vmatpush1.msra.mxu0 0.0
    %602 = vmatprep.subr.mxu0 0.0
    %603 = vmatpush1.msra.mxu0 0.0
    %604 = vmatprep.mubr.f32.mxu0 0.0
    %605 = vmatmul.mubr.f32.gmra.mrb[0].mxu0 %v535
    %v606 = vpop.f32.mrb[0].mxu0
    %v607 = vadd.f32 0.0, %v606
    %v608 = vpop.f32.mrb[0].mxu0
    %609 = vmatprep.mubr.f32.mxu0 0.0
    %610 = vmatmul.mubr.f32.gmra.mrb[0].mxu0 %v538
    %v611 = vpop.f32.mrb[0].mxu0
    %v612 = vadd.f32 0.0, %v611
    %v613 = vpop.f32.mrb[0].mxu0
    %614 = vdwg.mxu0
    %v615 = vadd.f32 %v532, %v607
    %v616 = vadd.f32 %v533, %v612
    %v618 = vsel %vm284, %v236, 0
    %v621 = vsel %vm284, %v241, 0
    %623 = vmatprep.subr.mxu0 0.0
    %624 = vmatpush1.msra.mxu0 %v62
    %625 = vmatprep.subr.mxu0 0.0
    %626 = vmatpush1.msra.mxu0 %v63
    %627 = vmatprep.subr.mxu0 0.0
    %628 = vmatpush1.msra.mxu0 %v64
    %629 = vmatprep.subr.mxu0 0.0
    %630 = vmatpush1.msra.mxu0 %v65
    %631 = vmatprep.subr.mxu0 0.0
    %632 = vmatpush1.msra.mxu0 0.0
    %633 = vmatprep.subr.mxu0 0.0
    %634 = vmatpush1.msra.mxu0 0.0
    %635 = vmatprep.subr.mxu0 0.0
    %636 = vmatpush1.msra.mxu0 0.0
    %637 = vmatprep.subr.mxu0 0.0
    %638 = vmatpush1.msra.mxu0 0.0
    %639 = vmatprep.subr.mxu0 0.0
    %640 = vmatpush1.msra.mxu0 0.0
    %641 = vmatprep.subr.mxu0 0.0
    %642 = vmatpush1.msra.mxu0 0.0
    %643 = vmatprep.subr.mxu0 0.0
    %644 = vmatpush1.msra.mxu0 0.0
    %645 = vmatprep.subr.mxu0 0.0
    %646 = vmatpush1.msra.mxu0 0.0
    %647 = vmatprep.subr.mxu0 0.0
    %648 = vmatpush1.msra.mxu0 0.0
    %649 = vmatprep.subr.mxu0 0.0
    %650 = vmatpush1.msra.mxu0 0.0
    %651 = vmatprep.subr.mxu0 0.0
    %652 = vmatpush1.msra.mxu0 0.0
    %653 = vmatprep.subr.mxu0 0.0
    %654 = vmatpush1.msra.mxu0 0.0
    %655 = vmatprep.subr.mxu0 0.0
    %656 = vmatpush1.msra.mxu0 0.0
    %657 = vmatprep.subr.mxu0 0.0
    %658 = vmatpush1.msra.mxu0 0.0
    %659 = vmatprep.subr.mxu0 0.0
    %660 = vmatpush1.msra.mxu0 0.0
    %661 = vmatprep.subr.mxu0 0.0
    %662 = vmatpush1.msra.mxu0 0.0
    %663 = vmatprep.subr.mxu0 0.0
    %664 = vmatpush1.msra.mxu0 0.0
    %665 = vmatprep.subr.mxu0 0.0
    %666 = vmatpush1.msra.mxu0 0.0
    %667 = vmatprep.subr.mxu0 0.0
    %668 = vmatpush1.msra.mxu0 0.0
    %669 = vmatprep.subr.mxu0 0.0
    %670 = vmatpush1.msra.mxu0 0.0
    %671 = vmatprep.subr.mxu0 0.0
    %672 = vmatpush1.msra.mxu0 0.0
    %673 = vmatprep.subr.mxu0 0.0
    %674 = vmatpush1.msra.mxu0 0.0
    %675 = vmatprep.subr.mxu0 0.0
    %676 = vmatpush1.msra.mxu0 0.0
    %677 = vmatprep.subr.mxu0 0.0
    %678 = vmatpush1.msra.mxu0 0.0
    %679 = vmatprep.subr.mxu0 0.0
    %680 = vmatpush1.msra.mxu0 0.0
    %681 = vmatprep.subr.mxu0 0.0
    %682 = vmatpush1.msra.mxu0 0.0
    %683 = vmatprep.subr.mxu0 0.0
    %684 = vmatpush1.msra.mxu0 0.0
    %685 = vmatprep.subr.mxu0 0.0
    %686 = vmatpush1.msra.mxu0 0.0
    %687 = vmatprep.mubr.f32.mxu0 0.0
    %688 = vmatmul.mubr.f32.gmra.mrb[0].mxu0 %v618
    %v689 = vpop.f32.mrb[0].mxu0
    %v690 = vadd.f32 0.0, %v689
    %v691 = vpop.f32.mrb[0].mxu0
    %692 = vmatprep.mubr.f32.mxu0 0.0
    %693 = vmatmul.mubr.f32.gmra.mrb[0].mxu0 %v621
    %v694 = vpop.f32.mrb[0].mxu0
    %v695 = vadd.f32 0.0, %v694
    %v696 = vpop.f32.mrb[0].mxu0
    %697 = vdwg.mxu0
    %v698 = vadd.f32 %v615, %v690
    %v699 = vadd.f32 %v616, %v695
    %v701 = vsel %vm284, %v246, 0
    %v704 = vsel %vm284, %v251, 0
    %706 = vmatprep.subr.mxu0 0.0
    %707 = vmatpush1.msra.mxu0 %v66
    %708 = vmatprep.subr.mxu0 0.0
    %709 = vmatpush1.msra.mxu0 %v67
    %710 = vmatprep.subr.mxu0 0.0
    %711 = vmatpush1.msra.mxu0 %v68
    %712 = vmatprep.subr.mxu0 0.0
    %713 = vmatpush1.msra.mxu0 %v69
    %714 = vmatprep.subr.mxu0 0.0
    %715 = vmatpush1.msra.mxu0 0.0
    %716 = vmatprep.subr.mxu0 0.0
    %717 = vmatpush1.msra.mxu0 0.0
    %718 = vmatprep.subr.mxu0 0.0
    %719 = vmatpush1.msra.mxu0 0.0
    %720 = vmatprep.subr.mxu0 0.0
    %721 = vmatpush1.msra.mxu0 0.0
    %722 = vmatprep.subr.mxu0 0.0
    %723 = vmatpush1.msra.mxu0 0.0
    %724 = vmatprep.subr.mxu0 0.0
    %725 = vmatpush1.msra.mxu0 0.0
    %726 = vmatprep.subr.mxu0 0.0
    %727 = vmatpush1.msra.mxu0 0.0
    %728 = vmatprep.subr.mxu0 0.0
    %729 = vmatpush1.msra.mxu0 0.0
    %730 = vmatprep.subr.mxu0 0.0
    %731 = vmatpush1.msra.mxu0 0.0
    %732 = vmatprep.subr.mxu0 0.0
    %733 = vmatpush1.msra.mxu0 0.0
    %734 = vmatprep.subr.mxu0 0.0
    %735 = vmatpush1.msra.mxu0 0.0
    %736 = vmatprep.subr.mxu0 0.0
    %737 = vmatpush1.msra.mxu0 0.0
    %738 = vmatprep.subr.mxu0 0.0
    %739 = vmatpush1.msra.mxu0 0.0
    %740 = vmatprep.subr.mxu0 0.0
    %741 = vmatpush1.msra.mxu0 0.0
    %742 = vmatprep.subr.mxu0 0.0
    %743 = vmatpush1.msra.mxu0 0.0
    %744 = vmatprep.subr.mxu0 0.0
    %745 = vmatpush1.msra.mxu0 0.0
    %746 = vmatprep.subr.mxu0 0.0
    %747 = vmatpush1.msra.mxu0 0.0
    %748 = vmatprep.subr.mxu0 0.0
    %749 = vmatpush1.msra.mxu0 0.0
    %750 = vmatprep.subr.mxu0 0.0
    %751 = vmatpush1.msra.mxu0 0.0
    %752 = vmatprep.subr.mxu0 0.0
    %753 = vmatpush1.msra.mxu0 0.0
    %754 = vmatprep.subr.mxu0 0.0
    %755 = vmatpush1.msra.mxu0 0.0
    %756 = vmatprep.subr.mxu0 0.0
    %757 = vmatpush1.msra.mxu0 0.0
    %758 = vmatprep.subr.mxu0 0.0
    %759 = vmatpush1.msra.mxu0 0.0
    %760 = vmatprep.subr.mxu0 0.0
    %761 = vmatpush1.msra.mxu0 0.0
    %762 = vmatprep.subr.mxu0 0.0
    %763 = vmatpush1.msra.mxu0 0.0
    %764 = vmatprep.subr.mxu0 0.0
    %765 = vmatpush1.msra.mxu0 0.0
    %766 = vmatprep.subr.mxu0 0.0
    %767 = vmatpush1.msra.mxu0 0.0
    %768 = vmatprep.subr.mxu0 0.0
    %769 = vmatpush1.msra.mxu0 0.0
    %770 = vmatprep.mubr.f32.mxu0 0.0
    %771 = vmatmul.mubr.f32.gmra.mrb[0].mxu0 %v701
    %v772 = vpop.f32.mrb[0].mxu0
    %v773 = vadd.f32 0.0, %v772
    %v774 = vpop.f32.mrb[0].mxu0
    %775 = vmatprep.mubr.f32.mxu0 0.0
    %776 = vmatmul.mubr.f32.gmra.mrb[0].mxu0 %v704
    %v777 = vpop.f32.mrb[0].mxu0
    %v778 = vadd.f32 0.0, %v777
    %v779 = vpop.f32.mrb[0].mxu0
    %780 = vdwg.mxu0
    %v781 = vadd.f32 %v698, %v773
    %v782 = vadd.f32 %v699, %v778
    %v784 = vsel %vm284, %v256, 0
    %v787 = vsel %vm284, %v261, 0
    %789 = vmatprep.subr.mxu0 0.0
    %790 = vmatpush1.msra.mxu0 %v70
    %791 = vmatprep.subr.mxu0 0.0
    %792 = vmatpush1.msra.mxu0 %v71
    %793 = vmatprep.subr.mxu0 0.0
    %794 = vmatpush1.msra.mxu0 %v72
    %795 = vmatprep.subr.mxu0 0.0
    %796 = vmatpush1.msra.mxu0 %v73
    %797 = vmatprep.subr.mxu0 0.0
    %798 = vmatpush1.msra.mxu0 0.0
    %799 = vmatprep.subr.mxu0 0.0
    %800 = vmatpush1.msra.mxu0 0.0
    %801 = vmatprep.subr.mxu0 0.0
    %802 = vmatpush1.msra.mxu0 0.0
    %803 = vmatprep.subr.mxu0 0.0
    %804 = vmatpush1.msra.mxu0 0.0
    %805 = vmatprep.subr.mxu0 0.0
    %806 = vmatpush1.msra.mxu0 0.0
    %807 = vmatprep.subr.mxu0 0.0
    %808 = vmatpush1.msra.mxu0 0.0
    %809 = vmatprep.subr.mxu0 0.0
    %810 = vmatpush1.msra.mxu0 0.0
    %811 = vmatprep.subr.mxu0 0.0
    %812 = vmatpush1.msra.mxu0 0.0
    %813 = vmatprep.subr.mxu0 0.0
    %814 = vmatpush1.msra.mxu0 0.0
    %815 = vmatprep.subr.mxu0 0.0
    %816 = vmatpush1.msra.mxu0 0.0
    %817 = vmatprep.subr.mxu0 0.0
    %818 = vmatpush1.msra.mxu0 0.0
    %819 = vmatprep.subr.mxu0 0.0
    %820 = vmatpush1.msra.mxu0 0.0
    %821 = vmatprep.subr.mxu0 0.0
    %822 = vmatpush1.msra.mxu0 0.0
    %823 = vmatprep.subr.mxu0 0.0
    %824 = vmatpush1.msra.mxu0 0.0
    %825 = vmatprep.subr.mxu0 0.0
    %826 = vmatpush1.msra.mxu0 0.0
    %827 = vmatprep.subr.mxu0 0.0
    %828 = vmatpush1.msra.mxu0 0.0
    %829 = vmatprep.subr.mxu0 0.0
    %830 = vmatpush1.msra.mxu0 0.0
    %831 = vmatprep.subr.mxu0 0.0
    %832 = vmatpush1.msra.mxu0 0.0
    %833 = vmatprep.subr.mxu0 0.0
    %834 = vmatpush1.msra.mxu0 0.0
    %835 = vmatprep.subr.mxu0 0.0
    %836 = vmatpush1.msra.mxu0 0.0
    %837 = vmatprep.subr.mxu0 0.0
    %838 = vmatpush1.msra.mxu0 0.0
    %839 = vmatprep.subr.mxu0 0.0
    %840 = vmatpush1.msra.mxu0 0.0
    %841 = vmatprep.subr.mxu0 0.0
    %842 = vmatpush1.msra.mxu0 0.0
    %843 = vmatprep.subr.mxu0 0.0
    %844 = vmatpush1.msra.mxu0 0.0
    %845 = vmatprep.subr.mxu0 0.0
    %846 = vmatpush1.msra.mxu0 0.0
    %847 = vmatprep.subr.mxu0 0.0
    %848 = vmatpush1.msra.mxu0 0.0
    %849 = vmatprep.subr.mxu0 0.0
    %850 = vmatpush1.msra.mxu0 0.0
    %851 = vmatprep.subr.mxu0 0.0
    %852 = vmatpush1.msra.mxu0 0.0
    %853 = vmatprep.mubr.f32.mxu0 0.0
    %854 = vmatmul.mubr.f32.gmra.mrb[0].mxu0 %v784
    %v855 = vpop.f32.mrb[0].mxu0
    %v856 = vadd.f32 0.0, %v855
    %v857 = vpop.f32.mrb[0].mxu0
    %858 = vmatprep.mubr.f32.mxu0 0.0
    %859 = vmatmul.mubr.f32.gmra.mrb[0].mxu0 %v787
    %v860 = vpop.f32.mrb[0].mxu0
    %v861 = vadd.f32 0.0, %v860
    %v862 = vpop.f32.mrb[0].mxu0
    %863 = vdwg.mxu0
    %v864 = vadd.f32 %v781, %v856
    %v865 = vadd.f32 %v782, %v861
    %v867 = vsel %vm284, %v266, 0
    %v870 = vsel %vm284, %v271, 0
    %872 = vmatprep.subr.mxu0 0.0
    %873 = vmatpush1.msra.mxu0 %v74
    %874 = vmatprep.subr.mxu0 0.0
    %875 = vmatpush1.msra.mxu0 %v75
    %876 = vmatprep.subr.mxu0 0.0
    %877 = vmatpush1.msra.mxu0 %v76
    %878 = vmatprep.subr.mxu0 0.0
    %879 = vmatpush1.msra.mxu0 %v77
    %880 = vmatprep.subr.mxu0 0.0
    %881 = vmatpush1.msra.mxu0 0.0
    %882 = vmatprep.subr.mxu0 0.0
    %883 = vmatpush1.msra.mxu0 0.0
    %884 = vmatprep.subr.mxu0 0.0
    %885 = vmatpush1.msra.mxu0 0.0
    %886 = vmatprep.subr.mxu0 0.0
    %887 = vmatpush1.msra.mxu0 0.0
    %888 = vmatprep.subr.mxu0 0.0
    %889 = vmatpush1.msra.mxu0 0.0
    %890 = vmatprep.subr.mxu0 0.0
    %891 = vmatpush1.msra.mxu0 0.0
    %892 = vmatprep.subr.mxu0 0.0
    %893 = vmatpush1.msra.mxu0 0.0
    %894 = vmatprep.subr.mxu0 0.0
    %895 = vmatpush1.msra.mxu0 0.0
    %896 = vmatprep.subr.mxu0 0.0
    %897 = vmatpush1.msra.mxu0 0.0
    %898 = vmatprep.subr.mxu0 0.0
    %899 = vmatpush1.msra.mxu0 0.0
    %900 = vmatprep.subr.mxu0 0.0
    %901 = vmatpush1.msra.mxu0 0.0
    %902 = vmatprep.subr.mxu0 0.0
    %903 = vmatpush1.msra.mxu0 0.0
    %904 = vmatprep.subr.mxu0 0.0
    %905 = vmatpush1.msra.mxu0 0.0
    %906 = vmatprep.subr.mxu0 0.0
    %907 = vmatpush1.msra.mxu0 0.0
    %908 = vmatprep.subr.mxu0 0.0
    %909 = vmatpush1.msra.mxu0 0.0
    %910 = vmatprep.subr.mxu0 0.0
    %911 = vmatpush1.msra.mxu0 0.0
    %912 = vmatprep.subr.mxu0 0.0
    %913 = vmatpush1.msra.mxu0 0.0
    %914 = vmatprep.subr.mxu0 0.0
    %915 = vmatpush1.msra.mxu0 0.0
    %916 = vmatprep.subr.mxu0 0.0
    %917 = vmatpush1.msra.mxu0 0.0
    %918 = vmatprep.subr.mxu0 0.0
    %919 = vmatpush1.msra.mxu0 0.0
    %920 = vmatprep.subr.mxu0 0.0
    %921 = vmatpush1.msra.mxu0 0.0
    %922 = vmatprep.subr.mxu0 0.0
    %923 = vmatpush1.msra.mxu0 0.0
    %924 = vmatprep.subr.mxu0 0.0
    %925 = vmatpush1.msra.mxu0 0.0
    %926 = vmatprep.subr.mxu0 0.0
    %927 = vmatpush1.msra.mxu0 0.0
    %928 = vmatprep.subr.mxu0 0.0
    %929 = vmatpush1.msra.mxu0 0.0
    %930 = vmatprep.subr.mxu0 0.0
    %931 = vmatpush1.msra.mxu0 0.0
    %932 = vmatprep.subr.mxu0 0.0
    %933 = vmatpush1.msra.mxu0 0.0
    %934 = vmatprep.subr.mxu0 0.0
    %935 = vmatpush1.msra.mxu0 0.0
    %936 = vmatprep.mubr.f32.mxu0 0.0
    %937 = vmatmul.mubr.f32.gmra.mrb[0].mxu0 %v867
    %v938 = vpop.f32.mrb[0].mxu0
    %v939 = vadd.f32 0.0, %v938
    %v940 = vpop.f32.mrb[0].mxu0
    %941 = vmatprep.mubr.f32.mxu0 0.0
    %942 = vmatmul.mubr.f32.gmra.mrb[0].mxu0 %v870
    %v943 = vpop.f32.mrb[0].mxu0
    %v944 = vadd.f32 0.0, %v943
    %v945 = vpop.f32.mrb[0].mxu0
    %946 = vdwg.mxu0
    %v947 = vadd.f32 %v864, %v939
    %v948 = vadd.f32 %v865, %v944
    %v950 = vsel %vm284, %v276, 0
    %v953 = vsel %vm284, %v281, 0
    %955 = vmatprep.subr.mxu0 0.0
    %956 = vmatpush1.msra.mxu0 %v78
    %957 = vmatprep.subr.mxu0 0.0
    %958 = vmatpush1.msra.mxu0 %v79
    %959 = vmatprep.subr.mxu0 0.0
    %960 = vmatpush1.msra.mxu0 %v80
    %961 = vmatprep.subr.mxu0 0.0
    %962 = vmatpush1.msra.mxu0 %v81
    %963 = vmatprep.subr.mxu0 0.0
    %964 = vmatpush1.msra.mxu0 0.0
    %965 = vmatprep.subr.mxu0 0.0
    %966 = vmatpush1.msra.mxu0 0.0
    %967 = vmatprep.subr.mxu0 0.0
    %968 = vmatpush1.msra.mxu0 0.0
    %969 = vmatprep.subr.mxu0 0.0
    %970 = vmatpush1.msra.mxu0 0.0
    %971 = vmatprep.subr.mxu0 0.0
    %972 = vmatpush1.msra.mxu0 0.0
    %973 = vmatprep.subr.mxu0 0.0
    %974 = vmatpush1.msra.mxu0 0.0
    %975 = vmatprep.subr.mxu0 0.0
    %976 = vmatpush1.msra.mxu0 0.0
    %977 = vmatprep.subr.mxu0 0.0
    %978 = vmatpush1.msra.mxu0 0.0
    %979 = vmatprep.subr.mxu0 0.0
    %980 = vmatpush1.msra.mxu0 0.0
    %981 = vmatprep.subr.mxu0 0.0
    %982 = vmatpush1.msra.mxu0 0.0
    %983 = vmatprep.subr.mxu0 0.0
    %984 = vmatpush1.msra.mxu0 0.0
    %985 = vmatprep.subr.mxu0 0.0
    %986 = vmatpush1.msra.mxu0 0.0
    %987 = vmatprep.subr.mxu0 0.0
    %988 = vmatpush1.msra.mxu0 0.0
    %989 = vmatprep.subr.mxu0 0.0
    %990 = vmatpush1.msra.mxu0 0.0
    %991 = vmatprep.subr.mxu0 0.0
    %992 = vmatpush1.msra.mxu0 0.0
    %993 = vmatprep.subr.mxu0 0.0
    %994 = vmatpush1.msra.mxu0 0.0
    %995 = vmatprep.subr.mxu0 0.0
    %996 = vmatpush1.msra.mxu0 0.0
    %997 = vmatprep.subr.mxu0 0.0
    %998 = vmatpush1.msra.mxu0 0.0
    %999 = vmatprep.subr.mxu0 0.0
    %1000 = vmatpush1.msra.mxu0 0.0
    %1001 = vmatprep.subr.mxu0 0.0
    %1002 = vmatpush1.msra.mxu0 0.0
    %1003 = vmatprep.subr.mxu0 0.0
    %1004 = vmatpush1.msra.mxu0 0.0
    %1005 = vmatprep.subr.mxu0 0.0
    %1006 = vmatpush1.msra.mxu0 0.0
    %1007 = vmatprep.subr.mxu0 0.0
    %1008 = vmatpush1.msra.mxu0 0.0
    %1009 = vmatprep.subr.mxu0 0.0
    %1010 = vmatpush1.msra.mxu0 0.0
    %1011 = vmatprep.subr.mxu0 0.0
    %1012 = vmatpush1.msra.mxu0 0.0
    %1013 = vmatprep.subr.mxu0 0.0
    %1014 = vmatpush1.msra.mxu0 0.0
    %1015 = vmatprep.subr.mxu0 0.0
    %1016 = vmatpush1.msra.mxu0 0.0
    %1017 = vmatprep.subr.mxu0 0.0
    %1018 = vmatpush1.msra.mxu0 0.0
    %1019 = vmatprep.mubr.f32.mxu0 0.0
    %1020 = vmatmul.mubr.f32.gmra.mrb[0].mxu0 %v950
    %v1021 = vpop.f32.mrb[0].mxu0
    %v1022 = vadd.f32 0.0, %v1021
    %v1023 = vpop.f32.mrb[0].mxu0
    %1024 = vmatprep.mubr.f32.mxu0 0.0
    %1025 = vmatmul.mubr.f32.gmra.mrb[0].mxu0 %v953
    %v1026 = vpop.f32.mrb[0].mxu0
    %v1027 = vadd.f32 0.0, %v1026
    %v1028 = vpop.f32.mrb[0].mxu0
    %1029 = vdwg.mxu0
    %v1030 = vadd.f32 %v947, %v1022
    %v1031 = vadd.f32 %v948, %v1027
    %v1032 = vxor.u32 %v1030, 2147483648
    %v1033 = vxor.u32 %v1031, 2147483648
    %v1034 = vmul.f32 %v1032, 1.442695
    %v1035 = vpow.pop %v1034
    %v1036 = vmul.f32 %v1033, 1.442695
    %v1037 = vpow.pop %v1036
    %v1038 = vadd.f32 %v1035, 1.0
    %v1039 = vadd.f32 %v1037, 1.0
    %v1040 = vrcp.pop %v1038
    %v1041 = vmul.f32 1.0, %v1040
    %v1042 = vrcp.pop %v1039
    %v1043 = vmul.f32 1.0, %v1042
    %v1044 = vmul.f32 %v1041, %v30
    %v1045 = vmul.f32 %v1043, %v31
    %v1047 = vsel %vm284, %v1044, 0
    %v1050 = vsel %vm284, %v1045, 0
    %1052 = vmatprep.subr.mxu0 0.0
    %1053 = vmatpush1.msra.mxu0 %v86
    %1054 = vmatprep.subr.mxu0 0.0
    %1055 = vmatpush1.msra.mxu0 %v87
    %1056 = vmatprep.subr.mxu0 0.0
    %1057 = vmatpush1.msra.mxu0 %v88
    %1058 = vmatprep.subr.mxu0 0.0
    %1059 = vmatpush1.msra.mxu0 %v89
    %1060 = vmatprep.subr.mxu0 0.0
    %1061 = vmatpush1.msra.mxu0 0.0
    %1062 = vmatprep.subr.mxu0 0.0
    %1063 = vmatpush1.msra.mxu0 0.0
    %1064 = vmatprep.subr.mxu0 0.0
    %1065 = vmatpush1.msra.mxu0 0.0
    %1066 = vmatprep.subr.mxu0 0.0
    %1067 = vmatpush1.msra.mxu0 0.0
    %1068 = vmatprep.subr.mxu0 0.0
    %1069 = vmatpush1.msra.mxu0 0.0
    %1070 = vmatprep.subr.mxu0 0.0
    %1071 = vmatpush1.msra.mxu0 0.0
    %1072 = vmatprep.subr.mxu0 0.0
    %1073 = vmatpush1.msra.mxu0 0.0
    %1074 = vmatprep.subr.mxu0 0.0
    %1075 = vmatpush1.msra.mxu0 0.0
    %1076 = vmatprep.subr.mxu0 0.0
    %1077 = vmatpush1.msra.mxu0 0.0
    %1078 = vmatprep.subr.mxu0 0.0
    %1079 = vmatpush1.msra.mxu0 0.0
    %1080 = vmatprep.subr.mxu0 0.0
    %1081 = vmatpush1.msra.mxu0 0.0
    %1082 = vmatprep.subr.mxu0 0.0
    %1083 = vmatpush1.msra.mxu0 0.0
    %1084 = vmatprep.subr.mxu0 0.0
    %1085 = vmatpush1.msra.mxu0 0.0
    %1086 = vmatprep.subr.mxu0 0.0
    %1087 = vmatpush1.msra.mxu0 0.0
    %1088 = vmatprep.subr.mxu0 0.0
    %1089 = vmatpush1.msra.mxu0 0.0
    %1090 = vmatprep.subr.mxu0 0.0
    %1091 = vmatpush1.msra.mxu0 0.0
    %1092 = vmatprep.subr.mxu0 0.0
    %1093 = vmatpush1.msra.mxu0 0.0
    %1094 = vmatprep.subr.mxu0 0.0
    %1095 = vmatpush1.msra.mxu0 0.0
    %1096 = vmatprep.subr.mxu0 0.0
    %1097 = vmatpush1.msra.mxu0 0.0
    %1098 = vmatprep.subr.mxu0 0.0
    %1099 = vmatpush1.msra.mxu0 0.0
    %1100 = vmatprep.subr.mxu0 0.0
    %1101 = vmatpush1.msra.mxu0 0.0
    %1102 = vmatprep.subr.mxu0 0.0
    %1103 = vmatpush1.msra.mxu0 0.0
    %1104 = vmatprep.subr.mxu0 0.0
    %1105 = vmatpush1.msra.mxu0 0.0
    %1106 = vmatprep.subr.mxu0 0.0
    %1107 = vmatpush1.msra.mxu0 0.0
    %1108 = vmatprep.subr.mxu0 0.0
    %1109 = vmatpush1.msra.mxu0 0.0
    %1110 = vmatprep.subr.mxu0 0.0
    %1111 = vmatpush1.msra.mxu0 0.0
    %1112 = vmatprep.subr.mxu0 0.0
    %1113 = vmatpush1.msra.mxu0 0.0
    %1114 = vmatprep.subr.mxu0 0.0
    %1115 = vmatpush1.msra.mxu0 0.0
    %1116 = vmatprep.mubr.f32.mxu0 0.0
    %1117 = vmatmul.mubr.f32.gmra.mrb[0].mxu0 %v1047
    %v1118 = vpop.f32.mrb[0].mxu0
    %v1119 = vadd.f32 0.0, %v1118
    %v1120 = vpop.f32.mrb[0].mxu0
    %1121 = vmatprep.mubr.f32.mxu0 0.0
    %1122 = vmatmul.mubr.f32.gmra.mrb[0].mxu0 %v1050
    %v1123 = vpop.f32.mrb[0].mxu0
    %v1124 = vadd.f32 0.0, %v1123
    %v1125 = vpop.f32.mrb[0].mxu0
    %1126 = vdwg.mxu0
    %1129 = vrot.lane.b32.xlu0 %v1119, 64
    %v1130 = vpop.permute.xlu0 %1129
    %1131 = vrot.lane.b32.xlu0 %v1124, 64
    %v1132 = vpop.permute.xlu0 %1131
    %v1135 = vadd.f32 %v1030, %v1130
    %v1136 = vadd.f32 %v1031, %v1132
    %v1137 = vtanh.pop %v1135
    %v1138 = vtanh.pop %v1136
    %v1139 = vsub.f32 1.0, %v1041
    %v1140 = vsub.f32 1.0, %v1043
    %1141 = vrot.lane.b32.xlu0 %v30, 32
    %v1142 = vpop.permute.xlu0 %1141
    %1143 = vrot.lane.b32.xlu0 %v31, 32
    %v1144 = vpop.permute.xlu0 %1143
    %v1147 = vmul.f32 %v1139, %v1142
    %v1148 = vmul.f32 %v1140, %v1144
    %1151 = vrot.lane.b32.xlu0 %v1137, 96
    %v1152 = vpop.permute.xlu0 %1151
    %1153 = vrot.lane.b32.xlu0 %v1138, 96
    %v1154 = vpop.permute.xlu0 %1153
    %v1157 = vmul.f32 %v1041, %v1152
    %v1158 = vmul.f32 %v1043, %v1154
    %v1159 = vadd.f32 %v1147, %v1157
    %v1160 = vadd.f32 %v1148, %v1158
    %1163 = vrot.lane.b32.xlu0 %v1159, 96
    %v1164 = vpop.permute.xlu0 %1163
    %1165 = vrot.lane.b32.xlu0 %v1160, 96
    %v1166 = vpop.permute.xlu0 %1165
    %1169 = vmatprep.subr.mxu0 0.0
    %1170 = vmatpush1.msra.mxu0 %v1164
    %1171 = vmatprep.subr.mxu0 0.0
    %1172 = vmatpush1.msra.mxu0 %v1166
    %1173 = vmatprep.subr.mxu0 0.0
    %1174 = vmatpush1.msra.mxu0 0.0
    %1175 = vmatprep.subr.mxu0 0.0
    %1176 = vmatpush1.msra.mxu0 0.0
    %1177 = vmatprep.subr.mxu0 0.0
    %1178 = vmatpush1.msra.mxu0 0.0
    %1179 = vmatprep.subr.mxu0 0.0
    %1180 = vmatpush1.msra.mxu0 0.0
    %1181 = vmatprep.subr.mxu0 0.0
    %1182 = vmatpush1.msra.mxu0 0.0
    %1183 = vmatprep.subr.mxu0 0.0
    %1184 = vmatpush1.msra.mxu0 0.0
    %1185 = vmatprep.subr.mxu0 0.0
    %1186 = vmatpush1.msra.mxu0 0.0
    %1187 = vmatprep.subr.mxu0 0.0
    %1188 = vmatpush1.msra.mxu0 0.0
    %1189 = vmatprep.subr.mxu0 0.0
    %1190 = vmatpush1.msra.mxu0 0.0
    %1191 = vmatprep.subr.mxu0 0.0
    %1192 = vmatpush1.msra.mxu0 0.0
    %1193 = vmatprep.subr.mxu0 0.0
    %1194 = vmatpush1.msra.mxu0 0.0
    %1195 = vmatprep.subr.mxu0 0.0
    %1196 = vmatpush1.msra.mxu0 0.0
    %1197 = vmatprep.subr.mxu0 0.0
    %1198 = vmatpush1.msra.mxu0 0.0
    %1199 = vmatprep.subr.mxu0 0.0
    %1200 = vmatpush1.msra.mxu0 0.0
    %1201 = vmatprep.subr.mxu0 0.0
    %1202 = vmatpush1.msra.mxu0 0.0
    %1203 = vmatprep.subr.mxu0 0.0
    %1204 = vmatpush1.msra.mxu0 0.0
    %1205 = vmatprep.subr.mxu0 0.0
    %1206 = vmatpush1.msra.mxu0 0.0
    %1207 = vmatprep.subr.mxu0 0.0
    %1208 = vmatpush1.msra.mxu0 0.0
    %1209 = vmatprep.subr.mxu0 0.0
    %1210 = vmatpush1.msra.mxu0 0.0
    %1211 = vmatprep.subr.mxu0 0.0
    %1212 = vmatpush1.msra.mxu0 0.0
    %1213 = vmatprep.subr.mxu0 0.0
    %1214 = vmatpush1.msra.mxu0 0.0
    %1215 = vmatprep.subr.mxu0 0.0
    %1216 = vmatpush1.msra.mxu0 0.0
    %1217 = vmatprep.subr.mxu0 0.0
    %1218 = vmatpush1.msra.mxu0 0.0
    %1219 = vmatprep.subr.mxu0 0.0
    %1220 = vmatpush1.msra.mxu0 0.0
    %1221 = vmatprep.subr.mxu0 0.0
    %1222 = vmatpush1.msra.mxu0 0.0
    %1223 = vmatprep.subr.mxu0 0.0
    %1224 = vmatpush1.msra.mxu0 0.0
    %1225 = vmatprep.subr.mxu0 0.0
    %1226 = vmatpush1.msra.mxu0 0.0
    %1227 = vmatprep.subr.mxu0 0.0
    %1228 = vmatpush1.msra.mxu0 0.0
    %1229 = vmatprep.subr.mxu0 0.0
    %1230 = vmatpush1.msra.mxu0 0.0
    %1231 = vmatprep.subr.mxu0 0.0
    %1232 = vmatpush1.msra.mxu0 0.0
    %1233 = vmatprep.mubr.f32.mxu0 0.0
    %1234 = vmatmul.mubr.f32.gmra.mrb[0].mxu0 %v92
    %v1235 = vpop.f32.mrb[0].mxu0
    %v1236 = vadd.f32 0.0, %v1235
    %v1237 = vpop.f32.mrb[0].mxu0
    %1238 = vmatprep.mubr.f32.mxu0 0.0
    %1239 = vmatmul.mubr.f32.gmra.mrb[0].mxu0 %v95
    %v1240 = vpop.f32.mrb[0].mxu0
    %v1241 = vadd.f32 0.0, %v1240
    %v1242 = vpop.f32.mrb[0].mxu0
    %1243 = vmatprep.mubr.f32.mxu0 0.0
    %1244 = vmatmul.mubr.f32.gmra.mrb[0].mxu0 %v98
    %v1245 = vpop.f32.mrb[0].mxu0
    %v1246 = vadd.f32 0.0, %v1245
    %v1247 = vpop.f32.mrb[0].mxu0
    %1248 = vmatprep.mubr.f32.mxu0 0.0
    %1249 = vmatmul.mubr.f32.gmra.mrb[0].mxu0 %v101
    %v1250 = vpop.f32.mrb[0].mxu0
    %v1251 = vadd.f32 0.0, %v1250
    %v1252 = vpop.f32.mrb[0].mxu0
    %1253 = vmatprep.mubr.f32.mxu0 0.0
    %1254 = vmatmul.mubr.f32.gmra.mrb[0].mxu0 %v104
    %v1255 = vpop.f32.mrb[0].mxu0
    %v1256 = vadd.f32 0.0, %v1255
    %v1257 = vpop.f32.mrb[0].mxu0
    %1258 = vmatprep.mubr.f32.mxu0 0.0
    %1259 = vmatmul.mubr.f32.gmra.mrb[0].mxu0 %v107
    %v1260 = vpop.f32.mrb[0].mxu0
    %v1261 = vadd.f32 0.0, %v1260
    %v1262 = vpop.f32.mrb[0].mxu0
    %1263 = vmatprep.mubr.f32.mxu0 0.0
    %1264 = vmatmul.mubr.f32.gmra.mrb[0].mxu0 %v110
    %v1265 = vpop.f32.mrb[0].mxu0
    %v1266 = vadd.f32 0.0, %v1265
    %v1267 = vpop.f32.mrb[0].mxu0
    %1268 = vmatprep.mubr.f32.mxu0 0.0
    %1269 = vmatmul.mubr.f32.gmra.mrb[0].mxu0 %v113
    %v1270 = vpop.f32.mrb[0].mxu0
    %v1271 = vadd.f32 0.0, %v1270
    %v1272 = vpop.f32.mrb[0].mxu0
    %1273 = vmatprep.mubr.f32.mxu0 0.0
    %1274 = vmatmul.mubr.f32.gmra.mrb[0].mxu0 %v116
    %v1275 = vpop.f32.mrb[0].mxu0
    %v1276 = vadd.f32 0.0, %v1275
    %v1277 = vpop.f32.mrb[0].mxu0
    %1278 = vmatprep.mubr.f32.mxu0 0.0
    %1279 = vmatmul.mubr.f32.gmra.mrb[0].mxu0 %v119
    %v1280 = vpop.f32.mrb[0].mxu0
    %v1281 = vadd.f32 0.0, %v1280
    %v1282 = vpop.f32.mrb[0].mxu0
    %1283 = vmatprep.mubr.f32.mxu0 0.0
    %1284 = vmatmul.mubr.f32.gmra.mrb[0].mxu0 %v122
    %v1285 = vpop.f32.mrb[0].mxu0
    %v1286 = vadd.f32 0.0, %v1285
    %v1287 = vpop.f32.mrb[0].mxu0
    %1288 = vmatprep.mubr.f32.mxu0 0.0
    %1289 = vmatmul.mubr.f32.gmra.mrb[0].mxu0 %v125
    %v1290 = vpop.f32.mrb[0].mxu0
    %v1291 = vadd.f32 0.0, %v1290
    %v1292 = vpop.f32.mrb[0].mxu0
    %1293 = vmatprep.mubr.f32.mxu0 0.0
    %1294 = vmatmul.mubr.f32.gmra.mrb[0].mxu0 %v128
    %v1295 = vpop.f32.mrb[0].mxu0
    %v1296 = vadd.f32 0.0, %v1295
    %v1297 = vpop.f32.mrb[0].mxu0
    %1298 = vmatprep.mubr.f32.mxu0 0.0
    %1299 = vmatmul.mubr.f32.gmra.mrb[0].mxu0 %v131
    %v1300 = vpop.f32.mrb[0].mxu0
    %v1301 = vadd.f32 0.0, %v1300
    %v1302 = vpop.f32.mrb[0].mxu0
    %1303 = vmatprep.mubr.f32.mxu0 0.0
    %1304 = vmatmul.mubr.f32.gmra.mrb[0].mxu0 %v134
    %v1305 = vpop.f32.mrb[0].mxu0
    %v1306 = vadd.f32 0.0, %v1305
    %v1307 = vpop.f32.mrb[0].mxu0
    %1308 = vmatprep.mubr.f32.mxu0 0.0
    %1309 = vmatmul.mubr.f32.gmra.mrb[0].mxu0 %v137
    %v1310 = vpop.f32.mrb[0].mxu0
    %v1311 = vadd.f32 0.0, %v1310
    %v1312 = vpop.f32.mrb[0].mxu0
    %1313 = vdwg.mxu0
    %v1314 = vsel %vm284, %v1164, 0
    %v1316 = vsel %vm284, %v1166, 0
    %1318 = vmatprep.subr.mxu0 0.0
    %1319 = vmatpush1.msra.mxu0 %v82
    %1320 = vmatprep.subr.mxu0 0.0
    %1321 = vmatpush1.msra.mxu0 %v83
    %1322 = vmatprep.subr.mxu0 0.0
    %1323 = vmatpush1.msra.mxu0 %v84
    %1324 = vmatprep.subr.mxu0 0.0
    %1325 = vmatpush1.msra.mxu0 %v85
    %1326 = vmatprep.subr.mxu0 0.0
    %1327 = vmatpush1.msra.mxu0 0.0
    %1328 = vmatprep.subr.mxu0 0.0
    %1329 = vmatpush1.msra.mxu0 0.0
    %1330 = vmatprep.subr.mxu0 0.0
    %1331 = vmatpush1.msra.mxu0 0.0
    %1332 = vmatprep.subr.mxu0 0.0
    %1333 = vmatpush1.msra.mxu0 0.0
    %1334 = vmatprep.subr.mxu0 0.0
    %1335 = vmatpush1.msra.mxu0 0.0
    %1336 = vmatprep.subr.mxu0 0.0
    %1337 = vmatpush1.msra.mxu0 0.0
    %1338 = vmatprep.subr.mxu0 0.0
    %1339 = vmatpush1.msra.mxu0 0.0
    %1340 = vmatprep.subr.mxu0 0.0
    %1341 = vmatpush1.msra.mxu0 0.0
    %1342 = vmatprep.subr.mxu0 0.0
    %1343 = vmatpush1.msra.mxu0 0.0
    %1344 = vmatprep.subr.mxu0 0.0
    %1345 = vmatpush1.msra.mxu0 0.0
    %1346 = vmatprep.subr.mxu0 0.0
    %1347 = vmatpush1.msra.mxu0 0.0
    %1348 = vmatprep.subr.mxu0 0.0
    %1349 = vmatpush1.msra.mxu0 0.0
    %1350 = vmatprep.subr.mxu0 0.0
    %1351 = vmatpush1.msra.mxu0 0.0
    %1352 = vmatprep.subr.mxu0 0.0
    %1353 = vmatpush1.msra.mxu0 0.0
    %1354 = vmatprep.subr.mxu0 0.0
    %1355 = vmatpush1.msra.mxu0 0.0
    %1356 = vmatprep.subr.mxu0 0.0
    %1357 = vmatpush1.msra.mxu0 0.0
    %1358 = vmatprep.subr.mxu0 0.0
    %1359 = vmatpush1.msra.mxu0 0.0
    %1360 = vmatprep.subr.mxu0 0.0
    %1361 = vmatpush1.msra.mxu0 0.0
    %1362 = vmatprep.subr.mxu0 0.0
    %1363 = vmatpush1.msra.mxu0 0.0
    %1364 = vmatprep.subr.mxu0 0.0
    %1365 = vmatpush1.msra.mxu0 0.0
    %1366 = vmatprep.subr.mxu0 0.0
    %1367 = vmatpush1.msra.mxu0 0.0
    %1368 = vmatprep.subr.mxu0 0.0
    %1369 = vmatpush1.msra.mxu0 0.0
    %1370 = vmatprep.subr.mxu0 0.0
    %1371 = vmatpush1.msra.mxu0 0.0
    %1372 = vmatprep.subr.mxu0 0.0
    %1373 = vmatpush1.msra.mxu0 0.0
    %1374 = vmatprep.subr.mxu0 0.0
    %1375 = vmatpush1.msra.mxu0 0.0
    %1376 = vmatprep.subr.mxu0 0.0
    %1377 = vmatpush1.msra.mxu0 0.0
    %1378 = vmatprep.subr.mxu0 0.0
    %1379 = vmatpush1.msra.mxu0 0.0
    %1380 = vmatprep.subr.mxu0 0.0
    %1381 = vmatpush1.msra.mxu0 0.0
    %1382 = vmatprep.mubr.f32.mxu0 0.0
    %1383 = vmatmul.mubr.f32.gmra.mrb[0].mxu0 %v1314
    %v1384 = vpop.f32.mrb[0].mxu0
    %v1385 = vadd.f32 0.0, %v1384
    %v1386 = vpop.f32.mrb[0].mxu0
    %1387 = vmatprep.mubr.f32.mxu0 0.0
    %1388 = vmatmul.mubr.f32.gmra.mrb[0].mxu0 %v1316
    %v1389 = vpop.f32.mrb[0].mxu0
    %v1390 = vadd.f32 0.0, %v1389
    %v1391 = vpop.f32.mrb[0].mxu0
    %1392 = vdwg.mxu0
    %v1393 = vadd.f32 %v48, %v1385
    %v1394 = vadd.f32 %v49, %v1390
    %v1396 = vsel %vm284, %v1236, 0
    %v1399 = vsel %vm284, %v1241, 0
    %1401 = vmatprep.subr.mxu0 0.0
    %1402 = vmatpush1.msra.mxu0 %v50
    %1403 = vmatprep.subr.mxu0 0.0
    %1404 = vmatpush1.msra.mxu0 %v51
    %1405 = vmatprep.subr.mxu0 0.0
    %1406 = vmatpush1.msra.mxu0 %v52
    %1407 = vmatprep.subr.mxu0 0.0
    %1408 = vmatpush1.msra.mxu0 %v53
    %1409 = vmatprep.subr.mxu0 0.0
    %1410 = vmatpush1.msra.mxu0 0.0
    %1411 = vmatprep.subr.mxu0 0.0
    %1412 = vmatpush1.msra.mxu0 0.0
    %1413 = vmatprep.subr.mxu0 0.0
    %1414 = vmatpush1.msra.mxu0 0.0
    %1415 = vmatprep.subr.mxu0 0.0
    %1416 = vmatpush1.msra.mxu0 0.0
    %1417 = vmatprep.subr.mxu0 0.0
    %1418 = vmatpush1.msra.mxu0 0.0
    %1419 = vmatprep.subr.mxu0 0.0
    %1420 = vmatpush1.msra.mxu0 0.0
    %1421 = vmatprep.subr.mxu0 0.0
    %1422 = vmatpush1.msra.mxu0 0.0
    %1423 = vmatprep.subr.mxu0 0.0
    %1424 = vmatpush1.msra.mxu0 0.0
    %1425 = vmatprep.subr.mxu0 0.0
    %1426 = vmatpush1.msra.mxu0 0.0
    %1427 = vmatprep.subr.mxu0 0.0
    %1428 = vmatpush1.msra.mxu0 0.0
    %1429 = vmatprep.subr.mxu0 0.0
    %1430 = vmatpush1.msra.mxu0 0.0
    %1431 = vmatprep.subr.mxu0 0.0
    %1432 = vmatpush1.msra.mxu0 0.0
    %1433 = vmatprep.subr.mxu0 0.0
    %1434 = vmatpush1.msra.mxu0 0.0
    %1435 = vmatprep.subr.mxu0 0.0
    %1436 = vmatpush1.msra.mxu0 0.0
    %1437 = vmatprep.subr.mxu0 0.0
    %1438 = vmatpush1.msra.mxu0 0.0
    %1439 = vmatprep.subr.mxu0 0.0
    %1440 = vmatpush1.msra.mxu0 0.0
    %1441 = vmatprep.subr.mxu0 0.0
    %1442 = vmatpush1.msra.mxu0 0.0
    %1443 = vmatprep.subr.mxu0 0.0
    %1444 = vmatpush1.msra.mxu0 0.0
    %1445 = vmatprep.subr.mxu0 0.0
    %1446 = vmatpush1.msra.mxu0 0.0
    %1447 = vmatprep.subr.mxu0 0.0
    %1448 = vmatpush1.msra.mxu0 0.0
    %1449 = vmatprep.subr.mxu0 0.0
    %1450 = vmatpush1.msra.mxu0 0.0
    %1451 = vmatprep.subr.mxu0 0.0
    %1452 = vmatpush1.msra.mxu0 0.0
    %1453 = vmatprep.subr.mxu0 0.0
    %1454 = vmatpush1.msra.mxu0 0.0
    %1455 = vmatprep.subr.mxu0 0.0
    %1456 = vmatpush1.msra.mxu0 0.0
    %1457 = vmatprep.subr.mxu0 0.0
    %1458 = vmatpush1.msra.mxu0 0.0
    %1459 = vmatprep.subr.mxu0 0.0
    %1460 = vmatpush1.msra.mxu0 0.0
    %1461 = vmatprep.subr.mxu0 0.0
    %1462 = vmatpush1.msra.mxu0 0.0
    %1463 = vmatprep.subr.mxu0 0.0
    %1464 = vmatpush1.msra.mxu0 0.0
    %1465 = vmatprep.mubr.f32.mxu0 0.0
    %1466 = vmatmul.mubr.f32.gmra.mrb[0].mxu0 %v1396
    %v1467 = vpop.f32.mrb[0].mxu0
    %v1468 = vadd.f32 0.0, %v1467
    %v1469 = vpop.f32.mrb[0].mxu0
    %1470 = vmatprep.mubr.f32.mxu0 0.0
    %1471 = vmatmul.mubr.f32.gmra.mrb[0].mxu0 %v1399
    %v1472 = vpop.f32.mrb[0].mxu0
    %v1473 = vadd.f32 0.0, %v1472
    %v1474 = vpop.f32.mrb[0].mxu0
    %1475 = vdwg.mxu0
    %v1476 = vadd.f32 %v1393, %v1468
    %v1477 = vadd.f32 %v1394, %v1473
    %v1479 = vsel %vm284, %v1246, 0
    %v1482 = vsel %vm284, %v1251, 0
    %1484 = vmatprep.subr.mxu0 0.0
    %1485 = vmatpush1.msra.mxu0 %v54
    %1486 = vmatprep.subr.mxu0 0.0
    %1487 = vmatpush1.msra.mxu0 %v55
    %1488 = vmatprep.subr.mxu0 0.0
    %1489 = vmatpush1.msra.mxu0 %v56
    %1490 = vmatprep.subr.mxu0 0.0
    %1491 = vmatpush1.msra.mxu0 %v57
    %1492 = vmatprep.subr.mxu0 0.0
    %1493 = vmatpush1.msra.mxu0 0.0
    %1494 = vmatprep.subr.mxu0 0.0
    %1495 = vmatpush1.msra.mxu0 0.0
    %1496 = vmatprep.subr.mxu0 0.0
    %1497 = vmatpush1.msra.mxu0 0.0
    %1498 = vmatprep.subr.mxu0 0.0
    %1499 = vmatpush1.msra.mxu0 0.0
    %1500 = vmatprep.subr.mxu0 0.0
    %1501 = vmatpush1.msra.mxu0 0.0
    %1502 = vmatprep.subr.mxu0 0.0
    %1503 = vmatpush1.msra.mxu0 0.0
    %1504 = vmatprep.subr.mxu0 0.0
    %1505 = vmatpush1.msra.mxu0 0.0
    %1506 = vmatprep.subr.mxu0 0.0
    %1507 = vmatpush1.msra.mxu0 0.0
    %1508 = vmatprep.subr.mxu0 0.0
    %1509 = vmatpush1.msra.mxu0 0.0
    %1510 = vmatprep.subr.mxu0 0.0
    %1511 = vmatpush1.msra.mxu0 0.0
    %1512 = vmatprep.subr.mxu0 0.0
    %1513 = vmatpush1.msra.mxu0 0.0
    %1514 = vmatprep.subr.mxu0 0.0
    %1515 = vmatpush1.msra.mxu0 0.0
    %1516 = vmatprep.subr.mxu0 0.0
    %1517 = vmatpush1.msra.mxu0 0.0
    %1518 = vmatprep.subr.mxu0 0.0
    %1519 = vmatpush1.msra.mxu0 0.0
    %1520 = vmatprep.subr.mxu0 0.0
    %1521 = vmatpush1.msra.mxu0 0.0
    %1522 = vmatprep.subr.mxu0 0.0
    %1523 = vmatpush1.msra.mxu0 0.0
    %1524 = vmatprep.subr.mxu0 0.0
    %1525 = vmatpush1.msra.mxu0 0.0
    %1526 = vmatprep.subr.mxu0 0.0
    %1527 = vmatpush1.msra.mxu0 0.0
    %1528 = vmatprep.subr.mxu0 0.0
    %1529 = vmatpush1.msra.mxu0 0.0
    %1530 = vmatprep.subr.mxu0 0.0
    %1531 = vmatpush1.msra.mxu0 0.0
    %1532 = vmatprep.subr.mxu0 0.0
    %1533 = vmatpush1.msra.mxu0 0.0
    %1534 = vmatprep.subr.mxu0 0.0
    %1535 = vmatpush1.msra.mxu0 0.0
    %1536 = vmatprep.subr.mxu0 0.0
    %1537 = vmatpush1.msra.mxu0 0.0
    %1538 = vmatprep.subr.mxu0 0.0
    %1539 = vmatpush1.msra.mxu0 0.0
    %1540 = vmatprep.subr.mxu0 0.0
    %1541 = vmatpush1.msra.mxu0 0.0
    %1542 = vmatprep.subr.mxu0 0.0
    %1543 = vmatpush1.msra.mxu0 0.0
    %1544 = vmatprep.subr.mxu0 0.0
    %1545 = vmatpush1.msra.mxu0 0.0
    %1546 = vmatprep.subr.mxu0 0.0
    %1547 = vmatpush1.msra.mxu0 0.0
    %1548 = vmatprep.mubr.f32.mxu0 0.0
    %1549 = vmatmul.mubr.f32.gmra.mrb[0].mxu0 %v1479
    %v1550 = vpop.f32.mrb[0].mxu0
    %v1551 = vadd.f32 0.0, %v1550
    %v1552 = vpop.f32.mrb[0].mxu0
    %1553 = vmatprep.mubr.f32.mxu0 0.0
    %1554 = vmatmul.mubr.f32.gmra.mrb[0].mxu0 %v1482
    %v1555 = vpop.f32.mrb[0].mxu0
    %v1556 = vadd.f32 0.0, %v1555
    %v1557 = vpop.f32.mrb[0].mxu0
    %1558 = vdwg.mxu0
    %v1559 = vadd.f32 %v1476, %v1551
    %v1560 = vadd.f32 %v1477, %v1556
    %v1562 = vsel %vm284, %v1256, 0
    %v1565 = vsel %vm284, %v1261, 0
    %1567 = vmatprep.subr.mxu0 0.0
    %1568 = vmatpush1.msra.mxu0 %v58
    %1569 = vmatprep.subr.mxu0 0.0
    %1570 = vmatpush1.msra.mxu0 %v59
    %1571 = vmatprep.subr.mxu0 0.0
    %1572 = vmatpush1.msra.mxu0 %v60
    %1573 = vmatprep.subr.mxu0 0.0
    %1574 = vmatpush1.msra.mxu0 %v61
    %1575 = vmatprep.subr.mxu0 0.0
    %1576 = vmatpush1.msra.mxu0 0.0
    %1577 = vmatprep.subr.mxu0 0.0
    %1578 = vmatpush1.msra.mxu0 0.0
    %1579 = vmatprep.subr.mxu0 0.0
    %1580 = vmatpush1.msra.mxu0 0.0
    %1581 = vmatprep.subr.mxu0 0.0
    %1582 = vmatpush1.msra.mxu0 0.0
    %1583 = vmatprep.subr.mxu0 0.0
    %1584 = vmatpush1.msra.mxu0 0.0
    %1585 = vmatprep.subr.mxu0 0.0
    %1586 = vmatpush1.msra.mxu0 0.0
    %1587 = vmatprep.subr.mxu0 0.0
    %1588 = vmatpush1.msra.mxu0 0.0
    %1589 = vmatprep.subr.mxu0 0.0
    %1590 = vmatpush1.msra.mxu0 0.0
    %1591 = vmatprep.subr.mxu0 0.0
    %1592 = vmatpush1.msra.mxu0 0.0
    %1593 = vmatprep.subr.mxu0 0.0
    %1594 = vmatpush1.msra.mxu0 0.0
    %1595 = vmatprep.subr.mxu0 0.0
    %1596 = vmatpush1.msra.mxu0 0.0
    %1597 = vmatprep.subr.mxu0 0.0
    %1598 = vmatpush1.msra.mxu0 0.0
    %1599 = vmatprep.subr.mxu0 0.0
    %1600 = vmatpush1.msra.mxu0 0.0
    %1601 = vmatprep.subr.mxu0 0.0
    %1602 = vmatpush1.msra.mxu0 0.0
    %1603 = vmatprep.subr.mxu0 0.0
    %1604 = vmatpush1.msra.mxu0 0.0
    %1605 = vmatprep.subr.mxu0 0.0
    %1606 = vmatpush1.msra.mxu0 0.0
    %1607 = vmatprep.subr.mxu0 0.0
    %1608 = vmatpush1.msra.mxu0 0.0
    %1609 = vmatprep.subr.mxu0 0.0
    %1610 = vmatpush1.msra.mxu0 0.0
    %1611 = vmatprep.subr.mxu0 0.0
    %1612 = vmatpush1.msra.mxu0 0.0
    %1613 = vmatprep.subr.mxu0 0.0
    %1614 = vmatpush1.msra.mxu0 0.0
    %1615 = vmatprep.subr.mxu0 0.0
    %1616 = vmatpush1.msra.mxu0 0.0
    %1617 = vmatprep.subr.mxu0 0.0
    %1618 = vmatpush1.msra.mxu0 0.0
    %1619 = vmatprep.subr.mxu0 0.0
    %1620 = vmatpush1.msra.mxu0 0.0
    %1621 = vmatprep.subr.mxu0 0.0
    %1622 = vmatpush1.msra.mxu0 0.0
    %1623 = vmatprep.subr.mxu0 0.0
    %1624 = vmatpush1.msra.mxu0 0.0
    %1625 = vmatprep.subr.mxu0 0.0
    %1626 = vmatpush1.msra.mxu0 0.0
    %1627 = vmatprep.subr.mxu0 0.0
    %1628 = vmatpush1.msra.mxu0 0.0
    %1629 = vmatprep.subr.mxu0 0.0
    %1630 = vmatpush1.msra.mxu0 0.0
    %1631 = vmatprep.mubr.f32.mxu0 0.0
    %1632 = vmatmul.mubr.f32.gmra.mrb[0].mxu0 %v1562
    %v1633 = vpop.f32.mrb[0].mxu0
    %v1634 = vadd.f32 0.0, %v1633
    %v1635 = vpop.f32.mrb[0].mxu0
    %1636 = vmatprep.mubr.f32.mxu0 0.0
    %1637 = vmatmul.mubr.f32.gmra.mrb[0].mxu0 %v1565
    %v1638 = vpop.f32.mrb[0].mxu0
    %v1639 = vadd.f32 0.0, %v1638
    %v1640 = vpop.f32.mrb[0].mxu0
    %1641 = vdwg.mxu0
    %v1642 = vadd.f32 %v1559, %v1634
    %v1643 = vadd.f32 %v1560, %v1639
    %v1645 = vsel %vm284, %v1266, 0
    %v1648 = vsel %vm284, %v1271, 0
    %1650 = vmatprep.subr.mxu0 0.0
    %1651 = vmatpush1.msra.mxu0 %v62
    %1652 = vmatprep.subr.mxu0 0.0
    %1653 = vmatpush1.msra.mxu0 %v63
    %1654 = vmatprep.subr.mxu0 0.0
    %1655 = vmatpush1.msra.mxu0 %v64
    %1656 = vmatprep.subr.mxu0 0.0
    %1657 = vmatpush1.msra.mxu0 %v65
    %1658 = vmatprep.subr.mxu0 0.0
    %1659 = vmatpush1.msra.mxu0 0.0
    %1660 = vmatprep.subr.mxu0 0.0
    %1661 = vmatpush1.msra.mxu0 0.0
    %1662 = vmatprep.subr.mxu0 0.0
    %1663 = vmatpush1.msra.mxu0 0.0
    %1664 = vmatprep.subr.mxu0 0.0
    %1665 = vmatpush1.msra.mxu0 0.0
    %1666 = vmatprep.subr.mxu0 0.0
    %1667 = vmatpush1.msra.mxu0 0.0
    %1668 = vmatprep.subr.mxu0 0.0
    %1669 = vmatpush1.msra.mxu0 0.0
    %1670 = vmatprep.subr.mxu0 0.0
    %1671 = vmatpush1.msra.mxu0 0.0
    %1672 = vmatprep.subr.mxu0 0.0
    %1673 = vmatpush1.msra.mxu0 0.0
    %1674 = vmatprep.subr.mxu0 0.0
    %1675 = vmatpush1.msra.mxu0 0.0
    %1676 = vmatprep.subr.mxu0 0.0
    %1677 = vmatpush1.msra.mxu0 0.0
    %1678 = vmatprep.subr.mxu0 0.0
    %1679 = vmatpush1.msra.mxu0 0.0
    %1680 = vmatprep.subr.mxu0 0.0
    %1681 = vmatpush1.msra.mxu0 0.0
    %1682 = vmatprep.subr.mxu0 0.0
    %1683 = vmatpush1.msra.mxu0 0.0
    %1684 = vmatprep.subr.mxu0 0.0
    %1685 = vmatpush1.msra.mxu0 0.0
    %1686 = vmatprep.subr.mxu0 0.0
    %1687 = vmatpush1.msra.mxu0 0.0
    %1688 = vmatprep.subr.mxu0 0.0
    %1689 = vmatpush1.msra.mxu0 0.0
    %1690 = vmatprep.subr.mxu0 0.0
    %1691 = vmatpush1.msra.mxu0 0.0
    %1692 = vmatprep.subr.mxu0 0.0
    %1693 = vmatpush1.msra.mxu0 0.0
    %1694 = vmatprep.subr.mxu0 0.0
    %1695 = vmatpush1.msra.mxu0 0.0
    %1696 = vmatprep.subr.mxu0 0.0
    %1697 = vmatpush1.msra.mxu0 0.0
    %1698 = vmatprep.subr.mxu0 0.0
    %1699 = vmatpush1.msra.mxu0 0.0
    %1700 = vmatprep.subr.mxu0 0.0
    %1701 = vmatpush1.msra.mxu0 0.0
    %1702 = vmatprep.subr.mxu0 0.0
    %1703 = vmatpush1.msra.mxu0 0.0
    %1704 = vmatprep.subr.mxu0 0.0
    %1705 = vmatpush1.msra.mxu0 0.0
    %1706 = vmatprep.subr.mxu0 0.0
    %1707 = vmatpush1.msra.mxu0 0.0
    %1708 = vmatprep.subr.mxu0 0.0
    %1709 = vmatpush1.msra.mxu0 0.0
    %1710 = vmatprep.subr.mxu0 0.0
    %1711 = vmatpush1.msra.mxu0 0.0
    %1712 = vmatprep.subr.mxu0 0.0
    %1713 = vmatpush1.msra.mxu0 0.0
    %1714 = vmatprep.mubr.f32.mxu0 0.0
    %1715 = vmatmul.mubr.f32.gmra.mrb[0].mxu0 %v1645
    %v1716 = vpop.f32.mrb[0].mxu0
    %v1717 = vadd.f32 0.0, %v1716
    %v1718 = vpop.f32.mrb[0].mxu0
    %1719 = vmatprep.mubr.f32.mxu0 0.0
    %1720 = vmatmul.mubr.f32.gmra.mrb[0].mxu0 %v1648
    %v1721 = vpop.f32.mrb[0].mxu0
    %v1722 = vadd.f32 0.0, %v1721
    %v1723 = vpop.f32.mrb[0].mxu0
    %1724 = vdwg.mxu0
    %v1725 = vadd.f32 %v1642, %v1717
    %v1726 = vadd.f32 %v1643, %v1722
    %v1728 = vsel %vm284, %v1276, 0
    %v1731 = vsel %vm284, %v1281, 0
    %1733 = vmatprep.subr.mxu0 0.0
    %1734 = vmatpush1.msra.mxu0 %v66
    %1735 = vmatprep.subr.mxu0 0.0
    %1736 = vmatpush1.msra.mxu0 %v67
    %1737 = vmatprep.subr.mxu0 0.0
    %1738 = vmatpush1.msra.mxu0 %v68
    %1739 = vmatprep.subr.mxu0 0.0
    %1740 = vmatpush1.msra.mxu0 %v69
    %1741 = vmatprep.subr.mxu0 0.0
    %1742 = vmatpush1.msra.mxu0 0.0
    %1743 = vmatprep.subr.mxu0 0.0
    %1744 = vmatpush1.msra.mxu0 0.0
    %1745 = vmatprep.subr.mxu0 0.0
    %1746 = vmatpush1.msra.mxu0 0.0
    %1747 = vmatprep.subr.mxu0 0.0
    %1748 = vmatpush1.msra.mxu0 0.0
    %1749 = vmatprep.subr.mxu0 0.0
    %1750 = vmatpush1.msra.mxu0 0.0
    %1751 = vmatprep.subr.mxu0 0.0
    %1752 = vmatpush1.msra.mxu0 0.0
    %1753 = vmatprep.subr.mxu0 0.0
    %1754 = vmatpush1.msra.mxu0 0.0
    %1755 = vmatprep.subr.mxu0 0.0
    %1756 = vmatpush1.msra.mxu0 0.0
    %1757 = vmatprep.subr.mxu0 0.0
    %1758 = vmatpush1.msra.mxu0 0.0
    %1759 = vmatprep.subr.mxu0 0.0
    %1760 = vmatpush1.msra.mxu0 0.0
    %1761 = vmatprep.subr.mxu0 0.0
    %1762 = vmatpush1.msra.mxu0 0.0
    %1763 = vmatprep.subr.mxu0 0.0
    %1764 = vmatpush1.msra.mxu0 0.0
    %1765 = vmatprep.subr.mxu0 0.0
    %1766 = vmatpush1.msra.mxu0 0.0
    %1767 = vmatprep.subr.mxu0 0.0
    %1768 = vmatpush1.msra.mxu0 0.0
    %1769 = vmatprep.subr.mxu0 0.0
    %1770 = vmatpush1.msra.mxu0 0.0
    %1771 = vmatprep.subr.mxu0 0.0
    %1772 = vmatpush1.msra.mxu0 0.0
    %1773 = vmatprep.subr.mxu0 0.0
    %1774 = vmatpush1.msra.mxu0 0.0
    %1775 = vmatprep.subr.mxu0 0.0
    %1776 = vmatpush1.msra.mxu0 0.0
    %1777 = vmatprep.subr.mxu0 0.0
    %1778 = vmatpush1.msra.mxu0 0.0
    %1779 = vmatprep.subr.mxu0 0.0
    %1780 = vmatpush1.msra.mxu0 0.0
    %1781 = vmatprep.subr.mxu0 0.0
    %1782 = vmatpush1.msra.mxu0 0.0
    %1783 = vmatprep.subr.mxu0 0.0
    %1784 = vmatpush1.msra.mxu0 0.0
    %1785 = vmatprep.subr.mxu0 0.0
    %1786 = vmatpush1.msra.mxu0 0.0
    %1787 = vmatprep.subr.mxu0 0.0
    %1788 = vmatpush1.msra.mxu0 0.0
    %1789 = vmatprep.subr.mxu0 0.0
    %1790 = vmatpush1.msra.mxu0 0.0
    %1791 = vmatprep.subr.mxu0 0.0
    %1792 = vmatpush1.msra.mxu0 0.0
    %1793 = vmatprep.subr.mxu0 0.0
    %1794 = vmatpush1.msra.mxu0 0.0
    %1795 = vmatprep.subr.mxu0 0.0
    %1796 = vmatpush1.msra.mxu0 0.0
    %1797 = vmatprep.mubr.f32.mxu0 0.0
    %1798 = vmatmul.mubr.f32.gmra.mrb[0].mxu0 %v1728
    %v1799 = vpop.f32.mrb[0].mxu0
    %v1800 = vadd.f32 0.0, %v1799
    %v1801 = vpop.f32.mrb[0].mxu0
    %1802 = vmatprep.mubr.f32.mxu0 0.0
    %1803 = vmatmul.mubr.f32.gmra.mrb[0].mxu0 %v1731
    %v1804 = vpop.f32.mrb[0].mxu0
    %v1805 = vadd.f32 0.0, %v1804
    %v1806 = vpop.f32.mrb[0].mxu0
    %1807 = vdwg.mxu0
    %v1808 = vadd.f32 %v1725, %v1800
    %v1809 = vadd.f32 %v1726, %v1805
    %v1811 = vsel %vm284, %v1286, 0
    %v1814 = vsel %vm284, %v1291, 0
    %1816 = vmatprep.subr.mxu0 0.0
    %1817 = vmatpush1.msra.mxu0 %v70
    %1818 = vmatprep.subr.mxu0 0.0
    %1819 = vmatpush1.msra.mxu0 %v71
    %1820 = vmatprep.subr.mxu0 0.0
    %1821 = vmatpush1.msra.mxu0 %v72
    %1822 = vmatprep.subr.mxu0 0.0
    %1823 = vmatpush1.msra.mxu0 %v73
    %1824 = vmatprep.subr.mxu0 0.0
    %1825 = vmatpush1.msra.mxu0 0.0
    %1826 = vmatprep.subr.mxu0 0.0
    %1827 = vmatpush1.msra.mxu0 0.0
    %1828 = vmatprep.subr.mxu0 0.0
    %1829 = vmatpush1.msra.mxu0 0.0
    %1830 = vmatprep.subr.mxu0 0.0
    %1831 = vmatpush1.msra.mxu0 0.0
    %1832 = vmatprep.subr.mxu0 0.0
    %1833 = vmatpush1.msra.mxu0 0.0
    %1834 = vmatprep.subr.mxu0 0.0
    %1835 = vmatpush1.msra.mxu0 0.0
    %1836 = vmatprep.subr.mxu0 0.0
    %1837 = vmatpush1.msra.mxu0 0.0
    %1838 = vmatprep.subr.mxu0 0.0
    %1839 = vmatpush1.msra.mxu0 0.0
    %1840 = vmatprep.subr.mxu0 0.0
    %1841 = vmatpush1.msra.mxu0 0.0
    %1842 = vmatprep.subr.mxu0 0.0
    %1843 = vmatpush1.msra.mxu0 0.0
    %1844 = vmatprep.subr.mxu0 0.0
    %1845 = vmatpush1.msra.mxu0 0.0
    %1846 = vmatprep.subr.mxu0 0.0
    %1847 = vmatpush1.msra.mxu0 0.0
    %1848 = vmatprep.subr.mxu0 0.0
    %1849 = vmatpush1.msra.mxu0 0.0
    %1850 = vmatprep.subr.mxu0 0.0
    %1851 = vmatpush1.msra.mxu0 0.0
    %1852 = vmatprep.subr.mxu0 0.0
    %1853 = vmatpush1.msra.mxu0 0.0
    %1854 = vmatprep.subr.mxu0 0.0
    %1855 = vmatpush1.msra.mxu0 0.0
    %1856 = vmatprep.subr.mxu0 0.0
    %1857 = vmatpush1.msra.mxu0 0.0
    %1858 = vmatprep.subr.mxu0 0.0
    %1859 = vmatpush1.msra.mxu0 0.0
    %1860 = vmatprep.subr.mxu0 0.0
    %1861 = vmatpush1.msra.mxu0 0.0
    %1862 = vmatprep.subr.mxu0 0.0
    %1863 = vmatpush1.msra.mxu0 0.0
    %1864 = vmatprep.subr.mxu0 0.0
    %1865 = vmatpush1.msra.mxu0 0.0
    %1866 = vmatprep.subr.mxu0 0.0
    %1867 = vmatpush1.msra.mxu0 0.0
    %1868 = vmatprep.subr.mxu0 0.0
    %1869 = vmatpush1.msra.mxu0 0.0
    %1870 = vmatprep.subr.mxu0 0.0
    %1871 = vmatpush1.msra.mxu0 0.0
    %1872 = vmatprep.subr.mxu0 0.0
    %1873 = vmatpush1.msra.mxu0 0.0
    %1874 = vmatprep.subr.mxu0 0.0
    %1875 = vmatpush1.msra.mxu0 0.0
    %1876 = vmatprep.subr.mxu0 0.0
    %1877 = vmatpush1.msra.mxu0 0.0
    %1878 = vmatprep.subr.mxu0 0.0
    %1879 = vmatpush1.msra.mxu0 0.0
    %1880 = vmatprep.mubr.f32.mxu0 0.0
    %1881 = vmatmul.mubr.f32.gmra.mrb[0].mxu0 %v1811
    %v1882 = vpop.f32.mrb[0].mxu0
    %v1883 = vadd.f32 0.0, %v1882
    %v1884 = vpop.f32.mrb[0].mxu0
    %1885 = vmatprep.mubr.f32.mxu0 0.0
    %1886 = vmatmul.mubr.f32.gmra.mrb[0].mxu0 %v1814
    %v1887 = vpop.f32.mrb[0].mxu0
    %v1888 = vadd.f32 0.0, %v1887
    %v1889 = vpop.f32.mrb[0].mxu0
    %1890 = vdwg.mxu0
    %v1891 = vadd.f32 %v1808, %v1883
    %v1892 = vadd.f32 %v1809, %v1888
    %v1894 = vsel %vm284, %v1296, 0
    %v1897 = vsel %vm284, %v1301, 0
    %1899 = vmatprep.subr.mxu0 0.0
    %1900 = vmatpush1.msra.mxu0 %v74
    %1901 = vmatprep.subr.mxu0 0.0
    %1902 = vmatpush1.msra.mxu0 %v75
    %1903 = vmatprep.subr.mxu0 0.0
    %1904 = vmatpush1.msra.mxu0 %v76
    %1905 = vmatprep.subr.mxu0 0.0
    %1906 = vmatpush1.msra.mxu0 %v77
    %1907 = vmatprep.subr.mxu0 0.0
    %1908 = vmatpush1.msra.mxu0 0.0
    %1909 = vmatprep.subr.mxu0 0.0
    %1910 = vmatpush1.msra.mxu0 0.0
    %1911 = vmatprep.subr.mxu0 0.0
    %1912 = vmatpush1.msra.mxu0 0.0
    %1913 = vmatprep.subr.mxu0 0.0
    %1914 = vmatpush1.msra.mxu0 0.0
    %1915 = vmatprep.subr.mxu0 0.0
    %1916 = vmatpush1.msra.mxu0 0.0
    %1917 = vmatprep.subr.mxu0 0.0
    %1918 = vmatpush1.msra.mxu0 0.0
    %1919 = vmatprep.subr.mxu0 0.0
    %1920 = vmatpush1.msra.mxu0 0.0
    %1921 = vmatprep.subr.mxu0 0.0
    %1922 = vmatpush1.msra.mxu0 0.0
    %1923 = vmatprep.subr.mxu0 0.0
    %1924 = vmatpush1.msra.mxu0 0.0
    %1925 = vmatprep.subr.mxu0 0.0
    %1926 = vmatpush1.msra.mxu0 0.0
    %1927 = vmatprep.subr.mxu0 0.0
    %1928 = vmatpush1.msra.mxu0 0.0
    %1929 = vmatprep.subr.mxu0 0.0
    %1930 = vmatpush1.msra.mxu0 0.0
    %1931 = vmatprep.subr.mxu0 0.0
    %1932 = vmatpush1.msra.mxu0 0.0
    %1933 = vmatprep.subr.mxu0 0.0
    %1934 = vmatpush1.msra.mxu0 0.0
    %1935 = vmatprep.subr.mxu0 0.0
    %1936 = vmatpush1.msra.mxu0 0.0
    %1937 = vmatprep.subr.mxu0 0.0
    %1938 = vmatpush1.msra.mxu0 0.0
    %1939 = vmatprep.subr.mxu0 0.0
    %1940 = vmatpush1.msra.mxu0 0.0
    %1941 = vmatprep.subr.mxu0 0.0
    %1942 = vmatpush1.msra.mxu0 0.0
    %1943 = vmatprep.subr.mxu0 0.0
    %1944 = vmatpush1.msra.mxu0 0.0
    %1945 = vmatprep.subr.mxu0 0.0
    %1946 = vmatpush1.msra.mxu0 0.0
    %1947 = vmatprep.subr.mxu0 0.0
    %1948 = vmatpush1.msra.mxu0 0.0
    %1949 = vmatprep.subr.mxu0 0.0
    %1950 = vmatpush1.msra.mxu0 0.0
    %1951 = vmatprep.subr.mxu0 0.0
    %1952 = vmatpush1.msra.mxu0 0.0
    %1953 = vmatprep.subr.mxu0 0.0
    %1954 = vmatpush1.msra.mxu0 0.0
    %1955 = vmatprep.subr.mxu0 0.0
    %1956 = vmatpush1.msra.mxu0 0.0
    %1957 = vmatprep.subr.mxu0 0.0
    %1958 = vmatpush1.msra.mxu0 0.0
    %1959 = vmatprep.subr.mxu0 0.0
    %1960 = vmatpush1.msra.mxu0 0.0
    %1961 = vmatprep.subr.mxu0 0.0
    %1962 = vmatpush1.msra.mxu0 0.0
    %1963 = vmatprep.mubr.f32.mxu0 0.0
    %1964 = vmatmul.mubr.f32.gmra.mrb[0].mxu0 %v1894
    %v1965 = vpop.f32.mrb[0].mxu0
    %v1966 = vadd.f32 0.0, %v1965
    %v1967 = vpop.f32.mrb[0].mxu0
    %1968 = vmatprep.mubr.f32.mxu0 0.0
    %1969 = vmatmul.mubr.f32.gmra.mrb[0].mxu0 %v1897
    %v1970 = vpop.f32.mrb[0].mxu0
    %v1971 = vadd.f32 0.0, %v1970
    %v1972 = vpop.f32.mrb[0].mxu0
    %1973 = vdwg.mxu0
    %v1974 = vadd.f32 %v1891, %v1966
    %v1975 = vadd.f32 %v1892, %v1971
    %v1977 = vsel %vm284, %v1306, 0
    %v1980 = vsel %vm284, %v1311, 0
    %1982 = vmatprep.subr.mxu0 0.0
    %1983 = vmatpush1.msra.mxu0 %v78
    %1984 = vmatprep.subr.mxu0 0.0
    %1985 = vmatpush1.msra.mxu0 %v79
    %1986 = vmatprep.subr.mxu0 0.0
    %1987 = vmatpush1.msra.mxu0 %v80
    %1988 = vmatprep.subr.mxu0 0.0
    %1989 = vmatpush1.msra.mxu0 %v81
    %1990 = vmatprep.subr.mxu0 0.0
    %1991 = vmatpush1.msra.mxu0 0.0
    %1992 = vmatprep.subr.mxu0 0.0
    %1993 = vmatpush1.msra.mxu0 0.0
    %1994 = vmatprep.subr.mxu0 0.0
    %1995 = vmatpush1.msra.mxu0 0.0
    %1996 = vmatprep.subr.mxu0 0.0
    %1997 = vmatpush1.msra.mxu0 0.0
    %1998 = vmatprep.subr.mxu0 0.0
    %1999 = vmatpush1.msra.mxu0 0.0
    %2000 = vmatprep.subr.mxu0 0.0
    %2001 = vmatpush1.msra.mxu0 0.0
    %2002 = vmatprep.subr.mxu0 0.0
    %2003 = vmatpush1.msra.mxu0 0.0
    %2004 = vmatprep.subr.mxu0 0.0
    %2005 = vmatpush1.msra.mxu0 0.0
    %2006 = vmatprep.subr.mxu0 0.0
    %2007 = vmatpush1.msra.mxu0 0.0
    %2008 = vmatprep.subr.mxu0 0.0
    %2009 = vmatpush1.msra.mxu0 0.0
    %2010 = vmatprep.subr.mxu0 0.0
    %2011 = vmatpush1.msra.mxu0 0.0
    %2012 = vmatprep.subr.mxu0 0.0
    %2013 = vmatpush1.msra.mxu0 0.0
    %2014 = vmatprep.subr.mxu0 0.0
    %2015 = vmatpush1.msra.mxu0 0.0
    %2016 = vmatprep.subr.mxu0 0.0
    %2017 = vmatpush1.msra.mxu0 0.0
    %2018 = vmatprep.subr.mxu0 0.0
    %2019 = vmatpush1.msra.mxu0 0.0
    %2020 = vmatprep.subr.mxu0 0.0
    %2021 = vmatpush1.msra.mxu0 0.0
    %2022 = vmatprep.subr.mxu0 0.0
    %2023 = vmatpush1.msra.mxu0 0.0
    %2024 = vmatprep.subr.mxu0 0.0
    %2025 = vmatpush1.msra.mxu0 0.0
    %2026 = vmatprep.subr.mxu0 0.0
    %2027 = vmatpush1.msra.mxu0 0.0
    %2028 = vmatprep.subr.mxu0 0.0
    %2029 = vmatpush1.msra.mxu0 0.0
    %2030 = vmatprep.subr.mxu0 0.0
    %2031 = vmatpush1.msra.mxu0 0.0
    %2032 = vmatprep.subr.mxu0 0.0
    %2033 = vmatpush1.msra.mxu0 0.0
    %2034 = vmatprep.subr.mxu0 0.0
    %2035 = vmatpush1.msra.mxu0 0.0
    %2036 = vmatprep.subr.mxu0 0.0
    %2037 = vmatpush1.msra.mxu0 0.0
    %2038 = vmatprep.subr.mxu0 0.0
    %2039 = vmatpush1.msra.mxu0 0.0
    %2040 = vmatprep.subr.mxu0 0.0
    %2041 = vmatpush1.msra.mxu0 0.0
    %2042 = vmatprep.subr.mxu0 0.0
    %2043 = vmatpush1.msra.mxu0 0.0
    %2044 = vmatprep.subr.mxu0 0.0
    %2045 = vmatpush1.msra.mxu0 0.0
    %2046 = vmatprep.mubr.f32.mxu0 0.0
    %2047 = vmatmul.mubr.f32.gmra.mrb[0].mxu0 %v1977
    %v2048 = vpop.f32.mrb[0].mxu0
    %v2049 = vadd.f32 0.0, %v2048
    %v2050 = vpop.f32.mrb[0].mxu0
    %2051 = vmatprep.mubr.f32.mxu0 0.0
    %2052 = vmatmul.mubr.f32.gmra.mrb[0].mxu0 %v1980
    %v2053 = vpop.f32.mrb[0].mxu0
    %v2054 = vadd.f32 0.0, %v2053
    %v2055 = vpop.f32.mrb[0].mxu0
    %2056 = vdwg.mxu0
    %v2057 = vadd.f32 %v1974, %v2049
    %v2058 = vadd.f32 %v1975, %v2054
    %v2059 = vxor.u32 %v2057, 2147483648
    %v2060 = vxor.u32 %v2058, 2147483648
    %v2061 = vmul.f32 %v2059, 1.442695
    %v2062 = vpow.pop %v2061
    %v2063 = vmul.f32 %v2060, 1.442695
    %v2064 = vpow.pop %v2063
    %v2065 = vadd.f32 %v2062, 1.0
    %v2066 = vadd.f32 %v2064, 1.0
    %v2067 = vrcp.pop %v2065
    %v2068 = vmul.f32 1.0, %v2067
    %v2069 = vrcp.pop %v2066
    %v2070 = vmul.f32 1.0, %v2069
    %v2071 = vmul.f32 %v2068, %v1164
    %v2072 = vmul.f32 %v2070, %v1166
    %v2074 = vsel %vm284, %v2071, 0
    %v2077 = vsel %vm284, %v2072, 0
    %2079 = vmatprep.subr.mxu0 0.0
    %2080 = vmatpush1.msra.mxu0 %v86
    %2081 = vmatprep.subr.mxu0 0.0
    %2082 = vmatpush1.msra.mxu0 %v87
    %2083 = vmatprep.subr.mxu0 0.0
    %2084 = vmatpush1.msra.mxu0 %v88
    %2085 = vmatprep.subr.mxu0 0.0
    %2086 = vmatpush1.msra.mxu0 %v89
    %2087 = vmatprep.subr.mxu0 0.0
    %2088 = vmatpush1.msra.mxu0 0.0
    %2089 = vmatprep.subr.mxu0 0.0
    %2090 = vmatpush1.msra.mxu0 0.0
    %2091 = vmatprep.subr.mxu0 0.0
    %2092 = vmatpush1.msra.mxu0 0.0
    %2093 = vmatprep.subr.mxu0 0.0
    %2094 = vmatpush1.msra.mxu0 0.0
    %2095 = vmatprep.subr.mxu0 0.0
    %2096 = vmatpush1.msra.mxu0 0.0
    %2097 = vmatprep.subr.mxu0 0.0
    %2098 = vmatpush1.msra.mxu0 0.0
    %2099 = vmatprep.subr.mxu0 0.0
    %2100 = vmatpush1.msra.mxu0 0.0
    %2101 = vmatprep.subr.mxu0 0.0
    %2102 = vmatpush1.msra.mxu0 0.0
    %2103 = vmatprep.subr.mxu0 0.0
    %2104 = vmatpush1.msra.mxu0 0.0
    %2105 = vmatprep.subr.mxu0 0.0
    %2106 = vmatpush1.msra.mxu0 0.0
    %2107 = vmatprep.subr.mxu0 0.0
    %2108 = vmatpush1.msra.mxu0 0.0
    %2109 = vmatprep.subr.mxu0 0.0
    %2110 = vmatpush1.msra.mxu0 0.0
    %2111 = vmatprep.subr.mxu0 0.0
    %2112 = vmatpush1.msra.mxu0 0.0
    %2113 = vmatprep.subr.mxu0 0.0
    %2114 = vmatpush1.msra.mxu0 0.0
    %2115 = vmatprep.subr.mxu0 0.0
    %2116 = vmatpush1.msra.mxu0 0.0
    %2117 = vmatprep.subr.mxu0 0.0
    %2118 = vmatpush1.msra.mxu0 0.0
    %2119 = vmatprep.subr.mxu0 0.0
    %2120 = vmatpush1.msra.mxu0 0.0
    %2121 = vmatprep.subr.mxu0 0.0
    %2122 = vmatpush1.msra.mxu0 0.0
    %2123 = vmatprep.subr.mxu0 0.0
    %2124 = vmatpush1.msra.mxu0 0.0
    %2125 = vmatprep.subr.mxu0 0.0
    %2126 = vmatpush1.msra.mxu0 0.0
    %2127 = vmatprep.subr.mxu0 0.0
    %2128 = vmatpush1.msra.mxu0 0.0
    %2129 = vmatprep.subr.mxu0 0.0
    %2130 = vmatpush1.msra.mxu0 0.0
    %2131 = vmatprep.subr.mxu0 0.0
    %2132 = vmatpush1.msra.mxu0 0.0
    %2133 = vmatprep.subr.mxu0 0.0
    %2134 = vmatpush1.msra.mxu0 0.0
    %2135 = vmatprep.subr.mxu0 0.0
    %2136 = vmatpush1.msra.mxu0 0.0
    %2137 = vmatprep.subr.mxu0 0.0
    %2138 = vmatpush1.msra.mxu0 0.0
    %2139 = vmatprep.subr.mxu0 0.0
    %2140 = vmatpush1.msra.mxu0 0.0
    %2141 = vmatprep.subr.mxu0 0.0
    %2142 = vmatpush1.msra.mxu0 0.0
    %2143 = vmatprep.mubr.f32.mxu0 0.0
    %2144 = vmatmul.mubr.f32.gmra.mrb[0].mxu0 %v2074
    %v2145 = vpop.f32.mrb[0].mxu0
    %v2146 = vadd.f32 0.0, %v2145
    %v2147 = vpop.f32.mrb[0].mxu0
    %2148 = vmatprep.mubr.f32.mxu0 0.0
    %2149 = vmatmul.mubr.f32.gmra.mrb[0].mxu0 %v2077
    %v2150 = vpop.f32.mrb[0].mxu0
    %v2151 = vadd.f32 0.0, %v2150
    %v2152 = vpop.f32.mrb[0].mxu0
    %2153 = vdwg.mxu0
    %2156 = vrot.lane.b32.xlu0 %v2146, 64
    %v2157 = vpop.permute.xlu0 %2156
    %2158 = vrot.lane.b32.xlu0 %v2151, 64
    %v2159 = vpop.permute.xlu0 %2158
    %v2162 = vadd.f32 %v2057, %v2157
    %v2163 = vadd.f32 %v2058, %v2159
    %v2164 = vtanh.pop %v2162
    %v2165 = vtanh.pop %v2163
    %v2166 = vsub.f32 1.0, %v2068
    %v2167 = vsub.f32 1.0, %v2070
    %v2168 = vmul.f32 %v2166, %v1159
    %v2169 = vmul.f32 %v2167, %v1160
    %2172 = vrot.lane.b32.xlu0 %v2164, 96
    %v2173 = vpop.permute.xlu0 %2172
    %2174 = vrot.lane.b32.xlu0 %v2165, 96
    %v2175 = vpop.permute.xlu0 %2174
    %v2178 = vmul.f32 %v2068, %v2173
    %v2179 = vmul.f32 %v2070, %v2175
    %v2180 = vadd.f32 %v2168, %v2178
    %v2181 = vadd.f32 %v2169, %v2179
    %2184 = vrot.lane.b32.xlu0 %v2180, 96
    %v2185 = vpop.permute.xlu0 %2184
    %2186 = vrot.lane.b32.xlu0 %v2181, 96
    %v2187 = vpop.permute.xlu0 %2186
    %2190 = vmatprep.subr.mxu0 0.0
    %2191 = vmatpush1.msra.mxu0 %v2185
    %2192 = vmatprep.subr.mxu0 0.0
    %2193 = vmatpush1.msra.mxu0 %v2187
    %2194 = vmatprep.subr.mxu0 0.0
    %2195 = vmatpush1.msra.mxu0 0.0
    %2196 = vmatprep.subr.mxu0 0.0
    %2197 = vmatpush1.msra.mxu0 0.0
    %2198 = vmatprep.subr.mxu0 0.0
    %2199 = vmatpush1.msra.mxu0 0.0
    %2200 = vmatprep.subr.mxu0 0.0
    %2201 = vmatpush1.msra.mxu0 0.0
    %2202 = vmatprep.subr.mxu0 0.0
    %2203 = vmatpush1.msra.mxu0 0.0
    %2204 = vmatprep.subr.mxu0 0.0
    %2205 = vmatpush1.msra.mxu0 0.0
    %2206 = vmatprep.subr.mxu0 0.0
    %2207 = vmatpush1.msra.mxu0 0.0
    %2208 = vmatprep.subr.mxu0 0.0
    %2209 = vmatpush1.msra.mxu0 0.0
    %2210 = vmatprep.subr.mxu0 0.0
    %2211 = vmatpush1.msra.mxu0 0.0
    %2212 = vmatprep.subr.mxu0 0.0
    %2213 = vmatpush1.msra.mxu0 0.0
    %2214 = vmatprep.subr.mxu0 0.0
    %2215 = vmatpush1.msra.mxu0 0.0
    %2216 = vmatprep.subr.mxu0 0.0
    %2217 = vmatpush1.msra.mxu0 0.0
    %2218 = vmatprep.subr.mxu0 0.0
    %2219 = vmatpush1.msra.mxu0 0.0
    %2220 = vmatprep.subr.mxu0 0.0
    %2221 = vmatpush1.msra.mxu0 0.0
    %2222 = vmatprep.subr.mxu0 0.0
    %2223 = vmatpush1.msra.mxu0 0.0
    %2224 = vmatprep.subr.mxu0 0.0
    %2225 = vmatpush1.msra.mxu0 0.0
    %2226 = vmatprep.subr.mxu0 0.0
    %2227 = vmatpush1.msra.mxu0 0.0
    %2228 = vmatprep.subr.mxu0 0.0
    %2229 = vmatpush1.msra.mxu0 0.0
    %2230 = vmatprep.subr.mxu0 0.0
    %2231 = vmatpush1.msra.mxu0 0.0
    %2232 = vmatprep.subr.mxu0 0.0
    %2233 = vmatpush1.msra.mxu0 0.0
    %2234 = vmatprep.subr.mxu0 0.0
    %2235 = vmatpush1.msra.mxu0 0.0
    %2236 = vmatprep.subr.mxu0 0.0
    %2237 = vmatpush1.msra.mxu0 0.0
    %2238 = vmatprep.subr.mxu0 0.0
    %2239 = vmatpush1.msra.mxu0 0.0
    %2240 = vmatprep.subr.mxu0 0.0
    %2241 = vmatpush1.msra.mxu0 0.0
    %2242 = vmatprep.subr.mxu0 0.0
    %2243 = vmatpush1.msra.mxu0 0.0
    %2244 = vmatprep.subr.mxu0 0.0
    %2245 = vmatpush1.msra.mxu0 0.0
    %2246 = vmatprep.subr.mxu0 0.0
    %2247 = vmatpush1.msra.mxu0 0.0
    %2248 = vmatprep.subr.mxu0 0.0
    %2249 = vmatpush1.msra.mxu0 0.0
    %2250 = vmatprep.subr.mxu0 0.0
    %2251 = vmatpush1.msra.mxu0 0.0
    %2252 = vmatprep.subr.mxu0 0.0
    %2253 = vmatpush1.msra.mxu0 0.0
    %2254 = vmatprep.mubr.f32.mxu0 0.0
    %2255 = vmatmul.mubr.f32.gmra.mrb[0].mxu0 %v92
    %v2256 = vpop.f32.mrb[0].mxu0
    %v2257 = vadd.f32 0.0, %v2256
    %v2258 = vpop.f32.mrb[0].mxu0
    %2259 = vmatprep.mubr.f32.mxu0 0.0
    %2260 = vmatmul.mubr.f32.gmra.mrb[0].mxu0 %v95
    %v2261 = vpop.f32.mrb[0].mxu0
    %v2262 = vadd.f32 0.0, %v2261
    %v2263 = vpop.f32.mrb[0].mxu0
    %2264 = vmatprep.mubr.f32.mxu0 0.0
    %2265 = vmatmul.mubr.f32.gmra.mrb[0].mxu0 %v98
    %v2266 = vpop.f32.mrb[0].mxu0
    %v2267 = vadd.f32 0.0, %v2266
    %v2268 = vpop.f32.mrb[0].mxu0
    %2269 = vmatprep.mubr.f32.mxu0 0.0
    %2270 = vmatmul.mubr.f32.gmra.mrb[0].mxu0 %v101
    %v2271 = vpop.f32.mrb[0].mxu0
    %v2272 = vadd.f32 0.0, %v2271
    %v2273 = vpop.f32.mrb[0].mxu0
    %2274 = vmatprep.mubr.f32.mxu0 0.0
    %2275 = vmatmul.mubr.f32.gmra.mrb[0].mxu0 %v104
    %v2276 = vpop.f32.mrb[0].mxu0
    %v2277 = vadd.f32 0.0, %v2276
    %v2278 = vpop.f32.mrb[0].mxu0
    %2279 = vmatprep.mubr.f32.mxu0 0.0
    %2280 = vmatmul.mubr.f32.gmra.mrb[0].mxu0 %v107
    %v2281 = vpop.f32.mrb[0].mxu0
    %v2282 = vadd.f32 0.0, %v2281
    %v2283 = vpop.f32.mrb[0].mxu0
    %2284 = vmatprep.mubr.f32.mxu0 0.0
    %2285 = vmatmul.mubr.f32.gmra.mrb[0].mxu0 %v110
    %v2286 = vpop.f32.mrb[0].mxu0
    %v2287 = vadd.f32 0.0, %v2286
    %v2288 = vpop.f32.mrb[0].mxu0
    %2289 = vmatprep.mubr.f32.mxu0 0.0
    %2290 = vmatmul.mubr.f32.gmra.mrb[0].mxu0 %v113
    %v2291 = vpop.f32.mrb[0].mxu0
    %v2292 = vadd.f32 0.0, %v2291
    %v2293 = vpop.f32.mrb[0].mxu0
    %2294 = vmatprep.mubr.f32.mxu0 0.0
    %2295 = vmatmul.mubr.f32.gmra.mrb[0].mxu0 %v116
    %v2296 = vpop.f32.mrb[0].mxu0
    %v2297 = vadd.f32 0.0, %v2296
    %v2298 = vpop.f32.mrb[0].mxu0
    %2299 = vmatprep.mubr.f32.mxu0 0.0
    %2300 = vmatmul.mubr.f32.gmra.mrb[0].mxu0 %v119
    %v2301 = vpop.f32.mrb[0].mxu0
    %v2302 = vadd.f32 0.0, %v2301
    %v2303 = vpop.f32.mrb[0].mxu0
    %2304 = vmatprep.mubr.f32.mxu0 0.0
    %2305 = vmatmul.mubr.f32.gmra.mrb[0].mxu0 %v122
    %v2306 = vpop.f32.mrb[0].mxu0
    %v2307 = vadd.f32 0.0, %v2306
    %v2308 = vpop.f32.mrb[0].mxu0
    %2309 = vmatprep.mubr.f32.mxu0 0.0
    %2310 = vmatmul.mubr.f32.gmra.mrb[0].mxu0 %v125
    %v2311 = vpop.f32.mrb[0].mxu0
    %v2312 = vadd.f32 0.0, %v2311
    %v2313 = vpop.f32.mrb[0].mxu0
    %2314 = vmatprep.mubr.f32.mxu0 0.0
    %2315 = vmatmul.mubr.f32.gmra.mrb[0].mxu0 %v128
    %v2316 = vpop.f32.mrb[0].mxu0
    %v2317 = vadd.f32 0.0, %v2316
    %v2318 = vpop.f32.mrb[0].mxu0
    %2319 = vmatprep.mubr.f32.mxu0 0.0
    %2320 = vmatmul.mubr.f32.gmra.mrb[0].mxu0 %v131
    %v2321 = vpop.f32.mrb[0].mxu0
    %v2322 = vadd.f32 0.0, %v2321
    %v2323 = vpop.f32.mrb[0].mxu0
    %2324 = vmatprep.mubr.f32.mxu0 0.0
    %2325 = vmatmul.mubr.f32.gmra.mrb[0].mxu0 %v134
    %v2326 = vpop.f32.mrb[0].mxu0
    %v2327 = vadd.f32 0.0, %v2326
    %v2328 = vpop.f32.mrb[0].mxu0
    %2329 = vmatprep.mubr.f32.mxu0 0.0
    %2330 = vmatmul.mubr.f32.gmra.mrb[0].mxu0 %v137
    %v2331 = vpop.f32.mrb[0].mxu0
    %v2332 = vadd.f32 0.0, %v2331
    %v2333 = vpop.f32.mrb[0].mxu0
    %2334 = vdwg.mxu0
    %v2335 = vsel %vm284, %v2185, 0
    %v2337 = vsel %vm284, %v2187, 0
    %2339 = vmatprep.subr.mxu0 0.0
    %2340 = vmatpush1.msra.mxu0 %v82
    %2341 = vmatprep.subr.mxu0 0.0
    %2342 = vmatpush1.msra.mxu0 %v83
    %2343 = vmatprep.subr.mxu0 0.0
    %2344 = vmatpush1.msra.mxu0 %v84
    %2345 = vmatprep.subr.mxu0 0.0
    %2346 = vmatpush1.msra.mxu0 %v85
    %2347 = vmatprep.subr.mxu0 0.0
    %2348 = vmatpush1.msra.mxu0 0.0
    %2349 = vmatprep.subr.mxu0 0.0
    %2350 = vmatpush1.msra.mxu0 0.0
    %2351 = vmatprep.subr.mxu0 0.0
    %2352 = vmatpush1.msra.mxu0 0.0
    %2353 = vmatprep.subr.mxu0 0.0
    %2354 = vmatpush1.msra.mxu0 0.0
    %2355 = vmatprep.subr.mxu0 0.0
    %2356 = vmatpush1.msra.mxu0 0.0
    %2357 = vmatprep.subr.mxu0 0.0
    %2358 = vmatpush1.msra.mxu0 0.0
    %2359 = vmatprep.subr.mxu0 0.0
    %2360 = vmatpush1.msra.mxu0 0.0
    %2361 = vmatprep.subr.mxu0 0.0
    %2362 = vmatpush1.msra.mxu0 0.0
    %2363 = vmatprep.subr.mxu0 0.0
    %2364 = vmatpush1.msra.mxu0 0.0
    %2365 = vmatprep.subr.mxu0 0.0
    %2366 = vmatpush1.msra.mxu0 0.0
    %2367 = vmatprep.subr.mxu0 0.0
    %2368 = vmatpush1.msra.mxu0 0.0
    %2369 = vmatprep.subr.mxu0 0.0
    %2370 = vmatpush1.msra.mxu0 0.0
    %2371 = vmatprep.subr.mxu0 0.0
    %2372 = vmatpush1.msra.mxu0 0.0
    %2373 = vmatprep.subr.mxu0 0.0
    %2374 = vmatpush1.msra.mxu0 0.0
    %2375 = vmatprep.subr.mxu0 0.0
    %2376 = vmatpush1.msra.mxu0 0.0
    %2377 = vmatprep.subr.mxu0 0.0
    %2378 = vmatpush1.msra.mxu0 0.0
    %2379 = vmatprep.subr.mxu0 0.0
    %2380 = vmatpush1.msra.mxu0 0.0
    %2381 = vmatprep.subr.mxu0 0.0
    %2382 = vmatpush1.msra.mxu0 0.0
    %2383 = vmatprep.subr.mxu0 0.0
    %2384 = vmatpush1.msra.mxu0 0.0
    %2385 = vmatprep.subr.mxu0 0.0
    %2386 = vmatpush1.msra.mxu0 0.0
    %2387 = vmatprep.subr.mxu0 0.0
    %2388 = vmatpush1.msra.mxu0 0.0
    %2389 = vmatprep.subr.mxu0 0.0
    %2390 = vmatpush1.msra.mxu0 0.0
    %2391 = vmatprep.subr.mxu0 0.0
    %2392 = vmatpush1.msra.mxu0 0.0
    %2393 = vmatprep.subr.mxu0 0.0
    %2394 = vmatpush1.msra.mxu0 0.0
    %2395 = vmatprep.subr.mxu0 0.0
    %2396 = vmatpush1.msra.mxu0 0.0
    %2397 = vmatprep.subr.mxu0 0.0
    %2398 = vmatpush1.msra.mxu0 0.0
    %2399 = vmatprep.subr.mxu0 0.0
    %2400 = vmatpush1.msra.mxu0 0.0
    %2401 = vmatprep.subr.mxu0 0.0
    %2402 = vmatpush1.msra.mxu0 0.0
    %2403 = vmatprep.mubr.f32.mxu0 0.0
    %2404 = vmatmul.mubr.f32.gmra.mrb[0].mxu0 %v2335
    %v2405 = vpop.f32.mrb[0].mxu0
    %v2406 = vadd.f32 0.0, %v2405
    %v2407 = vpop.f32.mrb[0].mxu0
    %2408 = vmatprep.mubr.f32.mxu0 0.0
    %2409 = vmatmul.mubr.f32.gmra.mrb[0].mxu0 %v2337
    %v2410 = vpop.f32.mrb[0].mxu0
    %v2411 = vadd.f32 0.0, %v2410
    %v2412 = vpop.f32.mrb[0].mxu0
    %2413 = vdwg.mxu0
    %v2414 = vadd.f32 %v48, %v2406
    %v2415 = vadd.f32 %v49, %v2411
    %v2417 = vsel %vm284, %v2257, 0
    %v2420 = vsel %vm284, %v2262, 0
    %2422 = vmatprep.subr.mxu0 0.0
    %2423 = vmatpush1.msra.mxu0 %v50
    %2424 = vmatprep.subr.mxu0 0.0
    %2425 = vmatpush1.msra.mxu0 %v51
    %2426 = vmatprep.subr.mxu0 0.0
    %2427 = vmatpush1.msra.mxu0 %v52
    %2428 = vmatprep.subr.mxu0 0.0
    %2429 = vmatpush1.msra.mxu0 %v53
    %2430 = vmatprep.subr.mxu0 0.0
    %2431 = vmatpush1.msra.mxu0 0.0
    %2432 = vmatprep.subr.mxu0 0.0
    %2433 = vmatpush1.msra.mxu0 0.0
    %2434 = vmatprep.subr.mxu0 0.0
    %2435 = vmatpush1.msra.mxu0 0.0
    %2436 = vmatprep.subr.mxu0 0.0
    %2437 = vmatpush1.msra.mxu0 0.0
    %2438 = vmatprep.subr.mxu0 0.0
    %2439 = vmatpush1.msra.mxu0 0.0
    %2440 = vmatprep.subr.mxu0 0.0
    %2441 = vmatpush1.msra.mxu0 0.0
    %2442 = vmatprep.subr.mxu0 0.0
    %2443 = vmatpush1.msra.mxu0 0.0
    %2444 = vmatprep.subr.mxu0 0.0
    %2445 = vmatpush1.msra.mxu0 0.0
    %2446 = vmatprep.subr.mxu0 0.0
    %2447 = vmatpush1.msra.mxu0 0.0
    %2448 = vmatprep.subr.mxu0 0.0
    %2449 = vmatpush1.msra.mxu0 0.0
    %2450 = vmatprep.subr.mxu0 0.0
    %2451 = vmatpush1.msra.mxu0 0.0
    %2452 = vmatprep.subr.mxu0 0.0
    %2453 = vmatpush1.msra.mxu0 0.0
    %2454 = vmatprep.subr.mxu0 0.0
    %2455 = vmatpush1.msra.mxu0 0.0
    %2456 = vmatprep.subr.mxu0 0.0
    %2457 = vmatpush1.msra.mxu0 0.0
    %2458 = vmatprep.subr.mxu0 0.0
    %2459 = vmatpush1.msra.mxu0 0.0
    %2460 = vmatprep.subr.mxu0 0.0
    %2461 = vmatpush1.msra.mxu0 0.0
    %2462 = vmatprep.subr.mxu0 0.0
    %2463 = vmatpush1.msra.mxu0 0.0
    %2464 = vmatprep.subr.mxu0 0.0
    %2465 = vmatpush1.msra.mxu0 0.0
    %2466 = vmatprep.subr.mxu0 0.0
    %2467 = vmatpush1.msra.mxu0 0.0
    %2468 = vmatprep.subr.mxu0 0.0
    %2469 = vmatpush1.msra.mxu0 0.0
    %2470 = vmatprep.subr.mxu0 0.0
    %2471 = vmatpush1.msra.mxu0 0.0
    %2472 = vmatprep.subr.mxu0 0.0
    %2473 = vmatpush1.msra.mxu0 0.0
    %2474 = vmatprep.subr.mxu0 0.0
    %2475 = vmatpush1.msra.mxu0 0.0
    %2476 = vmatprep.subr.mxu0 0.0
    %2477 = vmatpush1.msra.mxu0 0.0
    %2478 = vmatprep.subr.mxu0 0.0
    %2479 = vmatpush1.msra.mxu0 0.0
    %2480 = vmatprep.subr.mxu0 0.0
    %2481 = vmatpush1.msra.mxu0 0.0
    %2482 = vmatprep.subr.mxu0 0.0
    %2483 = vmatpush1.msra.mxu0 0.0
    %2484 = vmatprep.subr.mxu0 0.0
    %2485 = vmatpush1.msra.mxu0 0.0
    %2486 = vmatprep.mubr.f32.mxu0 0.0
    %2487 = vmatmul.mubr.f32.gmra.mrb[0].mxu0 %v2417
    %v2488 = vpop.f32.mrb[0].mxu0
    %v2489 = vadd.f32 0.0, %v2488
    %v2490 = vpop.f32.mrb[0].mxu0
    %2491 = vmatprep.mubr.f32.mxu0 0.0
    %2492 = vmatmul.mubr.f32.gmra.mrb[0].mxu0 %v2420
    %v2493 = vpop.f32.mrb[0].mxu0
    %v2494 = vadd.f32 0.0, %v2493
    %v2495 = vpop.f32.mrb[0].mxu0
    %2496 = vdwg.mxu0
    %v2497 = vadd.f32 %v2414, %v2489
    %v2498 = vadd.f32 %v2415, %v2494
    %v2500 = vsel %vm284, %v2267, 0
    %v2503 = vsel %vm284, %v2272, 0
    %2505 = vmatprep.subr.mxu0 0.0
    %2506 = vmatpush1.msra.mxu0 %v54
    %2507 = vmatprep.subr.mxu0 0.0
    %2508 = vmatpush1.msra.mxu0 %v55
    %2509 = vmatprep.subr.mxu0 0.0
    %2510 = vmatpush1.msra.mxu0 %v56
    %2511 = vmatprep.subr.mxu0 0.0
    %2512 = vmatpush1.msra.mxu0 %v57
    %2513 = vmatprep.subr.mxu0 0.0
    %2514 = vmatpush1.msra.mxu0 0.0
    %2515 = vmatprep.subr.mxu0 0.0
    %2516 = vmatpush1.msra.mxu0 0.0
    %2517 = vmatprep.subr.mxu0 0.0
    %2518 = vmatpush1.msra.mxu0 0.0
    %2519 = vmatprep.subr.mxu0 0.0
    %2520 = vmatpush1.msra.mxu0 0.0
    %2521 = vmatprep.subr.mxu0 0.0
    %2522 = vmatpush1.msra.mxu0 0.0
    %2523 = vmatprep.subr.mxu0 0.0
    %2524 = vmatpush1.msra.mxu0 0.0
    %2525 = vmatprep.subr.mxu0 0.0
    %2526 = vmatpush1.msra.mxu0 0.0
    %2527 = vmatprep.subr.mxu0 0.0
    %2528 = vmatpush1.msra.mxu0 0.0
    %2529 = vmatprep.subr.mxu0 0.0
    %2530 = vmatpush1.msra.mxu0 0.0
    %2531 = vmatprep.subr.mxu0 0.0
    %2532 = vmatpush1.msra.mxu0 0.0
    %2533 = vmatprep.subr.mxu0 0.0
    %2534 = vmatpush1.msra.mxu0 0.0
    %2535 = vmatprep.subr.mxu0 0.0
    %2536 = vmatpush1.msra.mxu0 0.0
    %2537 = vmatprep.subr.mxu0 0.0
    %2538 = vmatpush1.msra.mxu0 0.0
    %2539 = vmatprep.subr.mxu0 0.0
    %2540 = vmatpush1.msra.mxu0 0.0
    %2541 = vmatprep.subr.mxu0 0.0
    %2542 = vmatpush1.msra.mxu0 0.0
    %2543 = vmatprep.subr.mxu0 0.0
    %2544 = vmatpush1.msra.mxu0 0.0
    %2545 = vmatprep.subr.mxu0 0.0
    %2546 = vmatpush1.msra.mxu0 0.0
    %2547 = vmatprep.subr.mxu0 0.0
    %2548 = vmatpush1.msra.mxu0 0.0
    %2549 = vmatprep.subr.mxu0 0.0
    %2550 = vmatpush1.msra.mxu0 0.0
    %2551 = vmatprep.subr.mxu0 0.0
    %2552 = vmatpush1.msra.mxu0 0.0
    %2553 = vmatprep.subr.mxu0 0.0
    %2554 = vmatpush1.msra.mxu0 0.0
    %2555 = vmatprep.subr.mxu0 0.0
    %2556 = vmatpush1.msra.mxu0 0.0
    %2557 = vmatprep.subr.mxu0 0.0
    %2558 = vmatpush1.msra.mxu0 0.0
    %2559 = vmatprep.subr.mxu0 0.0
    %2560 = vmatpush1.msra.mxu0 0.0
    %2561 = vmatprep.subr.mxu0 0.0
    %2562 = vmatpush1.msra.mxu0 0.0
    %2563 = vmatprep.subr.mxu0 0.0
    %2564 = vmatpush1.msra.mxu0 0.0
    %2565 = vmatprep.subr.mxu0 0.0
    %2566 = vmatpush1.msra.mxu0 0.0
    %2567 = vmatprep.subr.mxu0 0.0
    %2568 = vmatpush1.msra.mxu0 0.0
    %2569 = vmatprep.mubr.f32.mxu0 0.0
    %2570 = vmatmul.mubr.f32.gmra.mrb[0].mxu0 %v2500
    %v2571 = vpop.f32.mrb[0].mxu0
    %v2572 = vadd.f32 0.0, %v2571
    %v2573 = vpop.f32.mrb[0].mxu0
    %2574 = vmatprep.mubr.f32.mxu0 0.0
    %2575 = vmatmul.mubr.f32.gmra.mrb[0].mxu0 %v2503
    %v2576 = vpop.f32.mrb[0].mxu0
    %v2577 = vadd.f32 0.0, %v2576
    %v2578 = vpop.f32.mrb[0].mxu0
    %2579 = vdwg.mxu0
    %v2580 = vadd.f32 %v2497, %v2572
    %v2581 = vadd.f32 %v2498, %v2577
    %v2583 = vsel %vm284, %v2277, 0
    %v2586 = vsel %vm284, %v2282, 0
    %2588 = vmatprep.subr.mxu0 0.0
    %2589 = vmatpush1.msra.mxu0 %v58
    %2590 = vmatprep.subr.mxu0 0.0
    %2591 = vmatpush1.msra.mxu0 %v59
    %2592 = vmatprep.subr.mxu0 0.0
    %2593 = vmatpush1.msra.mxu0 %v60
    %2594 = vmatprep.subr.mxu0 0.0
    %2595 = vmatpush1.msra.mxu0 %v61
    %2596 = vmatprep.subr.mxu0 0.0
    %2597 = vmatpush1.msra.mxu0 0.0
    %2598 = vmatprep.subr.mxu0 0.0
    %2599 = vmatpush1.msra.mxu0 0.0
    %2600 = vmatprep.subr.mxu0 0.0
    %2601 = vmatpush1.msra.mxu0 0.0
    %2602 = vmatprep.subr.mxu0 0.0
    %2603 = vmatpush1.msra.mxu0 0.0
    %2604 = vmatprep.subr.mxu0 0.0
    %2605 = vmatpush1.msra.mxu0 0.0
    %2606 = vmatprep.subr.mxu0 0.0
    %2607 = vmatpush1.msra.mxu0 0.0
    %2608 = vmatprep.subr.mxu0 0.0
    %2609 = vmatpush1.msra.mxu0 0.0
    %2610 = vmatprep.subr.mxu0 0.0
    %2611 = vmatpush1.msra.mxu0 0.0
    %2612 = vmatprep.subr.mxu0 0.0
    %2613 = vmatpush1.msra.mxu0 0.0
    %2614 = vmatprep.subr.mxu0 0.0
    %2615 = vmatpush1.msra.mxu0 0.0
    %2616 = vmatprep.subr.mxu0 0.0
    %2617 = vmatpush1.msra.mxu0 0.0
    %2618 = vmatprep.subr.mxu0 0.0
    %2619 = vmatpush1.msra.mxu0 0.0
    %2620 = vmatprep.subr.mxu0 0.0
    %2621 = vmatpush1.msra.mxu0 0.0
    %2622 = vmatprep.subr.mxu0 0.0
    %2623 = vmatpush1.msra.mxu0 0.0
    %2624 = vmatprep.subr.mxu0 0.0
    %2625 = vmatpush1.msra.mxu0 0.0
    %2626 = vmatprep.subr.mxu0 0.0
    %2627 = vmatpush1.msra.mxu0 0.0
    %2628 = vmatprep.subr.mxu0 0.0
    %2629 = vmatpush1.msra.mxu0 0.0
    %2630 = vmatprep.subr.mxu0 0.0
    %2631 = vmatpush1.msra.mxu0 0.0
    %2632 = vmatprep.subr.mxu0 0.0
    %2633 = vmatpush1.msra.mxu0 0.0
    %2634 = vmatprep.subr.mxu0 0.0
    %2635 = vmatpush1.msra.mxu0 0.0
    %2636 = vmatprep.subr.mxu0 0.0
    %2637 = vmatpush1.msra.mxu0 0.0
    %2638 = vmatprep.subr.mxu0 0.0
    %2639 = vmatpush1.msra.mxu0 0.0
    %2640 = vmatprep.subr.mxu0 0.0
    %2641 = vmatpush1.msra.mxu0 0.0
    %2642 = vmatprep.subr.mxu0 0.0
    %2643 = vmatpush1.msra.mxu0 0.0
    %2644 = vmatprep.subr.mxu0 0.0
    %2645 = vmatpush1.msra.mxu0 0.0
    %2646 = vmatprep.subr.mxu0 0.0
    %2647 = vmatpush1.msra.mxu0 0.0
    %2648 = vmatprep.subr.mxu0 0.0
    %2649 = vmatpush1.msra.mxu0 0.0
    %2650 = vmatprep.subr.mxu0 0.0
    %2651 = vmatpush1.msra.mxu0 0.0
    %2652 = vmatprep.mubr.f32.mxu0 0.0
    %2653 = vmatmul.mubr.f32.gmra.mrb[0].mxu0 %v2583
    %v2654 = vpop.f32.mrb[0].mxu0
    %v2655 = vadd.f32 0.0, %v2654
    %v2656 = vpop.f32.mrb[0].mxu0
    %2657 = vmatprep.mubr.f32.mxu0 0.0
    %2658 = vmatmul.mubr.f32.gmra.mrb[0].mxu0 %v2586
    %v2659 = vpop.f32.mrb[0].mxu0
    %v2660 = vadd.f32 0.0, %v2659
    %v2661 = vpop.f32.mrb[0].mxu0
    %2662 = vdwg.mxu0
    %v2663 = vadd.f32 %v2580, %v2655
    %v2664 = vadd.f32 %v2581, %v2660
    %v2666 = vsel %vm284, %v2287, 0
    %v2669 = vsel %vm284, %v2292, 0
    %2671 = vmatprep.subr.mxu0 0.0
    %2672 = vmatpush1.msra.mxu0 %v62
    %2673 = vmatprep.subr.mxu0 0.0
    %2674 = vmatpush1.msra.mxu0 %v63
    %2675 = vmatprep.subr.mxu0 0.0
    %2676 = vmatpush1.msra.mxu0 %v64
    %2677 = vmatprep.subr.mxu0 0.0
    %2678 = vmatpush1.msra.mxu0 %v65
    %2679 = vmatprep.subr.mxu0 0.0
    %2680 = vmatpush1.msra.mxu0 0.0
    %2681 = vmatprep.subr.mxu0 0.0
    %2682 = vmatpush1.msra.mxu0 0.0
    %2683 = vmatprep.subr.mxu0 0.0
    %2684 = vmatpush1.msra.mxu0 0.0
    %2685 = vmatprep.subr.mxu0 0.0
    %2686 = vmatpush1.msra.mxu0 0.0
    %2687 = vmatprep.subr.mxu0 0.0
    %2688 = vmatpush1.msra.mxu0 0.0
    %2689 = vmatprep.subr.mxu0 0.0
    %2690 = vmatpush1.msra.mxu0 0.0
    %2691 = vmatprep.subr.mxu0 0.0
    %2692 = vmatpush1.msra.mxu0 0.0
    %2693 = vmatprep.subr.mxu0 0.0
    %2694 = vmatpush1.msra.mxu0 0.0
    %2695 = vmatprep.subr.mxu0 0.0
    %2696 = vmatpush1.msra.mxu0 0.0
    %2697 = vmatprep.subr.mxu0 0.0
    %2698 = vmatpush1.msra.mxu0 0.0
    %2699 = vmatprep.subr.mxu0 0.0
    %2700 = vmatpush1.msra.mxu0 0.0
    %2701 = vmatprep.subr.mxu0 0.0
    %2702 = vmatpush1.msra.mxu0 0.0
    %2703 = vmatprep.subr.mxu0 0.0
    %2704 = vmatpush1.msra.mxu0 0.0
    %2705 = vmatprep.subr.mxu0 0.0
    %2706 = vmatpush1.msra.mxu0 0.0
    %2707 = vmatprep.subr.mxu0 0.0
    %2708 = vmatpush1.msra.mxu0 0.0
    %2709 = vmatprep.subr.mxu0 0.0
    %2710 = vmatpush1.msra.mxu0 0.0
    %2711 = vmatprep.subr.mxu0 0.0
    %2712 = vmatpush1.msra.mxu0 0.0
    %2713 = vmatprep.subr.mxu0 0.0
    %2714 = vmatpush1.msra.mxu0 0.0
    %2715 = vmatprep.subr.mxu0 0.0
    %2716 = vmatpush1.msra.mxu0 0.0
    %2717 = vmatprep.subr.mxu0 0.0
    %2718 = vmatpush1.msra.mxu0 0.0
    %2719 = vmatprep.subr.mxu0 0.0
    %2720 = vmatpush1.msra.mxu0 0.0
    %2721 = vmatprep.subr.mxu0 0.0
    %2722 = vmatpush1.msra.mxu0 0.0
    %2723 = vmatprep.subr.mxu0 0.0
    %2724 = vmatpush1.msra.mxu0 0.0
    %2725 = vmatprep.subr.mxu0 0.0
    %2726 = vmatpush1.msra.mxu0 0.0
    %2727 = vmatprep.subr.mxu0 0.0
    %2728 = vmatpush1.msra.mxu0 0.0
    %2729 = vmatprep.subr.mxu0 0.0
    %2730 = vmatpush1.msra.mxu0 0.0
    %2731 = vmatprep.subr.mxu0 0.0
    %2732 = vmatpush1.msra.mxu0 0.0
    %2733 = vmatprep.subr.mxu0 0.0
    %2734 = vmatpush1.msra.mxu0 0.0
    %2735 = vmatprep.mubr.f32.mxu0 0.0
    %2736 = vmatmul.mubr.f32.gmra.mrb[0].mxu0 %v2666
    %v2737 = vpop.f32.mrb[0].mxu0
    %v2738 = vadd.f32 0.0, %v2737
    %v2739 = vpop.f32.mrb[0].mxu0
    %2740 = vmatprep.mubr.f32.mxu0 0.0
    %2741 = vmatmul.mubr.f32.gmra.mrb[0].mxu0 %v2669
    %v2742 = vpop.f32.mrb[0].mxu0
    %v2743 = vadd.f32 0.0, %v2742
    %v2744 = vpop.f32.mrb[0].mxu0
    %2745 = vdwg.mxu0
    %v2746 = vadd.f32 %v2663, %v2738
    %v2747 = vadd.f32 %v2664, %v2743
    %v2749 = vsel %vm284, %v2297, 0
    %v2752 = vsel %vm284, %v2302, 0
    %2754 = vmatprep.subr.mxu0 0.0
    %2755 = vmatpush1.msra.mxu0 %v66
    %2756 = vmatprep.subr.mxu0 0.0
    %2757 = vmatpush1.msra.mxu0 %v67
    %2758 = vmatprep.subr.mxu0 0.0
    %2759 = vmatpush1.msra.mxu0 %v68
    %2760 = vmatprep.subr.mxu0 0.0
    %2761 = vmatpush1.msra.mxu0 %v69
    %2762 = vmatprep.subr.mxu0 0.0
    %2763 = vmatpush1.msra.mxu0 0.0
    %2764 = vmatprep.subr.mxu0 0.0
    %2765 = vmatpush1.msra.mxu0 0.0
    %2766 = vmatprep.subr.mxu0 0.0
    %2767 = vmatpush1.msra.mxu0 0.0
    %2768 = vmatprep.subr.mxu0 0.0
    %2769 = vmatpush1.msra.mxu0 0.0
    %2770 = vmatprep.subr.mxu0 0.0
    %2771 = vmatpush1.msra.mxu0 0.0
    %2772 = vmatprep.subr.mxu0 0.0
    %2773 = vmatpush1.msra.mxu0 0.0
    %2774 = vmatprep.subr.mxu0 0.0
    %2775 = vmatpush1.msra.mxu0 0.0
    %2776 = vmatprep.subr.mxu0 0.0
    %2777 = vmatpush1.msra.mxu0 0.0
    %2778 = vmatprep.subr.mxu0 0.0
    %2779 = vmatpush1.msra.mxu0 0.0
    %2780 = vmatprep.subr.mxu0 0.0
    %2781 = vmatpush1.msra.mxu0 0.0
    %2782 = vmatprep.subr.mxu0 0.0
    %2783 = vmatpush1.msra.mxu0 0.0
    %2784 = vmatprep.subr.mxu0 0.0
    %2785 = vmatpush1.msra.mxu0 0.0
    %2786 = vmatprep.subr.mxu0 0.0
    %2787 = vmatpush1.msra.mxu0 0.0
    %2788 = vmatprep.subr.mxu0 0.0
    %2789 = vmatpush1.msra.mxu0 0.0
    %2790 = vmatprep.subr.mxu0 0.0
    %2791 = vmatpush1.msra.mxu0 0.0
    %2792 = vmatprep.subr.mxu0 0.0
    %2793 = vmatpush1.msra.mxu0 0.0
    %2794 = vmatprep.subr.mxu0 0.0
    %2795 = vmatpush1.msra.mxu0 0.0
    %2796 = vmatprep.subr.mxu0 0.0
    %2797 = vmatpush1.msra.mxu0 0.0
    %2798 = vmatprep.subr.mxu0 0.0
    %2799 = vmatpush1.msra.mxu0 0.0
    %2800 = vmatprep.subr.mxu0 0.0
    %2801 = vmatpush1.msra.mxu0 0.0
    %2802 = vmatprep.subr.mxu0 0.0
    %2803 = vmatpush1.msra.mxu0 0.0
    %2804 = vmatprep.subr.mxu0 0.0
    %2805 = vmatpush1.msra.mxu0 0.0
    %2806 = vmatprep.subr.mxu0 0.0
    %2807 = vmatpush1.msra.mxu0 0.0
    %2808 = vmatprep.subr.mxu0 0.0
    %2809 = vmatpush1.msra.mxu0 0.0
    %2810 = vmatprep.subr.mxu0 0.0
    %2811 = vmatpush1.msra.mxu0 0.0
    %2812 = vmatprep.subr.mxu0 0.0
    %2813 = vmatpush1.msra.mxu0 0.0
    %2814 = vmatprep.subr.mxu0 0.0
    %2815 = vmatpush1.msra.mxu0 0.0
    %2816 = vmatprep.subr.mxu0 0.0
    %2817 = vmatpush1.msra.mxu0 0.0
    %2818 = vmatprep.mubr.f32.mxu0 0.0
    %2819 = vmatmul.mubr.f32.gmra.mrb[0].mxu0 %v2749
    %v2820 = vpop.f32.mrb[0].mxu0
    %v2821 = vadd.f32 0.0, %v2820
    %v2822 = vpop.f32.mrb[0].mxu0
    %2823 = vmatprep.mubr.f32.mxu0 0.0
    %2824 = vmatmul.mubr.f32.gmra.mrb[0].mxu0 %v2752
    %v2825 = vpop.f32.mrb[0].mxu0
    %v2826 = vadd.f32 0.0, %v2825
    %v2827 = vpop.f32.mrb[0].mxu0
    %2828 = vdwg.mxu0
    %v2829 = vadd.f32 %v2746, %v2821
    %v2830 = vadd.f32 %v2747, %v2826
    %v2832 = vsel %vm284, %v2307, 0
    %v2835 = vsel %vm284, %v2312, 0
    %2837 = vmatprep.subr.mxu0 0.0
    %2838 = vmatpush1.msra.mxu0 %v70
    %2839 = vmatprep.subr.mxu0 0.0
    %2840 = vmatpush1.msra.mxu0 %v71
    %2841 = vmatprep.subr.mxu0 0.0
    %2842 = vmatpush1.msra.mxu0 %v72
    %2843 = vmatprep.subr.mxu0 0.0
    %2844 = vmatpush1.msra.mxu0 %v73
    %2845 = vmatprep.subr.mxu0 0.0
    %2846 = vmatpush1.msra.mxu0 0.0
    %2847 = vmatprep.subr.mxu0 0.0
    %2848 = vmatpush1.msra.mxu0 0.0
    %2849 = vmatprep.subr.mxu0 0.0
    %2850 = vmatpush1.msra.mxu0 0.0
    %2851 = vmatprep.subr.mxu0 0.0
    %2852 = vmatpush1.msra.mxu0 0.0
    %2853 = vmatprep.subr.mxu0 0.0
    %2854 = vmatpush1.msra.mxu0 0.0
    %2855 = vmatprep.subr.mxu0 0.0
    %2856 = vmatpush1.msra.mxu0 0.0
    %2857 = vmatprep.subr.mxu0 0.0
    %2858 = vmatpush1.msra.mxu0 0.0
    %2859 = vmatprep.subr.mxu0 0.0
    %2860 = vmatpush1.msra.mxu0 0.0
    %2861 = vmatprep.subr.mxu0 0.0
    %2862 = vmatpush1.msra.mxu0 0.0
    %2863 = vmatprep.subr.mxu0 0.0
    %2864 = vmatpush1.msra.mxu0 0.0
    %2865 = vmatprep.subr.mxu0 0.0
    %2866 = vmatpush1.msra.mxu0 0.0
    %2867 = vmatprep.subr.mxu0 0.0
    %2868 = vmatpush1.msra.mxu0 0.0
    %2869 = vmatprep.subr.mxu0 0.0
    %2870 = vmatpush1.msra.mxu0 0.0
    %2871 = vmatprep.subr.mxu0 0.0
    %2872 = vmatpush1.msra.mxu0 0.0
    %2873 = vmatprep.subr.mxu0 0.0
    %2874 = vmatpush1.msra.mxu0 0.0
    %2875 = vmatprep.subr.mxu0 0.0
    %2876 = vmatpush1.msra.mxu0 0.0
    %2877 = vmatprep.subr.mxu0 0.0
    %2878 = vmatpush1.msra.mxu0 0.0
    %2879 = vmatprep.subr.mxu0 0.0
    %2880 = vmatpush1.msra.mxu0 0.0
    %2881 = vmatprep.subr.mxu0 0.0
    %2882 = vmatpush1.msra.mxu0 0.0
    %2883 = vmatprep.subr.mxu0 0.0
    %2884 = vmatpush1.msra.mxu0 0.0
    %2885 = vmatprep.subr.mxu0 0.0
    %2886 = vmatpush1.msra.mxu0 0.0
    %2887 = vmatprep.subr.mxu0 0.0
    %2888 = vmatpush1.msra.mxu0 0.0
    %2889 = vmatprep.subr.mxu0 0.0
    %2890 = vmatpush1.msra.mxu0 0.0
    %2891 = vmatprep.subr.mxu0 0.0
    %2892 = vmatpush1.msra.mxu0 0.0
    %2893 = vmatprep.subr.mxu0 0.0
    %2894 = vmatpush1.msra.mxu0 0.0
    %2895 = vmatprep.subr.mxu0 0.0
    %2896 = vmatpush1.msra.mxu0 0.0
    %2897 = vmatprep.subr.mxu0 0.0
    %2898 = vmatpush1.msra.mxu0 0.0
    %2899 = vmatprep.subr.mxu0 0.0
    %2900 = vmatpush1.msra.mxu0 0.0
    %2901 = vmatprep.mubr.f32.mxu0 0.0
    %2902 = vmatmul.mubr.f32.gmra.mrb[0].mxu0 %v2832
    %v2903 = vpop.f32.mrb[0].mxu0
    %v2904 = vadd.f32 0.0, %v2903
    %v2905 = vpop.f32.mrb[0].mxu0
    %2906 = vmatprep.mubr.f32.mxu0 0.0
    %2907 = vmatmul.mubr.f32.gmra.mrb[0].mxu0 %v2835
    %v2908 = vpop.f32.mrb[0].mxu0
    %v2909 = vadd.f32 0.0, %v2908
    %v2910 = vpop.f32.mrb[0].mxu0
    %2911 = vdwg.mxu0
    %v2912 = vadd.f32 %v2829, %v2904
    %v2913 = vadd.f32 %v2830, %v2909
    %v2915 = vsel %vm284, %v2317, 0
    %v2918 = vsel %vm284, %v2322, 0
    %2920 = vmatprep.subr.mxu0 0.0
    %2921 = vmatpush1.msra.mxu0 %v74
    %2922 = vmatprep.subr.mxu0 0.0
    %2923 = vmatpush1.msra.mxu0 %v75
    %2924 = vmatprep.subr.mxu0 0.0
    %2925 = vmatpush1.msra.mxu0 %v76
    %2926 = vmatprep.subr.mxu0 0.0
    %2927 = vmatpush1.msra.mxu0 %v77
    %2928 = vmatprep.subr.mxu0 0.0
    %2929 = vmatpush1.msra.mxu0 0.0
    %2930 = vmatprep.subr.mxu0 0.0
    %2931 = vmatpush1.msra.mxu0 0.0
    %2932 = vmatprep.subr.mxu0 0.0
    %2933 = vmatpush1.msra.mxu0 0.0
    %2934 = vmatprep.subr.mxu0 0.0
    %2935 = vmatpush1.msra.mxu0 0.0
    %2936 = vmatprep.subr.mxu0 0.0
    %2937 = vmatpush1.msra.mxu0 0.0
    %2938 = vmatprep.subr.mxu0 0.0
    %2939 = vmatpush1.msra.mxu0 0.0
    %2940 = vmatprep.subr.mxu0 0.0
    %2941 = vmatpush1.msra.mxu0 0.0
    %2942 = vmatprep.subr.mxu0 0.0
    %2943 = vmatpush1.msra.mxu0 0.0
    %2944 = vmatprep.subr.mxu0 0.0
    %2945 = vmatpush1.msra.mxu0 0.0
    %2946 = vmatprep.subr.mxu0 0.0
    %2947 = vmatpush1.msra.mxu0 0.0
    %2948 = vmatprep.subr.mxu0 0.0
    %2949 = vmatpush1.msra.mxu0 0.0
    %2950 = vmatprep.subr.mxu0 0.0
    %2951 = vmatpush1.msra.mxu0 0.0
    %2952 = vmatprep.subr.mxu0 0.0
    %2953 = vmatpush1.msra.mxu0 0.0
    %2954 = vmatprep.subr.mxu0 0.0
    %2955 = vmatpush1.msra.mxu0 0.0
    %2956 = vmatprep.subr.mxu0 0.0
    %2957 = vmatpush1.msra.mxu0 0.0
    %2958 = vmatprep.subr.mxu0 0.0
    %2959 = vmatpush1.msra.mxu0 0.0
    %2960 = vmatprep.subr.mxu0 0.0
    %2961 = vmatpush1.msra.mxu0 0.0
    %2962 = vmatprep.subr.mxu0 0.0
    %2963 = vmatpush1.msra.mxu0 0.0
    %2964 = vmatprep.subr.mxu0 0.0
    %2965 = vmatpush1.msra.mxu0 0.0
    %2966 = vmatprep.subr.mxu0 0.0
    %2967 = vmatpush1.msra.mxu0 0.0
    %2968 = vmatprep.subr.mxu0 0.0
    %2969 = vmatpush1.msra.mxu0 0.0
    %2970 = vmatprep.subr.mxu0 0.0
    %2971 = vmatpush1.msra.mxu0 0.0
    %2972 = vmatprep.subr.mxu0 0.0
    %2973 = vmatpush1.msra.mxu0 0.0
    %2974 = vmatprep.subr.mxu0 0.0
    %2975 = vmatpush1.msra.mxu0 0.0
    %2976 = vmatprep.subr.mxu0 0.0
    %2977 = vmatpush1.msra.mxu0 0.0
    %2978 = vmatprep.subr.mxu0 0.0
    %2979 = vmatpush1.msra.mxu0 0.0
    %2980 = vmatprep.subr.mxu0 0.0
    %2981 = vmatpush1.msra.mxu0 0.0
    %2982 = vmatprep.subr.mxu0 0.0
    %2983 = vmatpush1.msra.mxu0 0.0
    %2984 = vmatprep.mubr.f32.mxu0 0.0
    %2985 = vmatmul.mubr.f32.gmra.mrb[0].mxu0 %v2915
    %v2986 = vpop.f32.mrb[0].mxu0
    %v2987 = vadd.f32 0.0, %v2986
    %v2988 = vpop.f32.mrb[0].mxu0
    %2989 = vmatprep.mubr.f32.mxu0 0.0
    %2990 = vmatmul.mubr.f32.gmra.mrb[0].mxu0 %v2918
    %v2991 = vpop.f32.mrb[0].mxu0
    %v2992 = vadd.f32 0.0, %v2991
    %v2993 = vpop.f32.mrb[0].mxu0
    %2994 = vdwg.mxu0
    %v2995 = vadd.f32 %v2912, %v2987
    %v2996 = vadd.f32 %v2913, %v2992
    %v2998 = vsel %vm284, %v2327, 0
    %v3001 = vsel %vm284, %v2332, 0
    %3003 = vmatprep.subr.mxu0 0.0
    %3004 = vmatpush1.msra.mxu0 %v78
    %3005 = vmatprep.subr.mxu0 0.0
    %3006 = vmatpush1.msra.mxu0 %v79
    %3007 = vmatprep.subr.mxu0 0.0
    %3008 = vmatpush1.msra.mxu0 %v80
    %3009 = vmatprep.subr.mxu0 0.0
    %3010 = vmatpush1.msra.mxu0 %v81
    %3011 = vmatprep.subr.mxu0 0.0
    %3012 = vmatpush1.msra.mxu0 0.0
    %3013 = vmatprep.subr.mxu0 0.0
    %3014 = vmatpush1.msra.mxu0 0.0
    %3015 = vmatprep.subr.mxu0 0.0
    %3016 = vmatpush1.msra.mxu0 0.0
    %3017 = vmatprep.subr.mxu0 0.0
    %3018 = vmatpush1.msra.mxu0 0.0
    %3019 = vmatprep.subr.mxu0 0.0
    %3020 = vmatpush1.msra.mxu0 0.0
    %3021 = vmatprep.subr.mxu0 0.0
    %3022 = vmatpush1.msra.mxu0 0.0
    %3023 = vmatprep.subr.mxu0 0.0
    %3024 = vmatpush1.msra.mxu0 0.0
    %3025 = vmatprep.subr.mxu0 0.0
    %3026 = vmatpush1.msra.mxu0 0.0
    %3027 = vmatprep.subr.mxu0 0.0
    %3028 = vmatpush1.msra.mxu0 0.0
    %3029 = vmatprep.subr.mxu0 0.0
    %3030 = vmatpush1.msra.mxu0 0.0
    %3031 = vmatprep.subr.mxu0 0.0
    %3032 = vmatpush1.msra.mxu0 0.0
    %3033 = vmatprep.subr.mxu0 0.0
    %3034 = vmatpush1.msra.mxu0 0.0
    %3035 = vmatprep.subr.mxu0 0.0
    %3036 = vmatpush1.msra.mxu0 0.0
    %3037 = vmatprep.subr.mxu0 0.0
    %3038 = vmatpush1.msra.mxu0 0.0
    %3039 = vmatprep.subr.mxu0 0.0
    %3040 = vmatpush1.msra.mxu0 0.0
    %3041 = vmatprep.subr.mxu0 0.0
    %3042 = vmatpush1.msra.mxu0 0.0
    %3043 = vmatprep.subr.mxu0 0.0
    %3044 = vmatpush1.msra.mxu0 0.0
    %3045 = vmatprep.subr.mxu0 0.0
    %3046 = vmatpush1.msra.mxu0 0.0
    %3047 = vmatprep.subr.mxu0 0.0
    %3048 = vmatpush1.msra.mxu0 0.0
    %3049 = vmatprep.subr.mxu0 0.0
    %3050 = vmatpush1.msra.mxu0 0.0
    %3051 = vmatprep.subr.mxu0 0.0
    %3052 = vmatpush1.msra.mxu0 0.0
    %3053 = vmatprep.subr.mxu0 0.0
    %3054 = vmatpush1.msra.mxu0 0.0
    %3055 = vmatprep.subr.mxu0 0.0
    %3056 = vmatpush1.msra.mxu0 0.0
    %3057 = vmatprep.subr.mxu0 0.0
    %3058 = vmatpush1.msra.mxu0 0.0
    %3059 = vmatprep.subr.mxu0 0.0
    %3060 = vmatpush1.msra.mxu0 0.0
    %3061 = vmatprep.subr.mxu0 0.0
    %3062 = vmatpush1.msra.mxu0 0.0
    %3063 = vmatprep.subr.mxu0 0.0
    %3064 = vmatpush1.msra.mxu0 0.0
    %3065 = vmatprep.subr.mxu0 0.0
    %3066 = vmatpush1.msra.mxu0 0.0
    %3067 = vmatprep.mubr.f32.mxu0 0.0
    %3068 = vmatmul.mubr.f32.gmra.mrb[0].mxu0 %v2998
    %v3069 = vpop.f32.mrb[0].mxu0
    %v3070 = vadd.f32 0.0, %v3069
    %v3071 = vpop.f32.mrb[0].mxu0
    %3072 = vmatprep.mubr.f32.mxu0 0.0
    %3073 = vmatmul.mubr.f32.gmra.mrb[0].mxu0 %v3001
    %v3074 = vpop.f32.mrb[0].mxu0
    %v3075 = vadd.f32 0.0, %v3074
    %v3076 = vpop.f32.mrb[0].mxu0
    %3077 = vdwg.mxu0
    %v3078 = vadd.f32 %v2995, %v3070
    %v3079 = vadd.f32 %v2996, %v3075
    %v3080 = vxor.u32 %v3078, 2147483648
    %v3081 = vxor.u32 %v3079, 2147483648
    %v3082 = vmul.f32 %v3080, 1.442695
    %v3083 = vpow.pop %v3082
    %v3084 = vmul.f32 %v3081, 1.442695
    %v3085 = vpow.pop %v3084
    %v3086 = vadd.f32 %v3083, 1.0
    %v3087 = vadd.f32 %v3085, 1.0
    %v3088 = vrcp.pop %v3086
    %v3089 = vmul.f32 1.0, %v3088
    %v3090 = vrcp.pop %v3087
    %v3091 = vmul.f32 1.0, %v3090
    %v3092 = vmul.f32 %v3089, %v2185
    %v3093 = vmul.f32 %v3091, %v2187
    %v3095 = vsel %vm284, %v3092, 0
    %v3098 = vsel %vm284, %v3093, 0
    %3100 = vmatprep.subr.mxu0 0.0
    %3101 = vmatpush1.msra.mxu0 %v86
    %3102 = vmatprep.subr.mxu0 0.0
    %3103 = vmatpush1.msra.mxu0 %v87
    %3104 = vmatprep.subr.mxu0 0.0
    %3105 = vmatpush1.msra.mxu0 %v88
    %3106 = vmatprep.subr.mxu0 0.0
    %3107 = vmatpush1.msra.mxu0 %v89
    %3108 = vmatprep.subr.mxu0 0.0
    %3109 = vmatpush1.msra.mxu0 0.0
    %3110 = vmatprep.subr.mxu0 0.0
    %3111 = vmatpush1.msra.mxu0 0.0
    %3112 = vmatprep.subr.mxu0 0.0
    %3113 = vmatpush1.msra.mxu0 0.0
    %3114 = vmatprep.subr.mxu0 0.0
    %3115 = vmatpush1.msra.mxu0 0.0
    %3116 = vmatprep.subr.mxu0 0.0
    %3117 = vmatpush1.msra.mxu0 0.0
    %3118 = vmatprep.subr.mxu0 0.0
    %3119 = vmatpush1.msra.mxu0 0.0
    %3120 = vmatprep.subr.mxu0 0.0
    %3121 = vmatpush1.msra.mxu0 0.0
    %3122 = vmatprep.subr.mxu0 0.0
    %3123 = vmatpush1.msra.mxu0 0.0
    %3124 = vmatprep.subr.mxu0 0.0
    %3125 = vmatpush1.msra.mxu0 0.0
    %3126 = vmatprep.subr.mxu0 0.0
    %3127 = vmatpush1.msra.mxu0 0.0
    %3128 = vmatprep.subr.mxu0 0.0
    %3129 = vmatpush1.msra.mxu0 0.0
    %3130 = vmatprep.subr.mxu0 0.0
    %3131 = vmatpush1.msra.mxu0 0.0
    %3132 = vmatprep.subr.mxu0 0.0
    %3133 = vmatpush1.msra.mxu0 0.0
    %3134 = vmatprep.subr.mxu0 0.0
    %3135 = vmatpush1.msra.mxu0 0.0
    %3136 = vmatprep.subr.mxu0 0.0
    %3137 = vmatpush1.msra.mxu0 0.0
    %3138 = vmatprep.subr.mxu0 0.0
    %3139 = vmatpush1.msra.mxu0 0.0
    %3140 = vmatprep.subr.mxu0 0.0
    %3141 = vmatpush1.msra.mxu0 0.0
    %3142 = vmatprep.subr.mxu0 0.0
    %3143 = vmatpush1.msra.mxu0 0.0
    %3144 = vmatprep.subr.mxu0 0.0
    %3145 = vmatpush1.msra.mxu0 0.0
    %3146 = vmatprep.subr.mxu0 0.0
    %3147 = vmatpush1.msra.mxu0 0.0
    %3148 = vmatprep.subr.mxu0 0.0
    %3149 = vmatpush1.msra.mxu0 0.0
    %3150 = vmatprep.subr.mxu0 0.0
    %3151 = vmatpush1.msra.mxu0 0.0
    %3152 = vmatprep.subr.mxu0 0.0
    %3153 = vmatpush1.msra.mxu0 0.0
    %3154 = vmatprep.subr.mxu0 0.0
    %3155 = vmatpush1.msra.mxu0 0.0
    %3156 = vmatprep.subr.mxu0 0.0
    %3157 = vmatpush1.msra.mxu0 0.0
    %3158 = vmatprep.subr.mxu0 0.0
    %3159 = vmatpush1.msra.mxu0 0.0
    %3160 = vmatprep.subr.mxu0 0.0
    %3161 = vmatpush1.msra.mxu0 0.0
    %3162 = vmatprep.subr.mxu0 0.0
    %3163 = vmatpush1.msra.mxu0 0.0
    %3164 = vmatprep.mubr.f32.mxu0 0.0
    %3165 = vmatmul.mubr.f32.gmra.mrb[0].mxu0 %v3095
    %v3166 = vpop.f32.mrb[0].mxu0
    %v3167 = vadd.f32 0.0, %v3166
    %v3168 = vpop.f32.mrb[0].mxu0
    %3169 = vmatprep.mubr.f32.mxu0 0.0
    %3170 = vmatmul.mubr.f32.gmra.mrb[0].mxu0 %v3098
    %v3171 = vpop.f32.mrb[0].mxu0
    %v3172 = vadd.f32 0.0, %v3171
    %v3173 = vpop.f32.mrb[0].mxu0
    %3174 = vdwg.mxu0
    %3177 = vrot.lane.b32.xlu0 %v3167, 64
    %v3178 = vpop.permute.xlu0 %3177
    %3179 = vrot.lane.b32.xlu0 %v3172, 64
    %v3180 = vpop.permute.xlu0 %3179
    %v3183 = vadd.f32 %v3078, %v3178
    %v3184 = vadd.f32 %v3079, %v3180
    %v3185 = vtanh.pop %v3183
    %v3186 = vtanh.pop %v3184
    %v3187 = vsub.f32 1.0, %v3089
    %v3188 = vsub.f32 1.0, %v3091
    %v3189 = vmul.f32 %v3187, %v2180
    %v3190 = vmul.f32 %v3188, %v2181
    %3193 = vrot.lane.b32.xlu0 %v3185, 96
    %v3194 = vpop.permute.xlu0 %3193
    %3195 = vrot.lane.b32.xlu0 %v3186, 96
    %v3196 = vpop.permute.xlu0 %3195
    %v3199 = vmul.f32 %v3089, %v3194
    %v3200 = vmul.f32 %v3091, %v3196
    %v3201 = vadd.f32 %v3189, %v3199
    %v3202 = vadd.f32 %v3190, %v3200
    %v3203 = vld [vmem:[%s6] sm:$0xff]
    %v3204 = vld [vmem:[%s6 + $0x8] sm:$0xff]
    %v3205 = vld [vmem:[%s6 + $0x10] sm:$0xff]
    %v3206 = vld [vmem:[%s6 + $0x18] sm:$0xff]
    %v3207 = vld [vmem:[%s1] sm:$0xff]
    %v3208 = vld [vmem:[%s1 + $0x8] sm:$0xff]
    %v3209 = vld [vmem:[%s7] sm:$0xff]
    %v3210 = vld [vmem:[%s7 + $0x8] sm:$0xff]
    %v3212 = vsel %vm90, %v3207, 0
    %v3215 = vsel %vm90, %v3208, 0
    %3217 = vmatprep.subr.mxu0 0.0
    %3218 = vmatpush1.msra.mxu0 %v3209
    %3219 = vmatprep.subr.mxu0 0.0
    %3220 = vmatpush1.msra.mxu0 %v3210
    %3221 = vmatprep.subr.mxu0 0.0
    %3222 = vmatpush1.msra.mxu0 0.0
    %3223 = vmatprep.subr.mxu0 0.0
    %3224 = vmatpush1.msra.mxu0 0.0
    %3225 = vmatprep.subr.mxu0 0.0
    %3226 = vmatpush1.msra.mxu0 0.0
    %3227 = vmatprep.subr.mxu0 0.0
    %3228 = vmatpush1.msra.mxu0 0.0
    %3229 = vmatprep.subr.mxu0 0.0
    %3230 = vmatpush1.msra.mxu0 0.0
    %3231 = vmatprep.subr.mxu0 0.0
    %3232 = vmatpush1.msra.mxu0 0.0
    %3233 = vmatprep.subr.mxu0 0.0
    %3234 = vmatpush1.msra.mxu0 0.0
    %3235 = vmatprep.subr.mxu0 0.0
    %3236 = vmatpush1.msra.mxu0 0.0
    %3237 = vmatprep.subr.mxu0 0.0
    %3238 = vmatpush1.msra.mxu0 0.0
    %3239 = vmatprep.subr.mxu0 0.0
    %3240 = vmatpush1.msra.mxu0 0.0
    %3241 = vmatprep.subr.mxu0 0.0
    %3242 = vmatpush1.msra.mxu0 0.0
    %3243 = vmatprep.subr.mxu0 0.0
    %3244 = vmatpush1.msra.mxu0 0.0
    %3245 = vmatprep.subr.mxu0 0.0
    %3246 = vmatpush1.msra.mxu0 0.0
    %3247 = vmatprep.subr.mxu0 0.0
    %3248 = vmatpush1.msra.mxu0 0.0
    %3249 = vmatprep.subr.mxu0 0.0
    %3250 = vmatpush1.msra.mxu0 0.0
    %3251 = vmatprep.subr.mxu0 0.0
    %3252 = vmatpush1.msra.mxu0 0.0
    %3253 = vmatprep.subr.mxu0 0.0
    %3254 = vmatpush1.msra.mxu0 0.0
    %3255 = vmatprep.subr.mxu0 0.0
    %3256 = vmatpush1.msra.mxu0 0.0
    %3257 = vmatprep.subr.mxu0 0.0
    %3258 = vmatpush1.msra.mxu0 0.0
    %3259 = vmatprep.subr.mxu0 0.0
    %3260 = vmatpush1.msra.mxu0 0.0
    %3261 = vmatprep.subr.mxu0 0.0
    %3262 = vmatpush1.msra.mxu0 0.0
    %3263 = vmatprep.subr.mxu0 0.0
    %3264 = vmatpush1.msra.mxu0 0.0
    %3265 = vmatprep.subr.mxu0 0.0
    %3266 = vmatpush1.msra.mxu0 0.0
    %3267 = vmatprep.subr.mxu0 0.0
    %3268 = vmatpush1.msra.mxu0 0.0
    %3269 = vmatprep.subr.mxu0 0.0
    %3270 = vmatpush1.msra.mxu0 0.0
    %3271 = vmatprep.subr.mxu0 0.0
    %3272 = vmatpush1.msra.mxu0 0.0
    %3273 = vmatprep.subr.mxu0 0.0
    %3274 = vmatpush1.msra.mxu0 0.0
    %3275 = vmatprep.subr.mxu0 0.0
    %3276 = vmatpush1.msra.mxu0 0.0
    %3277 = vmatprep.subr.mxu0 0.0
    %3278 = vmatpush1.msra.mxu0 0.0
    %3279 = vmatprep.subr.mxu0 0.0
    %3280 = vmatpush1.msra.mxu0 0.0
    %3281 = vmatprep.mubr.f32.mxu0 0.0
    %3282 = vmatmul.mubr.f32.gmra.mrb[0].mxu0 %v3212
    %v3283 = vpop.f32.mrb[0].mxu0
    %v3284 = vadd.f32 0.0, %v3283
    %v3285 = vpop.f32.mrb[0].mxu0
    %3286 = vmatprep.mubr.f32.mxu0 0.0
    %3287 = vmatmul.mubr.f32.gmra.mrb[0].mxu0 %v3215
    %v3288 = vpop.f32.mrb[0].mxu0
    %v3289 = vadd.f32 0.0, %v3288
    %v3290 = vpop.f32.mrb[0].mxu0
    %3291 = vdwg.mxu0
    %3294 = vrot.lane.b32.xlu0 %v3201, 96
    %v3295 = vpop.permute.xlu0 %3294
    %3296 = vrot.lane.b32.xlu0 %v3202, 96
    %v3297 = vpop.permute.xlu0 %3296
    %v3298 = vsel %vm284, %v3295, 0
    %v3300 = vsel %vm284, %v3297, 0
    %3302 = vmatprep.subr.mxu0 0.0
    %3303 = vmatpush1.msra.mxu0 %v3203
    %3304 = vmatprep.subr.mxu0 0.0
    %3305 = vmatpush1.msra.mxu0 %v3204
    %3306 = vmatprep.subr.mxu0 0.0
    %3307 = vmatpush1.msra.mxu0 %v3205
    %3308 = vmatprep.subr.mxu0 0.0
    %3309 = vmatpush1.msra.mxu0 %v3206
    %3310 = vmatprep.subr.mxu0 0.0
    %3311 = vmatpush1.msra.mxu0 0.0
    %3312 = vmatprep.subr.mxu0 0.0
    %3313 = vmatpush1.msra.mxu0 0.0
    %3314 = vmatprep.subr.mxu0 0.0
    %3315 = vmatpush1.msra.mxu0 0.0
    %3316 = vmatprep.subr.mxu0 0.0
    %3317 = vmatpush1.msra.mxu0 0.0
    %3318 = vmatprep.subr.mxu0 0.0
    %3319 = vmatpush1.msra.mxu0 0.0
    %3320 = vmatprep.subr.mxu0 0.0
    %3321 = vmatpush1.msra.mxu0 0.0
    %3322 = vmatprep.subr.mxu0 0.0
    %3323 = vmatpush1.msra.mxu0 0.0
    %3324 = vmatprep.subr.mxu0 0.0
    %3325 = vmatpush1.msra.mxu0 0.0
    %3326 = vmatprep.subr.mxu0 0.0
    %3327 = vmatpush1.msra.mxu0 0.0
    %3328 = vmatprep.subr.mxu0 0.0
    %3329 = vmatpush1.msra.mxu0 0.0
    %3330 = vmatprep.subr.mxu0 0.0
    %3331 = vmatpush1.msra.mxu0 0.0
    %3332 = vmatprep.subr.mxu0 0.0
    %3333 = vmatpush1.msra.mxu0 0.0
    %3334 = vmatprep.subr.mxu0 0.0
    %3335 = vmatpush1.msra.mxu0 0.0
    %3336 = vmatprep.subr.mxu0 0.0
    %3337 = vmatpush1.msra.mxu0 0.0
    %3338 = vmatprep.subr.mxu0 0.0
    %3339 = vmatpush1.msra.mxu0 0.0
    %3340 = vmatprep.subr.mxu0 0.0
    %3341 = vmatpush1.msra.mxu0 0.0
    %3342 = vmatprep.subr.mxu0 0.0
    %3343 = vmatpush1.msra.mxu0 0.0
    %3344 = vmatprep.subr.mxu0 0.0
    %3345 = vmatpush1.msra.mxu0 0.0
    %3346 = vmatprep.subr.mxu0 0.0
    %3347 = vmatpush1.msra.mxu0 0.0
    %3348 = vmatprep.subr.mxu0 0.0
    %3349 = vmatpush1.msra.mxu0 0.0
    %3350 = vmatprep.subr.mxu0 0.0
    %3351 = vmatpush1.msra.mxu0 0.0
    %3352 = vmatprep.subr.mxu0 0.0
    %3353 = vmatpush1.msra.mxu0 0.0
    %3354 = vmatprep.subr.mxu0 0.0
    %3355 = vmatpush1.msra.mxu0 0.0
    %3356 = vmatprep.subr.mxu0 0.0
    %3357 = vmatpush1.msra.mxu0 0.0
    %3358 = vmatprep.subr.mxu0 0.0
    %3359 = vmatpush1.msra.mxu0 0.0
    %3360 = vmatprep.subr.mxu0 0.0
    %3361 = vmatpush1.msra.mxu0 0.0
    %3362 = vmatprep.subr.mxu0 0.0
    %3363 = vmatpush1.msra.mxu0 0.0
    %3364 = vmatprep.subr.mxu0 0.0
    %3365 = vmatpush1.msra.mxu0 0.0
    %3366 = vmatprep.mubr.f32.mxu0 0.0
    %3367 = vmatmul.mubr.f32.gmra.mrb[0].mxu0 %v3298
    %v3368 = vpop.f32.mrb[0].mxu0
    %v3369 = vadd.f32 %v3284, %v3368
    %v3370 = vpop.f32.mrb[0].mxu0
    %3371 = vmatprep.mubr.f32.mxu0 0.0
    %3372 = vmatmul.mubr.f32.gmra.mrb[0].mxu0 %v3300
    %v3373 = vpop.f32.mrb[0].mxu0
    %v3374 = vadd.f32 %v3289, %v3373
    %v3375 = vpop.f32.mrb[0].mxu0
    %3376 = vdwg.mxu0
    %v3377 = vtanh.pop %v3369
    %v3378 = vtanh.pop %v3374
    %3379 = vst.msk [vmem:[#allocation2] sm:$0xff] %vm284, %v3377
    %3380 = vst.msk [vmem:[#allocation2 + $0x8] sm:$0xff] %vm284, %v3378
    // Predicated region
    $region34: #{ggnn_pallas.1} parent=1 // pred_check
      _
    $region35: #{ggnn_pallas.1} parent=1 // pred_check_branch
      %3382 = sbr.rel (0) target = $region37
    $region36: #{ggnn_pallas.1} parent=1 // pred_region
      %s3384 = ssub.s32 256, 256
      %3385 = vsyncadd [#allocation3], %s3384
      %s3386 = sshll.u32 [#allocation2], 4
      %s3387 = int_to_ptr.vmem [resolvable:$true] %s3386
      %3392 = dma.vmem_to_hbm [thread:$0]  %s3387, 256, %s8, [#allocation3], 128, 128, 8
    $region37: #{ggnn_pallas.1} parent=1 // pred_fallthru
      _
    // Predicated region
    $region38: #{ggnn_pallas.1} parent=1 // pred_check
      _
    $region39: #{ggnn_pallas.1} parent=1 // pred_check_branch
      %3394 = sbr.rel (0) target = $region41
    $region40: #{ggnn_pallas.1} parent=1 // pred_region
      %3395 = dma.done [#allocation3], 256
    $region41: #{ggnn_pallas.1} parent=1 // pred_fallthru
      _
    %3396 = vsyncpa [#allocation3], 1

</llo_original>
